<compile_context>
chip_gen: v6e
topology: v6e:2x2x1
jax: 0.10.0
libtpu: 0.0.40
codegen_flags: <defaults>
</compile_context>

<pallas_src>
import functools

import jax
import jax.numpy as jnp
from jax import lax
from jax.experimental import pallas as pl
from jax.experimental.pallas import tpu as pltpu


def _round_up(x, m):
    return ((x + m - 1) // m) * m


# ----------------------------------------------------------------------------
# Pallas kernel: input projection + GRU recurrence + fc_1/relu/fc_2
#                + softmax(time) + weighted reduction + fused heads
# ----------------------------------------------------------------------------
def smorl_kernel(
    emb_ref,            # (T, BB, D_in)  bf16, time-major, batch block
    wi_ref,             # (D_in, 3*Hp)   bf16  [W_ir | W_iz | W_in] lane-aligned
    wh_ref,             # (Hp, 3*Hp)     bf16  [W_hr | W_hz | W_hn]
    bi_ref,             # (1, 3*Hp)      f32
    bh_ref,             # (1, 3*Hp)      f32
    w1_ref, b1_ref,     # (Hp, Sp) bf16, (1, Sp) f32          fc_1
    w2_ref, b2_ref,     # (Sp, Sp) bf16, (1, Sp) f32          fc_2
    wheads_ref,         # (Sp, N2p+Np)   bf16  [W_5 | W_s] fused head weight
    b5_ref, bs_ref,     # (1, N2p) f32, (1, Np) f32
    w6_ref, b6_ref,     # (N2p, Np) bf16, (1, Np) f32         fc_6
    out_ref,            # (BB, 2*Np + Sp) f32  lane-dense slab [out6 | outs | state]
    hs_ref,             # scratch (T*BB, Hp) f32
):
    T, BB, D = emb_ref.shape
    Hp = wh_ref.shape[0]
    N2p, Np = w6_ref.shape

    f32 = jnp.float32
    bf16 = jnp.bfloat16

    # ---- Batched input projection for all timesteps (off the serial chain) ----
    emb2 = emb_ref[...].reshape(T * BB, D)                     # bf16, tile-aligned
    gi_all = (
        jnp.dot(emb2, wi_ref[...], preferred_element_type=f32) + bi_ref[...]
    )                                                          # (T*BB, 3*Hp) f32

    wh = wh_ref[...]                                           # (Hp, 3*Hp) bf16
    bh = jnp.broadcast_to(bh_ref[...], (BB, 3 * Hp))           # hoisted broadcast

    # ---- GRU recurrence: one fused bf16 hidden matmul per step ----
    # Padded gate lanes carry zero weights/biases, so padded lanes of h stay 0.
    h = jnp.zeros((BB, Hp), f32)
    for t in range(T):                                         # static unroll (T small)
        gi = gi_all[t * BB:(t + 1) * BB, :]                    # tile-aligned slice
        gh = jnp.dot(h.astype(bf16), wh, preferred_element_type=f32) + bh
        r = jax.nn.sigmoid(gi[:, 0:Hp] + gh[:, 0:Hp])
        z = jax.nn.sigmoid(gi[:, Hp:2 * Hp] + gh[:, Hp:2 * Hp])
        n = jnp.tanh(gi[:, 2 * Hp:3 * Hp] + r * gh[:, 2 * Hp:3 * Hp])
        h = (1.0 - z) * n + z * h
        hs_ref[t * BB:(t + 1) * BB, :] = h                     # store off the chain

    hs2 = hs_ref[...]                                          # (T*BB, Hp) f32

    # ---- fc_1 / relu / fc_2 as two batched bf16 matmuls (M = T*BB) ----
    o1 = jnp.maximum(
        jnp.dot(hs2.astype(bf16), w1_ref[...], preferred_element_type=f32)
        + b1_ref[...],
        0.0,
    )                                                          # (T*BB, Sp)
    lg = (
        jnp.dot(o1.astype(bf16), w2_ref[...], preferred_element_type=f32)
        + b2_ref[...]
    )

    o1_3 = o1.reshape(T, BB, -1)
    lg_3 = lg.reshape(T, BB, -1)

    # ---- softmax over time (PyTorch Softmax(dim=1) on (B, T, S)), kept in f32 ----
    m = jnp.max(lg_3, axis=0, keepdims=True)
    e = jnp.exp(lg_3 - m)
    soft = e * pl.reciprocal(jnp.sum(e, axis=0, keepdims=True), approx=True)
    state = jnp.sum(o1_3 * soft, axis=0)                       # (BB, Sp) f32

    # ---- fused heads: one matmul on `state` for [fc_5 | s_fc], then fc_6 ----
    oh = jnp.dot(state.astype(bf16), wheads_ref[...], preferred_element_type=f32)
    o5 = oh[:, 0:N2p] + b5_ref[...]                            # lane-aligned split
    outs = oh[:, N2p:N2p + Np] + bs_ref[...]
    out6 = (
        jnp.dot(o5.astype(bf16), w6_ref[...], preferred_element_type=f32)
        + b6_ref[...]
    )

    # Lane-dense (multiple-of-128 segments) output slab: unmasked stores.
    out_ref[...] = jnp.concatenate([out6, outs, state], axis=1)


# ----------------------------------------------------------------------------
# One-time parameter preparation (fusion / padding / bf16 cast hoisted here)
# ----------------------------------------------------------------------------
def prepare_params(params, compute_dtype=jnp.bfloat16):
    H = params["wh"].shape[-1]
    S = params["w1"].shape[1]
    N = params["ws"].shape[1]
    N2 = params["w5"].shape[1]
    D_in = params["wi"].shape[1]

    Hp = _round_up(H, 128)
    Sp = _round_up(S, 128)
    Np = _round_up(N, 128)
    N2p = _round_up(N2, 128)

    def pad2(x, r, c):
        return jnp.pad(x, ((0, r - x.shape[0]), (0, c - x.shape[1])))

    # Gate order r, z, n; each gate block padded to Hp (128-lane multiple).
    wi = jnp.concatenate([pad2(params["wi"][g], D_in, Hp) for g in range(3)], axis=1)
    wh = jnp.concatenate([pad2(params["wh"][g], Hp, Hp) for g in range(3)], axis=1)
    bi = jnp.concatenate([pad2(params["bi"][g], 1, Hp) for g in range(3)], axis=1)
    bh = jnp.concatenate([pad2(params["bh"][g], 1, Hp) for g in range(3)], axis=1)

    # Fused head weight [W_5 | W_s] sharing `state` as LHS; split point = N2p.
    wheads = jnp.concatenate(
        [pad2(params["w5"], Sp, N2p), pad2(params["ws"], Sp, Np)], axis=1)

    f32 = jnp.float32
    return {
        "emb_table": params["emb_table"].astype(compute_dtype),
        "wi": wi.astype(compute_dtype),
        "wh": wh.astype(compute_dtype),
        "bi": bi.astype(f32),
        "bh": bh.astype(f32),
        "w1": pad2(params["w1"], Hp, Sp).astype(compute_dtype),
        "b1": pad2(params["b1"], 1, Sp).astype(f32),
        "w2": pad2(params["w2"], Sp, Sp).astype(compute_dtype),
        "b2": pad2(params["b2"], 1, Sp).astype(f32),
        "wheads": wheads.astype(compute_dtype),
        "b5": pad2(params["b5"], 1, N2p).astype(f32),
        "bs": pad2(params["bs"], 1, Np).astype(f32),
        "w6": pad2(params["w6"], N2p, Np).astype(compute_dtype),
        "b6": pad2(params["b6"], 1, Np).astype(f32),
        "dims": dict(H=H, Hp=Hp, S=S, Sp=Sp, N=N, Np=Np, N2=N2, N2p=N2p, D_in=D_in),
    }


# ----------------------------------------------------------------------------
# Wrapper
# ----------------------------------------------------------------------------
def smorl_forward(inputs, lenghts, prep, b_block=16):
    # `lenghts` is unused, matching the PyTorch forward (padded timesteps do
    # participate in the time-softmax; semantic footgun inherited from the spec).
    del lenghts
    d = prep["dims"]
    B, T = inputs.shape
    Bp = _round_up(max(B, b_block), b_block)

    # Time-major embedding gather; no separate (B,T,D)->(T,B,D) transpose pass.
    emb = jnp.take(prep["emb_table"], inputs.T, axis=0)        # (T, B, D_in) bf16
    emb = jnp.pad(emb, ((0, 0), (0, Bp - B), (0, 0)))          # pad batch to block

    W = 2 * d["Np"] + d["Sp"]
    full = pl.BlockSpec(memory_space=pltpu.MemorySpace.VMEM)   # resident weights

    out = pl.pallas_call(
        smorl_kernel,
        out_shape=jax.ShapeDtypeStruct((Bp, W), jnp.float32),
        grid=(Bp // b_block,),
        in_specs=[
            pl.BlockSpec((T, b_block, d["D_in"]), lambda i: (0, i, 0)),
            full, full, full, full,                            # wi, wh, bi, bh
            full, full, full, full,                            # w1, b1, w2, b2
            full, full, full, full, full,                      # wheads, b5, bs, w6, b6
        ],
        out_specs=pl.BlockSpec((b_block, W), lambda i: (i, 0)),
        scratch_shapes=[pltpu.VMEM((T * b_block, d["Hp"]), jnp.float32)],
        compiler_params=pltpu.CompilerParams(
            dimension_semantics=("parallel",),                 # shard batch over TCs
            vmem_limit_bytes=32 * 1024 * 1024,
        ),
    )(emb, prep["wi"], prep["wh"], prep["bi"], prep["bh"],
      prep["w1"], prep["b1"], prep["w2"], prep["b2"],
      prep["wheads"], prep["b5"], prep["bs"], prep["w6"], prep["b6"])

    out6 = out[:B, 0:d["N"]]
    out_s = out[:B, d["Np"]:d["Np"] + d["N"]]
    state = out[:B, 2 * d["Np"]:2 * d["Np"] + d["S"]]
    return out6, out_s, state


# ----------------------------------------------------------------------------
# Pure-JAX f32 reference (mirrors the PyTorch module exactly)
# ----------------------------------------------------------------------------
def smorl_reference(inputs, lenghts, params):
    del lenghts
    emb = jnp.take(params["emb_table"], inputs, axis=0)        # (B, T, D_in)
    B = emb.shape[0]
    H = params["wh"].shape[-1]

    wi, wh, bi, bh = params["wi"], params["wh"], params["bi"], params["bh"]

    def gru_step(h, x):
        gi_r = x @ wi[0] + bi[0]
        gi_z = x @ wi[1] + bi[1]
        gi_n = x @ wi[2] + bi[2]
        gh_r = h @ wh[0] + bh[0]
        gh_z = h @ wh[1] + bh[1]
        gh_n = h @ wh[2] + bh[2]
        r = jax.nn.sigmoid(gi_r + gh_r)
        z = jax.nn.sigmoid(gi_z + gh_z)
        n = jnp.tanh(gi_n + r * gh_n)
        h_new = (1.0 - z) * n + z * h
        return h_new, h_new

    xs = jnp.transpose(emb, (1, 0, 2))                         # (T, B, D_in)
    h0 = jnp.zeros((B, H), jnp.float32)
    _, hs = lax.scan(gru_step, h0, xs)                         # (T, B, H)

    o1 = jnp.maximum(jnp.einsum("tbh,hs->tbs", hs, params["w1"]) + params["b1"], 0.0)
    lg = jnp.einsum("tbs,sp->tbp", o1, params["w2"]) + params["b2"]
    soft = jax.nn.softmax(lg, axis=0)                          # softmax over time
    state = jnp.sum(o1 * soft, axis=0)                         # (B, S)

    o5 = state @ params["w5"] + params["b5"]
    out6 = o5 @ params["w6"] + params["b6"]
    out_s = state @ params["ws"] + params["bs"]
    return out6, out_s, state


# ----------------------------------------------------------------------------
# Deterministic parameter construction
# ----------------------------------------------------------------------------
def make_params(key, num_items, input_size, hidden_size, state_size):
    ks = jax.random.split(key, 16)
    f = jnp.float32

    def rnd(k, shape, scale=0.1):
        return (scale * jax.random.normal(k, shape)).astype(f)

    N2 = num_items // 2
    return {
        "emb_table": rnd(ks[0], (num_items + 1, input_size), 1.0),
        "wi": rnd(ks[1], (3, input_size, hidden_size)),
        "wh": rnd(ks[2], (3, hidden_size, hidden_size)),
        "bi": rnd(ks[3], (3, 1, hidden_size)),
        "bh": rnd(ks[4], (3, 1, hidden_size)),
        "w1": rnd(ks[5], (hidden_size, state_size)),
        "b1": rnd(ks[6], (1, state_size)),
        "w2": rnd(ks[7], (state_size, state_size)),
        "b2": rnd(ks[8], (1, state_size)),
        "w5": rnd(ks[9], (state_size, N2)),
        "b5": rnd(ks[10], (1, N2)),
        "w6": rnd(ks[11], (N2, num_items)),
        "b6": rnd(ks[12], (1, num_items)),
        "ws": rnd(ks[13], (state_size, num_items)),
        "bs": rnd(ks[14], (1, num_items)),
    }


if __name__ == "__main__":
    # Small shapes consistent with the module's forward signature.
    B, T = 4, 8                  # batch, num_items_in_session (sequence length)
    input_size = 32
    hidden_size = 32
    state_size = 32
    num_items = 16

    key = jax.random.PRNGKey(0)
    k_par, k_inp, k_len = jax.random.split(key, 3)

    params = make_params(k_par, num_items, input_size, hidden_size, state_size)
    inputs = jax.random.randint(k_inp, (B, T), 0, num_items + 1, dtype=jnp.int32)
    lenghts = jnp.full((B,), T, dtype=jnp.int32)   # unused, like in the PyTorch forward

    prep = prepare_params(params)                  # one-time fusion/padding/bf16 cast
    fwd = jax.jit(functools.partial(smorl_forward, prep=prep))
    out6, out_s, state = fwd(inputs, lenghts)
    jax.block_until_ready((out6, out_s, state))

    r6, r_s, r_state = smorl_reference(inputs, lenghts, params)
    # Tolerances cover bf16 MXU operands (f32 accumulation) + the EUP approx
    # reciprocal used for the softmax denominator; reference is pure f32.
    assert jnp.allclose(out6, r6, atol=2e-2, rtol=2e-2)
    assert jnp.allclose(out_s, r_s, atol=2e-2, rtol=2e-2)
    assert jnp.allclose(state, r_state, atol=2e-2, rtol=2e-2)

    print("KERNEL_OK")
</pallas_src>

<mosaic_0001>
module attributes {stable_mosaic.version = 11 : i64} {
  func.func @smorl_kernel(%arg0: i32, %arg1: memref<8x16x32xbf16, #tpu.memory_space<vmem>>, %arg2: memref<32x384xbf16, #tpu.memory_space<vmem>>, %arg3: memref<128x384xbf16, #tpu.memory_space<vmem>>, %arg4: memref<1x384xf32, #tpu.memory_space<vmem>>, %arg5: memref<1x384xf32, #tpu.memory_space<vmem>>, %arg6: memref<128x128xbf16, #tpu.memory_space<vmem>>, %arg7: memref<1x128xf32, #tpu.memory_space<vmem>>, %arg8: memref<128x128xbf16, #tpu.memory_space<vmem>>, %arg9: memref<1x128xf32, #tpu.memory_space<vmem>>, %arg10: memref<128x256xbf16, #tpu.memory_space<vmem>>, %arg11: memref<1x128xf32, #tpu.memory_space<vmem>>, %arg12: memref<1x128xf32, #tpu.memory_space<vmem>>, %arg13: memref<128x128xbf16, #tpu.memory_space<vmem>>, %arg14: memref<1x128xf32, #tpu.memory_space<vmem>>, %arg15: memref<16x384xf32, #tpu.memory_space<vmem>>, %arg16: memref<128x128xf32, #tpu.memory_space<vmem>>) attributes {dimension_semantics = [#tpu.dimension_semantics<parallel>], iteration_bounds = array<i64: 1>, scalar_prefetch = 0 : i64, scratch_operands = 1 : i64, tpu.core_type = #tpu.core_type<tc>, window_params = [{transform_indices = @transform_0, window_bounds = array<i64: 8, 16, 32>}, {pipeline_mode = #tpu.pipeline_mode<synchronous>, transform_indices = @transform_1, window_bounds = array<i64: 32, 384>}, {pipeline_mode = #tpu.pipeline_mode<synchronous>, transform_indices = @transform_2, window_bounds = array<i64: 128, 384>}, {pipeline_mode = #tpu.pipeline_mode<synchronous>, transform_indices = @transform_3, window_bounds = array<i64: 1, 384>}, {pipeline_mode = #tpu.pipeline_mode<synchronous>, transform_indices = @transform_4, window_bounds = array<i64: 1, 384>}, {pipeline_mode = #tpu.pipeline_mode<synchronous>, transform_indices = @transform_5, window_bounds = array<i64: 128, 128>}, {pipeline_mode = #tpu.pipeline_mode<synchronous>, transform_indices = @transform_6, window_bounds = array<i64: 1, 128>}, {pipeline_mode = #tpu.pipeline_mode<synchronous>, transform_indices = @transform_7, window_bounds = array<i64: 128, 128>}, {pipeline_mode = #tpu.pipeline_mode<synchronous>, transform_indices = @transform_8, window_bounds = array<i64: 1, 128>}, {pipeline_mode = #tpu.pipeline_mode<synchronous>, transform_indices = @transform_9, window_bounds = array<i64: 128, 256>}, {pipeline_mode = #tpu.pipeline_mode<synchronous>, transform_indices = @transform_10, window_bounds = array<i64: 1, 128>}, {pipeline_mode = #tpu.pipeline_mode<synchronous>, transform_indices = @transform_11, window_bounds = array<i64: 1, 128>}, {pipeline_mode = #tpu.pipeline_mode<synchronous>, transform_indices = @transform_12, window_bounds = array<i64: 128, 128>}, {pipeline_mode = #tpu.pipeline_mode<synchronous>, transform_indices = @transform_13, window_bounds = array<i64: 1, 128>}, {transform_indices = @transform_14, window_bounds = array<i64: 16, 384>}]} {
    %c0 = arith.constant 0 : index
    %c0_0 = arith.constant 0 : index
    %c0_1 = arith.constant 0 : index
    %0 = vector.load %arg1[%c0, %c0_0, %c0_1] : memref<8x16x32xbf16, #tpu.memory_space<vmem>>, vector<8x16x32xbf16>
    %1 = vector.shape_cast %0 : vector<8x16x32xbf16> to vector<128x32xbf16>
    %c0_2 = arith.constant 0 : index
    %c0_3 = arith.constant 0 : index
    %2 = vector.load %arg2[%c0_2, %c0_3] : memref<32x384xbf16, #tpu.memory_space<vmem>>, vector<32x384xbf16>
    %cst = arith.constant dense<0.000000e+00> : vector<128x384xf32>
    %3 = tpu.matmul %1, %2, %cst {dimension_numbers = #tpu.dot_dimension_numbers<[1], [0], [0], [1], [0, 0, 1, 1], [], []>} : vector<128x32xbf16>, vector<32x384xbf16>, vector<128x384xf32> -> vector<128x384xf32>
    %c0_4 = arith.constant 0 : index
    %c0_5 = arith.constant 0 : index
    %4 = vector.load %arg4[%c0_4, %c0_5] : memref<1x384xf32, #tpu.memory_space<vmem>>, vector<1x384xf32>
    %5 = vector.broadcast %4 : vector<1x384xf32> to vector<128x384xf32>
    %6 = arith.addf %3, %5 : vector<128x384xf32>
    %c0_6 = arith.constant 0 : index
    %c0_7 = arith.constant 0 : index
    %7 = vector.load %arg3[%c0_6, %c0_7] : memref<128x384xbf16, #tpu.memory_space<vmem>>, vector<128x384xbf16>
    %c0_8 = arith.constant 0 : index
    %c0_9 = arith.constant 0 : index
    %8 = vector.load %arg5[%c0_8, %c0_9] : memref<1x384xf32, #tpu.memory_space<vmem>>, vector<1x384xf32>
    %9 = vector.shape_cast %8 : vector<1x384xf32> to vector<1x384xf32>
    %10 = vector.broadcast %9 : vector<1x384xf32> to vector<16x384xf32>
    %cst_10 = arith.constant 0.000000e+00 : f32
    %11 = vector.broadcast %cst_10 : f32 to vector<16x128xf32>
    %12 = vector.extract_strided_slice %6 {offsets = [0, 0], sizes = [16, 384], strides = [1, 1]} : vector<128x384xf32> to vector<16x384xf32>
    %13 = arith.truncf %11 : vector<16x128xf32> to vector<16x128xbf16>
    %cst_11 = arith.constant dense<0.000000e+00> : vector<16x384xf32>
    %14 = tpu.matmul %13, %7, %cst_11 {dimension_numbers = #tpu.dot_dimension_numbers<[1], [0], [0], [1], [0, 0, 1, 1], [], []>} : vector<16x128xbf16>, vector<128x384xbf16>, vector<16x384xf32> -> vector<16x384xf32>
    %15 = arith.addf %14, %10 : vector<16x384xf32>
    %16 = vector.extract_strided_slice %12 {offsets = [0, 0], sizes = [16, 128], strides = [1, 1]} : vector<16x384xf32> to vector<16x128xf32>
    %17 = vector.extract_strided_slice %15 {offsets = [0, 0], sizes = [16, 128], strides = [1, 1]} : vector<16x384xf32> to vector<16x128xf32>
    %18 = arith.addf %16, %17 : vector<16x128xf32>
    %19 = arith.negf %18 : vector<16x128xf32>
    %20 = math.exp %19 : vector<16x128xf32>
    %cst_12 = arith.constant 1.000000e+00 : f32
    %21 = vector.broadcast %cst_12 : f32 to vector<16x128xf32>
    %22 = arith.addf %21, %20 : vector<16x128xf32>
    %23 = arith.divf %21, %22 : vector<16x128xf32>
    %24 = vector.extract_strided_slice %12 {offsets = [0, 128], sizes = [16, 128], strides = [1, 1]} : vector<16x384xf32> to vector<16x128xf32>
    %25 = vector.extract_strided_slice %15 {offsets = [0, 128], sizes = [16, 128], strides = [1, 1]} : vector<16x384xf32> to vector<16x128xf32>
    %26 = arith.addf %24, %25 : vector<16x128xf32>
    %27 = arith.negf %26 : vector<16x128xf32>
    %28 = math.exp %27 : vector<16x128xf32>
    %cst_13 = arith.constant 1.000000e+00 : f32
    %29 = vector.broadcast %cst_13 : f32 to vector<16x128xf32>
    %30 = arith.addf %29, %28 : vector<16x128xf32>
    %31 = arith.divf %29, %30 : vector<16x128xf32>
    %32 = vector.extract_strided_slice %12 {offsets = [0, 256], sizes = [16, 128], strides = [1, 1]} : vector<16x384xf32> to vector<16x128xf32>
    %33 = vector.extract_strided_slice %15 {offsets = [0, 256], sizes = [16, 128], strides = [1, 1]} : vector<16x384xf32> to vector<16x128xf32>
    %34 = arith.mulf %23, %33 : vector<16x128xf32>
    %35 = arith.addf %32, %34 : vector<16x128xf32>
    %36 = math.tanh %35 : vector<16x128xf32>
    %cst_14 = arith.constant 1.000000e+00 : f32
    %37 = vector.broadcast %cst_14 : f32 to vector<16x128xf32>
    %38 = arith.subf %37, %31 : vector<16x128xf32>
    %39 = arith.mulf %38, %36 : vector<16x128xf32>
    %40 = arith.mulf %31, %11 : vector<16x128xf32>
    %41 = arith.addf %39, %40 : vector<16x128xf32>
    %c0_15 = arith.constant 0 : index
    %c0_16 = arith.constant 0 : index
    %42 = vector.load %arg16[%c0_15, %c0_16] : memref<128x128xf32, #tpu.memory_space<vmem>>, vector<16x128xf32>
    tpu.vector_store %arg16[%c0_15, %c0_16], %41 {strides = array<i32>} : memref<128x128xf32, #tpu.memory_space<vmem>>, vector<16x128xf32>,
    %43 = vector.extract_strided_slice %6 {offsets = [16, 0], sizes = [16, 384], strides = [1, 1]} : vector<128x384xf32> to vector<16x384xf32>
    %44 = arith.truncf %41 : vector<16x128xf32> to vector<16x128xbf16>
    %cst_17 = arith.constant dense<0.000000e+00> : vector<16x384xf32>
    %45 = tpu.matmul %44, %7, %cst_17 {dimension_numbers = #tpu.dot_dimension_numbers<[1], [0], [0], [1], [0, 0, 1, 1], [], []>} : vector<16x128xbf16>, vector<128x384xbf16>, vector<16x384xf32> -> vector<16x384xf32>
    %46 = arith.addf %45, %10 : vector<16x384xf32>
    %47 = vector.extract_strided_slice %43 {offsets = [0, 0], sizes = [16, 128], strides = [1, 1]} : vector<16x384xf32> to vector<16x128xf32>
    %48 = vector.extract_strided_slice %46 {offsets = [0, 0], sizes = [16, 128], strides = [1, 1]} : vector<16x384xf32> to vector<16x128xf32>
    %49 = arith.addf %47, %48 : vector<16x128xf32>
    %50 = arith.negf %49 : vector<16x128xf32>
    %51 = math.exp %50 : vector<16x128xf32>
    %cst_18 = arith.constant 1.000000e+00 : f32
    %52 = vector.broadcast %cst_18 : f32 to vector<16x128xf32>
    %53 = arith.addf %52, %51 : vector<16x128xf32>
    %54 = arith.divf %52, %53 : vector<16x128xf32>
    %55 = vector.extract_strided_slice %43 {offsets = [0, 128], sizes = [16, 128], strides = [1, 1]} : vector<16x384xf32> to vector<16x128xf32>
    %56 = vector.extract_strided_slice %46 {offsets = [0, 128], sizes = [16, 128], strides = [1, 1]} : vector<16x384xf32> to vector<16x128xf32>
    %57 = arith.addf %55, %56 : vector<16x128xf32>
    %58 = arith.negf %57 : vector<16x128xf32>
    %59 = math.exp %58 : vector<16x128xf32>
    %cst_19 = arith.constant 1.000000e+00 : f32
    %60 = vector.broadcast %cst_19 : f32 to vector<16x128xf32>
    %61 = arith.addf %60, %59 : vector<16x128xf32>
    %62 = arith.divf %60, %61 : vector<16x128xf32>
    %63 = vector.extract_strided_slice %43 {offsets = [0, 256], sizes = [16, 128], strides = [1, 1]} : vector<16x384xf32> to vector<16x128xf32>
    %64 = vector.extract_strided_slice %46 {offsets = [0, 256], sizes = [16, 128], strides = [1, 1]} : vector<16x384xf32> to vector<16x128xf32>
    %65 = arith.mulf %54, %64 : vector<16x128xf32>
    %66 = arith.addf %63, %65 : vector<16x128xf32>
    %67 = math.tanh %66 : vector<16x128xf32>
    %cst_20 = arith.constant 1.000000e+00 : f32
    %68 = vector.broadcast %cst_20 : f32 to vector<16x128xf32>
    %69 = arith.subf %68, %62 : vector<16x128xf32>
    %70 = arith.mulf %69, %67 : vector<16x128xf32>
    %71 = arith.mulf %62, %41 : vector<16x128xf32>
    %72 = arith.addf %70, %71 : vector<16x128xf32>
    %c16 = arith.constant 16 : index
    %c0_21 = arith.constant 0 : index
    %73 = vector.load %arg16[%c16, %c0_21] : memref<128x128xf32, #tpu.memory_space<vmem>>, vector<16x128xf32>
    tpu.vector_store %arg16[%c16, %c0_21], %72 {strides = array<i32>} : memref<128x128xf32, #tpu.memory_space<vmem>>, vector<16x128xf32>,
    %74 = vector.extract_strided_slice %6 {offsets = [32, 0], sizes = [16, 384], strides = [1, 1]} : vector<128x384xf32> to vector<16x384xf32>
    %75 = arith.truncf %72 : vector<16x128xf32> to vector<16x128xbf16>
    %cst_22 = arith.constant dense<0.000000e+00> : vector<16x384xf32>
    %76 = tpu.matmul %75, %7, %cst_22 {dimension_numbers = #tpu.dot_dimension_numbers<[1], [0], [0], [1], [0, 0, 1, 1], [], []>} : vector<16x128xbf16>, vector<128x384xbf16>, vector<16x384xf32> -> vector<16x384xf32>
    %77 = arith.addf %76, %10 : vector<16x384xf32>
    %78 = vector.extract_strided_slice %74 {offsets = [0, 0], sizes = [16, 128], strides = [1, 1]} : vector<16x384xf32> to vector<16x128xf32>
    %79 = vector.extract_strided_slice %77 {offsets = [0, 0], sizes = [16, 128], strides = [1, 1]} : vector<16x384xf32> to vector<16x128xf32>
    %80 = arith.addf %78, %79 : vector<16x128xf32>
    %81 = arith.negf %80 : vector<16x128xf32>
    %82 = math.exp %81 : vector<16x128xf32>
    %cst_23 = arith.constant 1.000000e+00 : f32
    %83 = vector.broadcast %cst_23 : f32 to vector<16x128xf32>
    %84 = arith.addf %83, %82 : vector<16x128xf32>
    %85 = arith.divf %83, %84 : vector<16x128xf32>
    %86 = vector.extract_strided_slice %74 {offsets = [0, 128], sizes = [16, 128], strides = [1, 1]} : vector<16x384xf32> to vector<16x128xf32>
    %87 = vector.extract_strided_slice %77 {offsets = [0, 128], sizes = [16, 128], strides = [1, 1]} : vector<16x384xf32> to vector<16x128xf32>
    %88 = arith.addf %86, %87 : vector<16x128xf32>
    %89 = arith.negf %88 : vector<16x128xf32>
    %90 = math.exp %89 : vector<16x128xf32>
    %cst_24 = arith.constant 1.000000e+00 : f32
    %91 = vector.broadcast %cst_24 : f32 to vector<16x128xf32>
    %92 = arith.addf %91, %90 : vector<16x128xf32>
    %93 = arith.divf %91, %92 : vector<16x128xf32>
    %94 = vector.extract_strided_slice %74 {offsets = [0, 256], sizes = [16, 128], strides = [1, 1]} : vector<16x384xf32> to vector<16x128xf32>
    %95 = vector.extract_strided_slice %77 {offsets = [0, 256], sizes = [16, 128], strides = [1, 1]} : vector<16x384xf32> to vector<16x128xf32>
    %96 = arith.mulf %85, %95 : vector<16x128xf32>
    %97 = arith.addf %94, %96 : vector<16x128xf32>
    %98 = math.tanh %97 : vector<16x128xf32>
    %cst_25 = arith.constant 1.000000e+00 : f32
    %99 = vector.broadcast %cst_25 : f32 to vector<16x128xf32>
    %100 = arith.subf %99, %93 : vector<16x128xf32>
    %101 = arith.mulf %100, %98 : vector<16x128xf32>
    %102 = arith.mulf %93, %72 : vector<16x128xf32>
    %103 = arith.addf %101, %102 : vector<16x128xf32>
    %c32 = arith.constant 32 : index
    %c0_26 = arith.constant 0 : index
    %104 = vector.load %arg16[%c32, %c0_26] : memref<128x128xf32, #tpu.memory_space<vmem>>, vector<16x128xf32>
    tpu.vector_store %arg16[%c32, %c0_26], %103 {strides = array<i32>} : memref<128x128xf32, #tpu.memory_space<vmem>>, vector<16x128xf32>,
    %105 = vector.extract_strided_slice %6 {offsets = [48, 0], sizes = [16, 384], strides = [1, 1]} : vector<128x384xf32> to vector<16x384xf32>
    %106 = arith.truncf %103 : vector<16x128xf32> to vector<16x128xbf16>
    %cst_27 = arith.constant dense<0.000000e+00> : vector<16x384xf32>
    %107 = tpu.matmul %106, %7, %cst_27 {dimension_numbers = #tpu.dot_dimension_numbers<[1], [0], [0], [1], [0, 0, 1, 1], [], []>} : vector<16x128xbf16>, vector<128x384xbf16>, vector<16x384xf32> -> vector<16x384xf32>
    %108 = arith.addf %107, %10 : vector<16x384xf32>
    %109 = vector.extract_strided_slice %105 {offsets = [0, 0], sizes = [16, 128], strides = [1, 1]} : vector<16x384xf32> to vector<16x128xf32>
    %110 = vector.extract_strided_slice %108 {offsets = [0, 0], sizes = [16, 128], strides = [1, 1]} : vector<16x384xf32> to vector<16x128xf32>
    %111 = arith.addf %109, %110 : vector<16x128xf32>
    %112 = arith.negf %111 : vector<16x128xf32>
    %113 = math.exp %112 : vector<16x128xf32>
    %cst_28 = arith.constant 1.000000e+00 : f32
    %114 = vector.broadcast %cst_28 : f32 to vector<16x128xf32>
    %115 = arith.addf %114, %113 : vector<16x128xf32>
    %116 = arith.divf %114, %115 : vector<16x128xf32>
    %117 = vector.extract_strided_slice %105 {offsets = [0, 128], sizes = [16, 128], strides = [1, 1]} : vector<16x384xf32> to vector<16x128xf32>
    %118 = vector.extract_strided_slice %108 {offsets = [0, 128], sizes = [16, 128], strides = [1, 1]} : vector<16x384xf32> to vector<16x128xf32>
    %119 = arith.addf %117, %118 : vector<16x128xf32>
    %120 = arith.negf %119 : vector<16x128xf32>
    %121 = math.exp %120 : vector<16x128xf32>
    %cst_29 = arith.constant 1.000000e+00 : f32
    %122 = vector.broadcast %cst_29 : f32 to vector<16x128xf32>
    %123 = arith.addf %122, %121 : vector<16x128xf32>
    %124 = arith.divf %122, %123 : vector<16x128xf32>
    %125 = vector.extract_strided_slice %105 {offsets = [0, 256], sizes = [16, 128], strides = [1, 1]} : vector<16x384xf32> to vector<16x128xf32>
    %126 = vector.extract_strided_slice %108 {offsets = [0, 256], sizes = [16, 128], strides = [1, 1]} : vector<16x384xf32> to vector<16x128xf32>
    %127 = arith.mulf %116, %126 : vector<16x128xf32>
    %128 = arith.addf %125, %127 : vector<16x128xf32>
    %129 = math.tanh %128 : vector<16x128xf32>
    %cst_30 = arith.constant 1.000000e+00 : f32
    %130 = vector.broadcast %cst_30 : f32 to vector<16x128xf32>
    %131 = arith.subf %130, %124 : vector<16x128xf32>
    %132 = arith.mulf %131, %129 : vector<16x128xf32>
    %133 = arith.mulf %124, %103 : vector<16x128xf32>
    %134 = arith.addf %132, %133 : vector<16x128xf32>
    %c48 = arith.constant 48 : index
    %c0_31 = arith.constant 0 : index
    %135 = vector.load %arg16[%c48, %c0_31] : memref<128x128xf32, #tpu.memory_space<vmem>>, vector<16x128xf32>
    tpu.vector_store %arg16[%c48, %c0_31], %134 {strides = array<i32>} : memref<128x128xf32, #tpu.memory_space<vmem>>, vector<16x128xf32>,
    %136 = vector.extract_strided_slice %6 {offsets = [64, 0], sizes = [16, 384], strides = [1, 1]} : vector<128x384xf32> to vector<16x384xf32>
    %137 = arith.truncf %134 : vector<16x128xf32> to vector<16x128xbf16>
    %cst_32 = arith.constant dense<0.000000e+00> : vector<16x384xf32>
    %138 = tpu.matmul %137, %7, %cst_32 {dimension_numbers = #tpu.dot_dimension_numbers<[1], [0], [0], [1], [0, 0, 1, 1], [], []>} : vector<16x128xbf16>, vector<128x384xbf16>, vector<16x384xf32> -> vector<16x384xf32>
    %139 = arith.addf %138, %10 : vector<16x384xf32>
    %140 = vector.extract_strided_slice %136 {offsets = [0, 0], sizes = [16, 128], strides = [1, 1]} : vector<16x384xf32> to vector<16x128xf32>
    %141 = vector.extract_strided_slice %139 {offsets = [0, 0], sizes = [16, 128], strides = [1, 1]} : vector<16x384xf32> to vector<16x128xf32>
    %142 = arith.addf %140, %141 : vector<16x128xf32>
    %143 = arith.negf %142 : vector<16x128xf32>
    %144 = math.exp %143 : vector<16x128xf32>
    %cst_33 = arith.constant 1.000000e+00 : f32
    %145 = vector.broadcast %cst_33 : f32 to vector<16x128xf32>
    %146 = arith.addf %145, %144 : vector<16x128xf32>
    %147 = arith.divf %145, %146 : vector<16x128xf32>
    %148 = vector.extract_strided_slice %136 {offsets = [0, 128], sizes = [16, 128], strides = [1, 1]} : vector<16x384xf32> to vector<16x128xf32>
    %149 = vector.extract_strided_slice %139 {offsets = [0, 128], sizes = [16, 128], strides = [1, 1]} : vector<16x384xf32> to vector<16x128xf32>
    %150 = arith.addf %148, %149 : vector<16x128xf32>
    %151 = arith.negf %150 : vector<16x128xf32>
    %152 = math.exp %151 : vector<16x128xf32>
    %cst_34 = arith.constant 1.000000e+00 : f32
    %153 = vector.broadcast %cst_34 : f32 to vector<16x128xf32>
    %154 = arith.addf %153, %152 : vector<16x128xf32>
    %155 = arith.divf %153, %154 : vector<16x128xf32>
    %156 = vector.extract_strided_slice %136 {offsets = [0, 256], sizes = [16, 128], strides = [1, 1]} : vector<16x384xf32> to vector<16x128xf32>
    %157 = vector.extract_strided_slice %139 {offsets = [0, 256], sizes = [16, 128], strides = [1, 1]} : vector<16x384xf32> to vector<16x128xf32>
    %158 = arith.mulf %147, %157 : vector<16x128xf32>
    %159 = arith.addf %156, %158 : vector<16x128xf32>
    %160 = math.tanh %159 : vector<16x128xf32>
    %cst_35 = arith.constant 1.000000e+00 : f32
    %161 = vector.broadcast %cst_35 : f32 to vector<16x128xf32>
    %162 = arith.subf %161, %155 : vector<16x128xf32>
    %163 = arith.mulf %162, %160 : vector<16x128xf32>
    %164 = arith.mulf %155, %134 : vector<16x128xf32>
    %165 = arith.addf %163, %164 : vector<16x128xf32>
    %c64 = arith.constant 64 : index
    %c0_36 = arith.constant 0 : index
    %166 = vector.load %arg16[%c64, %c0_36] : memref<128x128xf32, #tpu.memory_space<vmem>>, vector<16x128xf32>
    tpu.vector_store %arg16[%c64, %c0_36], %165 {strides = array<i32>} : memref<128x128xf32, #tpu.memory_space<vmem>>, vector<16x128xf32>,
    %167 = vector.extract_strided_slice %6 {offsets = [80, 0], sizes = [16, 384], strides = [1, 1]} : vector<128x384xf32> to vector<16x384xf32>
    %168 = arith.truncf %165 : vector<16x128xf32> to vector<16x128xbf16>
    %cst_37 = arith.constant dense<0.000000e+00> : vector<16x384xf32>
    %169 = tpu.matmul %168, %7, %cst_37 {dimension_numbers = #tpu.dot_dimension_numbers<[1], [0], [0], [1], [0, 0, 1, 1], [], []>} : vector<16x128xbf16>, vector<128x384xbf16>, vector<16x384xf32> -> vector<16x384xf32>
    %170 = arith.addf %169, %10 : vector<16x384xf32>
    %171 = vector.extract_strided_slice %167 {offsets = [0, 0], sizes = [16, 128], strides = [1, 1]} : vector<16x384xf32> to vector<16x128xf32>
    %172 = vector.extract_strided_slice %170 {offsets = [0, 0], sizes = [16, 128], strides = [1, 1]} : vector<16x384xf32> to vector<16x128xf32>
    %173 = arith.addf %171, %172 : vector<16x128xf32>
    %174 = arith.negf %173 : vector<16x128xf32>
    %175 = math.exp %174 : vector<16x128xf32>
    %cst_38 = arith.constant 1.000000e+00 : f32
    %176 = vector.broadcast %cst_38 : f32 to vector<16x128xf32>
    %177 = arith.addf %176, %175 : vector<16x128xf32>
    %178 = arith.divf %176, %177 : vector<16x128xf32>
    %179 = vector.extract_strided_slice %167 {offsets = [0, 128], sizes = [16, 128], strides = [1, 1]} : vector<16x384xf32> to vector<16x128xf32>
    %180 = vector.extract_strided_slice %170 {offsets = [0, 128], sizes = [16, 128], strides = [1, 1]} : vector<16x384xf32> to vector<16x128xf32>
    %181 = arith.addf %179, %180 : vector<16x128xf32>
    %182 = arith.negf %181 : vector<16x128xf32>
    %183 = math.exp %182 : vector<16x128xf32>
    %cst_39 = arith.constant 1.000000e+00 : f32
    %184 = vector.broadcast %cst_39 : f32 to vector<16x128xf32>
    %185 = arith.addf %184, %183 : vector<16x128xf32>
    %186 = arith.divf %184, %185 : vector<16x128xf32>
    %187 = vector.extract_strided_slice %167 {offsets = [0, 256], sizes = [16, 128], strides = [1, 1]} : vector<16x384xf32> to vector<16x128xf32>
    %188 = vector.extract_strided_slice %170 {offsets = [0, 256], sizes = [16, 128], strides = [1, 1]} : vector<16x384xf32> to vector<16x128xf32>
    %189 = arith.mulf %178, %188 : vector<16x128xf32>
    %190 = arith.addf %187, %189 : vector<16x128xf32>
    %191 = math.tanh %190 : vector<16x128xf32>
    %cst_40 = arith.constant 1.000000e+00 : f32
    %192 = vector.broadcast %cst_40 : f32 to vector<16x128xf32>
    %193 = arith.subf %192, %186 : vector<16x128xf32>
    %194 = arith.mulf %193, %191 : vector<16x128xf32>
    %195 = arith.mulf %186, %165 : vector<16x128xf32>
    %196 = arith.addf %194, %195 : vector<16x128xf32>
    %c80 = arith.constant 80 : index
    %c0_41 = arith.constant 0 : index
    %197 = vector.load %arg16[%c80, %c0_41] : memref<128x128xf32, #tpu.memory_space<vmem>>, vector<16x128xf32>
    tpu.vector_store %arg16[%c80, %c0_41], %196 {strides = array<i32>} : memref<128x128xf32, #tpu.memory_space<vmem>>, vector<16x128xf32>,
    %198 = vector.extract_strided_slice %6 {offsets = [96, 0], sizes = [16, 384], strides = [1, 1]} : vector<128x384xf32> to vector<16x384xf32>
    %199 = arith.truncf %196 : vector<16x128xf32> to vector<16x128xbf16>
    %cst_42 = arith.constant dense<0.000000e+00> : vector<16x384xf32>
    %200 = tpu.matmul %199, %7, %cst_42 {dimension_numbers = #tpu.dot_dimension_numbers<[1], [0], [0], [1], [0, 0, 1, 1], [], []>} : vector<16x128xbf16>, vector<128x384xbf16>, vector<16x384xf32> -> vector<16x384xf32>
    %201 = arith.addf %200, %10 : vector<16x384xf32>
    %202 = vector.extract_strided_slice %198 {offsets = [0, 0], sizes = [16, 128], strides = [1, 1]} : vector<16x384xf32> to vector<16x128xf32>
    %203 = vector.extract_strided_slice %201 {offsets = [0, 0], sizes = [16, 128], strides = [1, 1]} : vector<16x384xf32> to vector<16x128xf32>
    %204 = arith.addf %202, %203 : vector<16x128xf32>
    %205 = arith.negf %204 : vector<16x128xf32>
    %206 = math.exp %205 : vector<16x128xf32>
    %cst_43 = arith.constant 1.000000e+00 : f32
    %207 = vector.broadcast %cst_43 : f32 to vector<16x128xf32>
    %208 = arith.addf %207, %206 : vector<16x128xf32>
    %209 = arith.divf %207, %208 : vector<16x128xf32>
    %210 = vector.extract_strided_slice %198 {offsets = [0, 128], sizes = [16, 128], strides = [1, 1]} : vector<16x384xf32> to vector<16x128xf32>
    %211 = vector.extract_strided_slice %201 {offsets = [0, 128], sizes = [16, 128], strides = [1, 1]} : vector<16x384xf32> to vector<16x128xf32>
    %212 = arith.addf %210, %211 : vector<16x128xf32>
    %213 = arith.negf %212 : vector<16x128xf32>
    %214 = math.exp %213 : vector<16x128xf32>
    %cst_44 = arith.constant 1.000000e+00 : f32
    %215 = vector.broadcast %cst_44 : f32 to vector<16x128xf32>
    %216 = arith.addf %215, %214 : vector<16x128xf32>
    %217 = arith.divf %215, %216 : vector<16x128xf32>
    %218 = vector.extract_strided_slice %198 {offsets = [0, 256], sizes = [16, 128], strides = [1, 1]} : vector<16x384xf32> to vector<16x128xf32>
    %219 = vector.extract_strided_slice %201 {offsets = [0, 256], sizes = [16, 128], strides = [1, 1]} : vector<16x384xf32> to vector<16x128xf32>
    %220 = arith.mulf %209, %219 : vector<16x128xf32>
    %221 = arith.addf %218, %220 : vector<16x128xf32>
    %222 = math.tanh %221 : vector<16x128xf32>
    %cst_45 = arith.constant 1.000000e+00 : f32
    %223 = vector.broadcast %cst_45 : f32 to vector<16x128xf32>
    %224 = arith.subf %223, %217 : vector<16x128xf32>
    %225 = arith.mulf %224, %222 : vector<16x128xf32>
    %226 = arith.mulf %217, %196 : vector<16x128xf32>
    %227 = arith.addf %225, %226 : vector<16x128xf32>
    %c96 = arith.constant 96 : index
    %c0_46 = arith.constant 0 : index
    %228 = vector.load %arg16[%c96, %c0_46] : memref<128x128xf32, #tpu.memory_space<vmem>>, vector<16x128xf32>
    tpu.vector_store %arg16[%c96, %c0_46], %227 {strides = array<i32>} : memref<128x128xf32, #tpu.memory_space<vmem>>, vector<16x128xf32>,
    %229 = vector.extract_strided_slice %6 {offsets = [112, 0], sizes = [16, 384], strides = [1, 1]} : vector<128x384xf32> to vector<16x384xf32>
    %230 = arith.truncf %227 : vector<16x128xf32> to vector<16x128xbf16>
    %cst_47 = arith.constant dense<0.000000e+00> : vector<16x384xf32>
    %231 = tpu.matmul %230, %7, %cst_47 {dimension_numbers = #tpu.dot_dimension_numbers<[1], [0], [0], [1], [0, 0, 1, 1], [], []>} : vector<16x128xbf16>, vector<128x384xbf16>, vector<16x384xf32> -> vector<16x384xf32>
    %232 = arith.addf %231, %10 : vector<16x384xf32>
    %233 = vector.extract_strided_slice %229 {offsets = [0, 0], sizes = [16, 128], strides = [1, 1]} : vector<16x384xf32> to vector<16x128xf32>
    %234 = vector.extract_strided_slice %232 {offsets = [0, 0], sizes = [16, 128], strides = [1, 1]} : vector<16x384xf32> to vector<16x128xf32>
    %235 = arith.addf %233, %234 : vector<16x128xf32>
    %236 = arith.negf %235 : vector<16x128xf32>
    %237 = math.exp %236 : vector<16x128xf32>
    %cst_48 = arith.constant 1.000000e+00 : f32
    %238 = vector.broadcast %cst_48 : f32 to vector<16x128xf32>
    %239 = arith.addf %238, %237 : vector<16x128xf32>
    %240 = arith.divf %238, %239 : vector<16x128xf32>
    %241 = vector.extract_strided_slice %229 {offsets = [0, 128], sizes = [16, 128], strides = [1, 1]} : vector<16x384xf32> to vector<16x128xf32>
    %242 = vector.extract_strided_slice %232 {offsets = [0, 128], sizes = [16, 128], strides = [1, 1]} : vector<16x384xf32> to vector<16x128xf32>
    %243 = arith.addf %241, %242 : vector<16x128xf32>
    %244 = arith.negf %243 : vector<16x128xf32>
    %245 = math.exp %244 : vector<16x128xf32>
    %cst_49 = arith.constant 1.000000e+00 : f32
    %246 = vector.broadcast %cst_49 : f32 to vector<16x128xf32>
    %247 = arith.addf %246, %245 : vector<16x128xf32>
    %248 = arith.divf %246, %247 : vector<16x128xf32>
    %249 = vector.extract_strided_slice %229 {offsets = [0, 256], sizes = [16, 128], strides = [1, 1]} : vector<16x384xf32> to vector<16x128xf32>
    %250 = vector.extract_strided_slice %232 {offsets = [0, 256], sizes = [16, 128], strides = [1, 1]} : vector<16x384xf32> to vector<16x128xf32>
    %251 = arith.mulf %240, %250 : vector<16x128xf32>
    %252 = arith.addf %249, %251 : vector<16x128xf32>
    %253 = math.tanh %252 : vector<16x128xf32>
    %cst_50 = arith.constant 1.000000e+00 : f32
    %254 = vector.broadcast %cst_50 : f32 to vector<16x128xf32>
    %255 = arith.subf %254, %248 : vector<16x128xf32>
    %256 = arith.mulf %255, %253 : vector<16x128xf32>
    %257 = arith.mulf %248, %227 : vector<16x128xf32>
    %258 = arith.addf %256, %257 : vector<16x128xf32>
    %c112 = arith.constant 112 : index
    %c0_51 = arith.constant 0 : index
    %259 = vector.load %arg16[%c112, %c0_51] : memref<128x128xf32, #tpu.memory_space<vmem>>, vector<16x128xf32>
    tpu.vector_store %arg16[%c112, %c0_51], %258 {strides = array<i32>} : memref<128x128xf32, #tpu.memory_space<vmem>>, vector<16x128xf32>,
    %c0_52 = arith.constant 0 : index
    %c0_53 = arith.constant 0 : index
    %260 = vector.load %arg16[%c0_52, %c0_53] : memref<128x128xf32, #tpu.memory_space<vmem>>, vector<128x128xf32>
    %261 = arith.truncf %260 : vector<128x128xf32> to vector<128x128xbf16>
    %c0_54 = arith.constant 0 : index
    %c0_55 = arith.constant 0 : index
    %262 = vector.load %arg6[%c0_54, %c0_55] : memref<128x128xbf16, #tpu.memory_space<vmem>>, vector<128x128xbf16>
    %cst_56 = arith.constant dense<0.000000e+00> : vector<128x128xf32>
    %263 = tpu.matmul %261, %262, %cst_56 {dimension_numbers = #tpu.dot_dimension_numbers<[1], [0], [0], [1], [0, 0, 1, 1], [], []>} : vector<128x128xbf16>, vector<128x128xbf16>, vector<128x128xf32> -> vector<128x128xf32>
    %c0_57 = arith.constant 0 : index
    %c0_58 = arith.constant 0 : index
    %264 = vector.load %arg7[%c0_57, %c0_58] : memref<1x128xf32, #tpu.memory_space<vmem>>, vector<1x128xf32>
    %265 = vector.broadcast %264 : vector<1x128xf32> to vector<128x128xf32>
    %266 = arith.addf %263, %265 : vector<128x128xf32>
    %cst_59 = arith.constant 0.000000e+00 : f32
    %267 = vector.broadcast %cst_59 : f32 to vector<128x128xf32>
    %268 = arith.maximumf %266, %267 : vector<128x128xf32>
    %269 = arith.truncf %268 : vector<128x128xf32> to vector<128x128xbf16>
    %c0_60 = arith.constant 0 : index
    %c0_61 = arith.constant 0 : index
    %270 = vector.load %arg8[%c0_60, %c0_61] : memref<128x128xbf16, #tpu.memory_space<vmem>>, vector<128x128xbf16>
    %cst_62 = arith.constant dense<0.000000e+00> : vector<128x128xf32>
    %271 = tpu.matmul %269, %270, %cst_62 {dimension_numbers = #tpu.dot_dimension_numbers<[1], [0], [0], [1], [0, 0, 1, 1], [], []>} : vector<128x128xbf16>, vector<128x128xbf16>, vector<128x128xf32> -> vector<128x128xf32>
    %c0_63 = arith.constant 0 : index
    %c0_64 = arith.constant 0 : index
    %272 = vector.load %arg9[%c0_63, %c0_64] : memref<1x128xf32, #tpu.memory_space<vmem>>, vector<1x128xf32>
    %273 = vector.broadcast %272 : vector<1x128xf32> to vector<128x128xf32>
    %274 = arith.addf %271, %273 : vector<128x128xf32>
    %275 = vector.shape_cast %268 : vector<128x128xf32> to vector<8x16x128xf32>
    %276 = vector.shape_cast %274 : vector<128x128xf32> to vector<8x16x128xf32>
    %cst_65 = arith.constant dense<0xFF800000> : vector<16x128xf32>
    %277 = vector.multi_reduction <maximumf>, %276, %cst_65 [0] : vector<8x16x128xf32> to vector<16x128xf32>
    %278 = vector.shape_cast %277 : vector<16x128xf32> to vector<1x16x128xf32>
    %279 = vector.broadcast %278 : vector<1x16x128xf32> to vector<8x16x128xf32>
    %280 = arith.subf %276, %279 : vector<8x16x128xf32>
    %281 = math.exp %280 : vector<8x16x128xf32>
    %cst_66 = arith.constant dense<0.000000e+00> : vector<16x128xf32>
    %282 = vector.multi_reduction <add>, %281, %cst_66 [0] : vector<8x16x128xf32> to vector<16x128xf32>
    %283 = vector.shape_cast %282 : vector<16x128xf32> to vector<1x16x128xf32>
    %284 = tpu.reciprocal %283 {approx = true} : vector<1x16x128xf32> -> vector<1x16x128xf32>
    %285 = vector.broadcast %284 : vector<1x16x128xf32> to vector<8x16x128xf32>
    %286 = arith.mulf %281, %285 : vector<8x16x128xf32>
    %287 = arith.mulf %275, %286 : vector<8x16x128xf32>
    %cst_67 = arith.constant dense<0.000000e+00> : vector<16x128xf32>
    %288 = vector.multi_reduction <add>, %287, %cst_67 [0] : vector<8x16x128xf32> to vector<16x128xf32>
    %289 = arith.truncf %288 : vector<16x128xf32> to vector<16x128xbf16>
    %c0_68 = arith.constant 0 : index
    %c0_69 = arith.constant 0 : index
    %290 = vector.load %arg10[%c0_68, %c0_69] : memref<128x256xbf16, #tpu.memory_space<vmem>>, vector<128x256xbf16>
    %cst_70 = arith.constant dense<0.000000e+00> : vector<16x256xf32>
    %291 = tpu.matmul %289, %290, %cst_70 {dimension_numbers = #tpu.dot_dimension_numbers<[1], [0], [0], [1], [0, 0, 1, 1], [], []>} : vector<16x128xbf16>, vector<128x256xbf16>, vector<16x256xf32> -> vector<16x256xf32>
    %292 = vector.extract_strided_slice %291 {offsets = [0, 0], sizes = [16, 128], strides = [1, 1]} : vector<16x256xf32> to vector<16x128xf32>
    %c0_71 = arith.constant 0 : index
    %c0_72 = arith.constant 0 : index
    %293 = vector.load %arg11[%c0_71, %c0_72] : memref<1x128xf32, #tpu.memory_space<vmem>>, vector<1x128xf32>
    %294 = vector.broadcast %293 : vector<1x128xf32> to vector<16x128xf32>
    %295 = arith.addf %292, %294 : vector<16x128xf32>
    %296 = vector.extract_strided_slice %291 {offsets = [0, 128], sizes = [16, 128], strides = [1, 1]} : vector<16x256xf32> to vector<16x128xf32>
    %c0_73 = arith.constant 0 : index
    %c0_74 = arith.constant 0 : index
    %297 = vector.load %arg12[%c0_73, %c0_74] : memref<1x128xf32, #tpu.memory_space<vmem>>, vector<1x128xf32>
    %298 = vector.broadcast %297 : vector<1x128xf32> to vector<16x128xf32>
    %299 = arith.addf %296, %298 : vector<16x128xf32>
    %300 = arith.truncf %295 : vector<16x128xf32> to vector<16x128xbf16>
    %c0_75 = arith.constant 0 : index
    %c0_76 = arith.constant 0 : index
    %301 = vector.load %arg13[%c0_75, %c0_76] : memref<128x128xbf16, #tpu.memory_space<vmem>>, vector<128x128xbf16>
    %cst_77 = arith.constant dense<0.000000e+00> : vector<16x128xf32>
    %302 = tpu.matmul %300, %301, %cst_77 {dimension_numbers = #tpu.dot_dimension_numbers<[1], [0], [0], [1], [0, 0, 1, 1], [], []>} : vector<16x128xbf16>, vector<128x128xbf16>, vector<16x128xf32> -> vector<16x128xf32>
    %c0_78 = arith.constant 0 : index
    %c0_79 = arith.constant 0 : index
    %303 = vector.load %arg14[%c0_78, %c0_79] : memref<1x128xf32, #tpu.memory_space<vmem>>, vector<1x128xf32>
    %304 = vector.broadcast %303 : vector<1x128xf32> to vector<16x128xf32>
    %305 = arith.addf %302, %304 : vector<16x128xf32>
    %306 = tpu.concatenate %305, %299, %288 in 1 : vector<16x128xf32>, vector<16x128xf32>, vector<16x128xf32> -> vector<16x384xf32>
    %c0_80 = arith.constant 0 : index
    %c0_81 = arith.constant 0 : index
    %307 = vector.load %arg15[%c0_80, %c0_81] : memref<16x384xf32, #tpu.memory_space<vmem>>, vector<16x384xf32>
    tpu.vector_store %arg15[%c0_80, %c0_81], %306 {strides = array<i32>} : memref<16x384xf32, #tpu.memory_space<vmem>>, vector<16x384xf32>,
    return
  }
  func.func @transform_0(%arg0: i32) -> (i32, i32, i32) {
    %c0_i32 = arith.constant 0 : i32
    %c0_i32_0 = arith.constant 0 : i32
    %c0_i32_1 = arith.constant 0 : i32
    return %c0_i32, %arg0, %c0_i32_0 : i32, i32, i32
  }
  func.func @transform_1(%arg0: i32) -> (i32, i32) {
    %c0_i32 = arith.constant 0 : i32
    %c0_i32_0 = arith.constant 0 : i32
    %c0_i32_1 = arith.constant 0 : i32
    return %c0_i32, %c0_i32_0 : i32, i32
  }
  func.func @transform_2(%arg0: i32) -> (i32, i32) {
    %c0_i32 = arith.constant 0 : i32
    %c0_i32_0 = arith.constant 0 : i32
    %c0_i32_1 = arith.constant 0 : i32
    return %c0_i32, %c0_i32_0 : i32, i32
  }
  func.func @transform_3(%arg0: i32) -> (i32, i32) {
    %c0_i32 = arith.constant 0 : i32
    %c0_i32_0 = arith.constant 0 : i32
    %c0_i32_1 = arith.constant 0 : i32
    return %c0_i32, %c0_i32_0 : i32, i32
  }
  func.func @transform_4(%arg0: i32) -> (i32, i32) {
    %c0_i32 = arith.constant 0 : i32
    %c0_i32_0 = arith.constant 0 : i32
    %c0_i32_1 = arith.constant 0 : i32
    return %c0_i32, %c0_i32_0 : i32, i32
  }
  func.func @transform_5(%arg0: i32) -> (i32, i32) {
    %c0_i32 = arith.constant 0 : i32
    %c0_i32_0 = arith.constant 0 : i32
    %c0_i32_1 = arith.constant 0 : i32
    return %c0_i32, %c0_i32_0 : i32, i32
  }
  func.func @transform_6(%arg0: i32) -> (i32, i32) {
    %c0_i32 = arith.constant 0 : i32
    %c0_i32_0 = arith.constant 0 : i32
    %c0_i32_1 = arith.constant 0 : i32
    return %c0_i32, %c0_i32_0 : i32, i32
  }
  func.func @transform_7(%arg0: i32) -> (i32, i32) {
    %c0_i32 = arith.constant 0 : i32
    %c0_i32_0 = arith.constant 0 : i32
    %c0_i32_1 = arith.constant 0 : i32
    return %c0_i32, %c0_i32_0 : i32, i32
  }
  func.func @transform_8(%arg0: i32) -> (i32, i32) {
    %c0_i32 = arith.constant 0 : i32
    %c0_i32_0 = arith.constant 0 : i32
    %c0_i32_1 = arith.constant 0 : i32
    return %c0_i32, %c0_i32_0 : i32, i32
  }
  func.func @transform_9(%arg0: i32) -> (i32, i32) {
    %c0_i32 = arith.constant 0 : i32
    %c0_i32_0 = arith.constant 0 : i32
    %c0_i32_1 = arith.constant 0 : i32
    return %c0_i32, %c0_i32_0 : i32, i32
  }
  func.func @transform_10(%arg0: i32) -> (i32, i32) {
    %c0_i32 = arith.constant 0 : i32
    %c0_i32_0 = arith.constant 0 : i32
    %c0_i32_1 = arith.constant 0 : i32
    return %c0_i32, %c0_i32_0 : i32, i32
  }
  func.func @transform_11(%arg0: i32) -> (i32, i32) {
    %c0_i32 = arith.constant 0 : i32
    %c0_i32_0 = arith.constant 0 : i32
    %c0_i32_1 = arith.constant 0 : i32
    return %c0_i32, %c0_i32_0 : i32, i32
  }
  func.func @transform_12(%arg0: i32) -> (i32, i32) {
    %c0_i32 = arith.constant 0 : i32
    %c0_i32_0 = arith.constant 0 : i32
    %c0_i32_1 = arith.constant 0 : i32
    return %c0_i32, %c0_i32_0 : i32, i32
  }
  func.func @transform_13(%arg0: i32) -> (i32, i32) {
    %c0_i32 = arith.constant 0 : i32
    %c0_i32_0 = arith.constant 0 : i32
    %c0_i32_1 = arith.constant 0 : i32
    return %c0_i32, %c0_i32_0 : i32, i32
  }
  func.func @transform_14(%arg0: i32) -> (i32, i32) {
    %c0_i32 = arith.constant 0 : i32
    %c0_i32_0 = arith.constant 0 : i32
    return %arg0, %c0_i32 : i32, i32
  }
}

</mosaic_0001>

<llo_original>
// kernel: smorl_forward.1
$region0: #{smorl_forward.1}
  #allocation0 [shape = 'u32[]', space=smem, size = 0x4, offset = 0x4, fixed_abs, tag = 'smem constant byte address 0x4 - core index']
  #allocation1 [shape = 'u32[144,128]{1,0:T(1,128)}', space=vmem, size = 0x12000, scoped, tag = 'internal scratch']
  #allocation2 [shape = 'f32[128,128]{1,0:T(8,128)}', space=vmem, size = 0x10000, scoped, tag = 'scratch operand']
  %s0 = inlined_call_operand.vmem [shape: bf16[8,16,32], index: 0, kind: input, shape index: {}]
  %s1 = inlined_call_operand.hbm [shape: bf16[32,384], index: 1, kind: input, shape index: {}]
  %s2 = inlined_call_operand.vmem [shape: bf16[128,384], index: 2, kind: input, shape index: {}]
  %s3 = inlined_call_operand.vmem [shape: f32[1,384], index: 3, kind: input, shape index: {}]
  %s4 = inlined_call_operand.vmem [shape: f32[1,384], index: 4, kind: input, shape index: {}]
  %s5 = inlined_call_operand.hbm [shape: bf16[128,128], index: 5, kind: input, shape index: {}]
  %s6 = inlined_call_operand.vmem [shape: f32[1,128], index: 6, kind: input, shape index: {}]
  %s7 = inlined_call_operand.hbm [shape: bf16[128,128], index: 7, kind: input, shape index: {}]
  %s8 = inlined_call_operand.vmem [shape: f32[1,128], index: 8, kind: input, shape index: {}]
  %s9 = inlined_call_operand.hbm [shape: bf16[128,256], index: 9, kind: input, shape index: {}]
  %s10 = inlined_call_operand.vmem [shape: f32[1,128], index: 10, kind: input, shape index: {}]
  %s11 = inlined_call_operand.vmem [shape: f32[1,128], index: 11, kind: input, shape index: {}]
  %s12 = inlined_call_operand.vmem [shape: bf16[128,128], index: 12, kind: input, shape index: {}]
  %s13 = inlined_call_operand.vmem [shape: f32[1,128], index: 13, kind: input, shape index: {}]
  %s14 = inlined_call_operand.vmem [shape: f32[16,384], index: 14, kind: output, shape index: {}]
  %s15 = sld [smem:[#allocation0]]
  $region82: #{smorl_forward.1} parent=0
    _
  %s17 = ssub.s32 1, %s15
  %s18 = scalar_select 0, %s17, %s15
  $region1: #{smorl_forward.1} parent=0
    #allocation3 [shape = 'u8[24576]{0}', space=vmem, size = 0x6000, scoped, tag = 'input window, operand 1, single buffered']
    #allocation4 [shape = 's32[1]{0}', space=sflag, size = 0x4, scoped, tag = 'scoped memory for smorl_forward.1']
    #allocation5 [shape = 'u8[32768]{0}', space=vmem, size = 0x8000, scoped, tag = 'input window, operand 5, single buffered']
    #allocation6 [shape = 's32[1]{0}', space=sflag, size = 0x4, scoped, tag = 'scoped memory for smorl_forward.1']
    #allocation7 [shape = 'u8[32768]{0}', space=vmem, size = 0x8000, scoped, tag = 'input window, operand 7, single buffered']
    #allocation8 [shape = 'u8[65536]{0}', space=vmem, size = 0x10000, scoped, tag = 'input window, operand 9, single buffered']
    #allocation9 [shape = 's32[1]{0}', space=sflag, size = 0x4, scoped, tag = 'scoped memory for smorl_forward.1']
    %19 = vsyncpa [#allocation4], 0
    %20 = vsyncpa [#allocation6], 0
    %21 = vsyncpa [#allocation9], 0
    // Predicated region
    $region2: #{smorl_forward.1} parent=1 // pred_check
      _
    $region3: #{smorl_forward.1} parent=1 // pred_check_branch
      %23 = sbr.rel (0) target = $region5
    $region4: #{smorl_forward.1} parent=1 // pred_region
      _
    $region5: #{smorl_forward.1} parent=1 // pred_fallthru
      _
    // Predicated region
    $region6: #{smorl_forward.1} parent=1 // pred_check
      _
    $region7: #{smorl_forward.1} parent=1 // pred_check_branch
      %25 = sbr.rel (0) target = $region9
    $region8: #{smorl_forward.1} parent=1 // pred_region
      %s27 = ssub.s32 768, 768
      %28 = vsyncadd [#allocation4], %s27
      %s29 = sshll.u32 [#allocation3], 4
      %s30 = int_to_ptr.vmem [resolvable:$true] %s29
      %35 = dma.hbm_to_vmem [thread:$0]  %s1, 768, %s30, [#allocation4], 192, 192, 12
    $region9: #{smorl_forward.1} parent=1 // pred_fallthru
      _
    // Predicated region
    $region10: #{smorl_forward.1} parent=1 // pred_check
      _
    $region11: #{smorl_forward.1} parent=1 // pred_check_branch
      %37 = sbr.rel (0) target = $region13
    $region12: #{smorl_forward.1} parent=1 // pred_region
      _
    $region13: #{smorl_forward.1} parent=1 // pred_fallthru
      _
    // Predicated region
    $region14: #{smorl_forward.1} parent=1 // pred_check
      _
    $region15: #{smorl_forward.1} parent=1 // pred_check_branch
      %39 = sbr.rel (0) target = $region17
    $region16: #{smorl_forward.1} parent=1 // pred_region
      _
    $region17: #{smorl_forward.1} parent=1 // pred_fallthru
      _
    // Predicated region
    $region18: #{smorl_forward.1} parent=1 // pred_check
      _
    $region19: #{smorl_forward.1} parent=1 // pred_check_branch
      %41 = sbr.rel (0) target = $region21
    $region20: #{smorl_forward.1} parent=1 // pred_region
      _
    $region21: #{smorl_forward.1} parent=1 // pred_fallthru
      _
    // Predicated region
    $region22: #{smorl_forward.1} parent=1 // pred_check
      _
    $region23: #{smorl_forward.1} parent=1 // pred_check_branch
      %43 = sbr.rel (0) target = $region25
    $region24: #{smorl_forward.1} parent=1 // pred_region
      %s45 = ssub.s32 1024, 1024
      %46 = vsyncadd [#allocation6], %s45
      %s47 = sshll.u32 [#allocation5], 4
      %s48 = int_to_ptr.vmem [resolvable:$true] %s47
      %53 = dma.hbm_to_vmem [thread:$0]  %s5, 1024, %s48, [#allocation6], 64, 64, 4
    $region25: #{smorl_forward.1} parent=1 // pred_fallthru
      _
    // Predicated region
    $region26: #{smorl_forward.1} parent=1 // pred_check
      _
    $region27: #{smorl_forward.1} parent=1 // pred_check_branch
      %55 = sbr.rel (0) target = $region29
    $region28: #{smorl_forward.1} parent=1 // pred_region
      _
    $region29: #{smorl_forward.1} parent=1 // pred_fallthru
      _
    // Predicated region
    $region30: #{smorl_forward.1} parent=1 // pred_check
      _
    $region31: #{smorl_forward.1} parent=1 // pred_check_branch
      %57 = sbr.rel (0) target = $region33
    $region32: #{smorl_forward.1} parent=1 // pred_region
      %s59 = ssub.s32 1024, 1024
      %60 = vsyncadd [#allocation6], %s59
      %s61 = sshll.u32 [#allocation7], 4
      %s62 = int_to_ptr.vmem [resolvable:$true] %s61
      %67 = dma.hbm_to_vmem [thread:$0]  %s7, 1024, %s62, [#allocation6], 64, 64, 4
    $region33: #{smorl_forward.1} parent=1 // pred_fallthru
      _
    // Predicated region
    $region34: #{smorl_forward.1} parent=1 // pred_check
      _
    $region35: #{smorl_forward.1} parent=1 // pred_check_branch
      %69 = sbr.rel (0) target = $region37
    $region36: #{smorl_forward.1} parent=1 // pred_region
      _
    $region37: #{smorl_forward.1} parent=1 // pred_fallthru
      _
    // Predicated region
    $region38: #{smorl_forward.1} parent=1 // pred_check
      _
    $region39: #{smorl_forward.1} parent=1 // pred_check_branch
      %71 = sbr.rel (0) target = $region41
    $region40: #{smorl_forward.1} parent=1 // pred_region
      %s73 = ssub.s32 2048, 2048
      %74 = vsyncadd [#allocation9], %s73
      %s75 = sshll.u32 [#allocation8], 4
      %s76 = int_to_ptr.vmem [resolvable:$true] %s75
      %81 = dma.hbm_to_vmem [thread:$0]  %s9, 2048, %s76, [#allocation9], 128, 128, 8
    $region41: #{smorl_forward.1} parent=1 // pred_fallthru
      _
    // Predicated region
    $region42: #{smorl_forward.1} parent=1 // pred_check
      _
    $region43: #{smorl_forward.1} parent=1 // pred_check_branch
      %83 = sbr.rel (0) target = $region45
    $region44: #{smorl_forward.1} parent=1 // pred_region
      _
    $region45: #{smorl_forward.1} parent=1 // pred_fallthru
      _
    // Predicated region
    $region46: #{smorl_forward.1} parent=1 // pred_check
      _
    $region47: #{smorl_forward.1} parent=1 // pred_check_branch
      %85 = sbr.rel (0) target = $region49
    $region48: #{smorl_forward.1} parent=1 // pred_region
      _
    $region49: #{smorl_forward.1} parent=1 // pred_fallthru
      _
    // Predicated region
    $region50: #{smorl_forward.1} parent=1 // pred_check
      _
    $region51: #{smorl_forward.1} parent=1 // pred_check_branch
      %87 = sbr.rel (0) target = $region53
    $region52: #{smorl_forward.1} parent=1 // pred_region
      _
    $region53: #{smorl_forward.1} parent=1 // pred_fallthru
      _
    // Predicated region
    $region54: #{smorl_forward.1} parent=1 // pred_check
      _
    $region55: #{smorl_forward.1} parent=1 // pred_check_branch
      %89 = sbr.rel (0) target = $region57
    $region56: #{smorl_forward.1} parent=1 // pred_region
      _
    $region57: #{smorl_forward.1} parent=1 // pred_fallthru
      _
    // Predicated region
    $region58: #{smorl_forward.1} parent=1 // pred_check
      _
    $region59: #{smorl_forward.1} parent=1 // pred_check_branch
      %91 = sbr.rel (0) target = $region61
    $region60: #{smorl_forward.1} parent=1 // pred_region
      %92 = dma.done [#allocation4], 768
    $region61: #{smorl_forward.1} parent=1 // pred_fallthru
      _
    // Predicated region
    $region62: #{smorl_forward.1} parent=1 // pred_check
      _
    $region63: #{smorl_forward.1} parent=1 // pred_check_branch
      %94 = sbr.rel (0) target = $region65
    $region64: #{smorl_forward.1} parent=1 // pred_region
      %95 = dma.done [#allocation6], 1024
    $region65: #{smorl_forward.1} parent=1 // pred_fallthru
      _
    // Predicated region
    $region66: #{smorl_forward.1} parent=1 // pred_check
      _
    $region67: #{smorl_forward.1} parent=1 // pred_check_branch
      %97 = sbr.rel (0) target = $region69
    $region68: #{smorl_forward.1} parent=1 // pred_region
      %98 = dma.done [#allocation6], 1024
    $region69: #{smorl_forward.1} parent=1 // pred_fallthru
      _
    // Predicated region
    $region70: #{smorl_forward.1} parent=1 // pred_check
      _
    $region71: #{smorl_forward.1} parent=1 // pred_check_branch
      %100 = sbr.rel (0) target = $region73
    $region72: #{smorl_forward.1} parent=1 // pred_region
      %101 = dma.done [#allocation9], 2048
    $region73: #{smorl_forward.1} parent=1 // pred_fallthru
      _
    %v103 = vld [vmem:[%s0] sm:$0xf]
    %v104 = vld [vmem:[%s0 + $0x4] sm:$0xf]
    %v105 = vld [vmem:[%s0 + $0x8] sm:$0xf]
    %v106 = vld [vmem:[%s0 + $0xc] sm:$0xf]
    %v107 = vld [vmem:[%s0 + $0x10] sm:$0xf]
    %v108 = vld [vmem:[%s0 + $0x14] sm:$0xf]
    %v109 = vld [vmem:[%s0 + $0x18] sm:$0xf]
    %v110 = vld [vmem:[%s0 + $0x1c] sm:$0xf]
    %v111 = vld [vmem:[%s0 + $0x20] sm:$0xf]
    %v112 = vld [vmem:[%s0 + $0x24] sm:$0xf]
    %v113 = vld [vmem:[%s0 + $0x28] sm:$0xf]
    %v114 = vld [vmem:[%s0 + $0x2c] sm:$0xf]
    %v115 = vld [vmem:[%s0 + $0x30] sm:$0xf]
    %v116 = vld [vmem:[%s0 + $0x34] sm:$0xf]
    %v117 = vld [vmem:[%s0 + $0x38] sm:$0xf]
    %v118 = vld [vmem:[%s0 + $0x3c] sm:$0xf]
    %v119 = vld [vmem:[#allocation3] sm:$0xff]
    %v120 = vld [vmem:[#allocation3 + $0x8] sm:$0xf]
    %v121 = vld [vmem:[#allocation3 + $0xc] sm:$0xff]
    %v122 = vld [vmem:[#allocation3 + $0x14] sm:$0xf]
    %v123 = vld [vmem:[#allocation3 + $0x18] sm:$0xff]
    %v124 = vld [vmem:[#allocation3 + $0x20] sm:$0xf]
    %v125 = vld [vmem:[#allocation3 + $0x24] sm:$0xff]
    %v126 = vld [vmem:[#allocation3 + $0x2c] sm:$0xf]
    %v127 = vld [vmem:[%s3] sm:$0x7]
    %v129 = vlaneseq
    %v130 = vshrl.u32 %v129, 7
    %v131 = vsub.s32 0, %v130
    %v132 = vrot.slane %v127, %v131
    %v133 = vlaneseq
    %v134 = vshrl.u32 %v133, 7
    %v135 = vsub.s32 1, %v134
    %v136 = vrot.slane %v127, %v135
    %v137 = vlaneseq
    %v138 = vshrl.u32 %v137, 7
    %v139 = vsub.s32 2, %v138
    %v140 = vrot.slane %v127, %v139
    %v160 = vunpack.c.l.b16 %v103
    %v161 = vunpack.c.l.b16 %v104
    %v162 = vunpack.c.l.b16 %v105
    %v163 = vunpack.c.l.b16 %v106
    %v164 = vunpack.c.l.b16 %v107
    %v165 = vunpack.c.l.b16 %v108
    %v166 = vunpack.c.l.b16 %v109
    %v167 = vunpack.c.l.b16 %v110
    %v168 = vunpack.c.l.b16 %v111
    %v169 = vunpack.c.l.b16 %v112
    %v170 = vunpack.c.l.b16 %v113
    %v171 = vunpack.c.l.b16 %v114
    %v172 = vunpack.c.l.b16 %v115
    %v173 = vunpack.c.l.b16 %v116
    %v174 = vunpack.c.l.b16 %v117
    %v175 = vunpack.c.l.b16 %v118
    %v176 = vpack.c.b16 %v161, %v160
    %v177 = vpack.c.b16 %v163, %v162
    %v178 = vpack.c.b16 %v165, %v164
    %v179 = vpack.c.b16 %v167, %v166
    %v180 = vpack.c.b16 %v169, %v168
    %v181 = vpack.c.b16 %v171, %v170
    %v182 = vpack.c.b16 %v173, %v172
    %v183 = vpack.c.b16 %v175, %v174
    %v192 = vunpack.c.l.b16 %v119
    %v193 = vunpack.c.h.b16 %v119
    %v194 = vunpack.c.l.b16 %v120
    %v195 = vunpack.c.l.b16 %v121
    %v196 = vunpack.c.h.b16 %v121
    %v197 = vunpack.c.l.b16 %v122
    %v198 = vunpack.c.l.b16 %v123
    %v199 = vunpack.c.h.b16 %v123
    %v200 = vunpack.c.l.b16 %v124
    %v201 = vunpack.c.l.b16 %v125
    %v202 = vunpack.c.h.b16 %v125
    %v203 = vunpack.c.l.b16 %v126
    %v204 = vpack.c.b16 %v195, %v192
    %v205 = vpack.c.b16 %v196, %v193
    %v206 = vpack.c.b16 %v197, %v194
    %v207 = vpack.c.b16 %v201, %v198
    %v208 = vpack.c.b16 %v202, %v199
    %v209 = vpack.c.b16 %v203, %v200
    %vm216 = vcmask 261120
    %v218 = vsel %vm216, %v176, 0
    %v221 = vsel %vm216, %v177, 0
    %v224 = vsel %vm216, %v178, 0
    %v227 = vsel %vm216, %v179, 0
    %v230 = vsel %vm216, %v180, 0
    %v233 = vsel %vm216, %v181, 0
    %v236 = vsel %vm216, %v182, 0
    %v239 = vsel %vm216, %v183, 0
    %241 = vmatprep.subr.bf16.mxu0 0
    %242 = vmatpush1.bf16.msra.mxu0 0
    %243 = vmatprep.subr.bf16.mxu0 0
    %244 = vmatpush1.bf16.msra.mxu0 0
    %245 = vmatprep.subr.bf16.mxu0 0
    %246 = vmatpush1.bf16.msra.mxu0 0
    %247 = vmatprep.subr.bf16.mxu0 0
    %248 = vmatpush1.bf16.msra.mxu0 0
    %249 = vmatprep.subr.bf16.mxu0 0
    %250 = vmatpush1.bf16.msra.mxu0 0
    %251 = vmatprep.subr.bf16.mxu0 0
    %252 = vmatpush1.bf16.msra.mxu0 0
    %253 = vmatprep.subr.bf16.mxu0 %v208
    %254 = vmatpush1.bf16.msra.mxu0 %v207
    %255 = vmatprep.subr.bf16.mxu0 %v205
    %256 = vmatpush1.bf16.msra.mxu0 %v204
    %257 = vmatprep.subr.bf16.mxu0 0
    %258 = vmatpush2.bf16.msra.mxu0 0
    %259 = vmatprep.subr.bf16.mxu0 0
    %260 = vmatpush2.bf16.msra.mxu0 0
    %261 = vmatprep.subr.bf16.mxu0 0
    %262 = vmatpush2.bf16.msra.mxu0 0
    %263 = vmatprep.subr.bf16.mxu0 0
    %264 = vmatpush2.bf16.msra.mxu0 0
    %265 = vmatprep.subr.bf16.mxu0 0
    %266 = vmatpush2.bf16.msra.mxu0 0
    %267 = vmatprep.subr.bf16.mxu0 0
    %268 = vmatpush2.bf16.msra.mxu0 0
    %269 = vmatprep.subr.bf16.mxu0 0
    %270 = vmatpush2.bf16.msra.mxu0 0
    %271 = vmatprep.subr.bf16.mxu0 0
    %272 = vmatpush2.bf16.msra.mxu0 0
    %273 = vmatprep.mubr.bf16.mxu0 0
    %274 = vmatmul.mubr.bf16.gmra.mxu0 %v218
    %v275 = vpop.f32.mrf.mxu0
    %v276 = vadd.f32 %v132, %v275
    %v277 = vpop.f32.mrf.mxu0
    %v278 = vadd.f32 %v136, %v277
    %v279 = vpop.f32.mrf.mxu0
    %v280 = vadd.f32 %v132, %v279
    %v281 = vpop.f32.mrf.mxu0
    %v282 = vadd.f32 %v136, %v281
    %283 = vmatprep.mubr.bf16.mxu0 0
    %284 = vmatmul.mubr.bf16.gmra.mxu0 %v221
    %v285 = vpop.f32.mrf.mxu0
    %v286 = vadd.f32 %v132, %v285
    %v287 = vpop.f32.mrf.mxu0
    %v288 = vadd.f32 %v136, %v287
    %v289 = vpop.f32.mrf.mxu0
    %v290 = vadd.f32 %v132, %v289
    %v291 = vpop.f32.mrf.mxu0
    %v292 = vadd.f32 %v136, %v291
    %293 = vmatprep.mubr.bf16.mxu0 0
    %294 = vmatmul.mubr.bf16.gmra.mxu0 %v224
    %v295 = vpop.f32.mrf.mxu0
    %v296 = vadd.f32 %v132, %v295
    %v297 = vpop.f32.mrf.mxu0
    %v298 = vadd.f32 %v136, %v297
    %v299 = vpop.f32.mrf.mxu0
    %v300 = vadd.f32 %v132, %v299
    %v301 = vpop.f32.mrf.mxu0
    %v302 = vadd.f32 %v136, %v301
    %303 = vmatprep.mubr.bf16.mxu0 0
    %304 = vmatmul.mubr.bf16.gmra.mxu0 %v227
    %v305 = vpop.f32.mrf.mxu0
    %v306 = vadd.f32 %v132, %v305
    %v307 = vpop.f32.mrf.mxu0
    %v308 = vadd.f32 %v136, %v307
    %v309 = vpop.f32.mrf.mxu0
    %v310 = vadd.f32 %v132, %v309
    %v311 = vpop.f32.mrf.mxu0
    %v312 = vadd.f32 %v136, %v311
    %313 = vmatprep.mubr.bf16.mxu0 0
    %314 = vmatmul.mubr.bf16.gmra.mxu0 %v230
    %v315 = vpop.f32.mrf.mxu0
    %v316 = vadd.f32 %v132, %v315
    %v317 = vpop.f32.mrf.mxu0
    %v318 = vadd.f32 %v136, %v317
    %v319 = vpop.f32.mrf.mxu0
    %v320 = vadd.f32 %v132, %v319
    %v321 = vpop.f32.mrf.mxu0
    %v322 = vadd.f32 %v136, %v321
    %323 = vmatprep.mubr.bf16.mxu0 0
    %324 = vmatmul.mubr.bf16.gmra.mxu0 %v233
    %v325 = vpop.f32.mrf.mxu0
    %v326 = vadd.f32 %v132, %v325
    %v327 = vpop.f32.mrf.mxu0
    %v328 = vadd.f32 %v136, %v327
    %v329 = vpop.f32.mrf.mxu0
    %v330 = vadd.f32 %v132, %v329
    %v331 = vpop.f32.mrf.mxu0
    %v332 = vadd.f32 %v136, %v331
    %333 = vmatprep.mubr.bf16.mxu0 0
    %334 = vmatmul.mubr.bf16.gmra.mxu0 %v236
    %v335 = vpop.f32.mrf.mxu0
    %v336 = vadd.f32 %v132, %v335
    %v337 = vpop.f32.mrf.mxu0
    %v338 = vadd.f32 %v136, %v337
    %v339 = vpop.f32.mrf.mxu0
    %v340 = vadd.f32 %v132, %v339
    %v341 = vpop.f32.mrf.mxu0
    %v342 = vadd.f32 %v136, %v341
    %343 = vmatprep.mubr.bf16.mxu0 0
    %344 = vmatmul.mubr.bf16.gmra.mxu0 %v239
    %v345 = vpop.f32.mrf.mxu0
    %v346 = vadd.f32 %v132, %v345
    %v347 = vpop.f32.mrf.mxu0
    %v348 = vadd.f32 %v136, %v347
    %v349 = vpop.f32.mrf.mxu0
    %v350 = vadd.f32 %v132, %v349
    %v351 = vpop.f32.mrf.mxu0
    %v352 = vadd.f32 %v136, %v351
    %353 = vdwg.mxu0
    %354 = vmatprep.subr.bf16.mxu0 0
    %355 = vmatpush1.bf16.msra.mxu0 0
    %356 = vmatprep.subr.bf16.mxu0 0
    %357 = vmatpush1.bf16.msra.mxu0 0
    %358 = vmatprep.subr.bf16.mxu0 0
    %359 = vmatpush1.bf16.msra.mxu0 0
    %360 = vmatprep.subr.bf16.mxu0 0
    %361 = vmatpush1.bf16.msra.mxu0 0
    %362 = vmatprep.subr.bf16.mxu0 0
    %363 = vmatpush1.bf16.msra.mxu0 0
    %364 = vmatprep.subr.bf16.mxu0 0
    %365 = vmatpush1.bf16.msra.mxu0 0
    %366 = vmatprep.subr.bf16.mxu0 0
    %367 = vmatpush1.bf16.msra.mxu0 %v209
    %368 = vmatprep.subr.bf16.mxu0 0
    %369 = vmatpush1.bf16.msra.mxu0 %v206
    %370 = vmatprep.subr.bf16.mxu0 0
    %371 = vmatpush2.bf16.msra.mxu0 0
    %372 = vmatprep.subr.bf16.mxu0 0
    %373 = vmatpush2.bf16.msra.mxu0 0
    %374 = vmatprep.subr.bf16.mxu0 0
    %375 = vmatpush2.bf16.msra.mxu0 0
    %376 = vmatprep.subr.bf16.mxu0 0
    %377 = vmatpush2.bf16.msra.mxu0 0
    %378 = vmatprep.subr.bf16.mxu0 0
    %379 = vmatpush2.bf16.msra.mxu0 0
    %380 = vmatprep.subr.bf16.mxu0 0
    %381 = vmatpush2.bf16.msra.mxu0 0
    %382 = vmatprep.subr.bf16.mxu0 0
    %383 = vmatpush2.bf16.msra.mxu0 0
    %384 = vmatprep.subr.bf16.mxu0 0
    %385 = vmatpush2.bf16.msra.mxu0 0
    %386 = vmatprep.mubr.bf16.mxu0 0
    %387 = vmatmul.mubr.bf16.gmra.mxu0 %v218
    %v388 = vpop.f32.mrf.mxu0
    %v389 = vadd.f32 %v140, %v388
    %v390 = vpop.f32.mrf.mxu0
    %v391 = vpop.f32.mrf.mxu0
    %v392 = vadd.f32 %v140, %v391
    %v393 = vpop.f32.mrf.mxu0
    %394 = vmatprep.mubr.bf16.mxu0 0
    %395 = vmatmul.mubr.bf16.gmra.mxu0 %v221
    %v396 = vpop.f32.mrf.mxu0
    %v397 = vadd.f32 %v140, %v396
    %v398 = vpop.f32.mrf.mxu0
    %v399 = vpop.f32.mrf.mxu0
    %v400 = vadd.f32 %v140, %v399
    %v401 = vpop.f32.mrf.mxu0
    %402 = vmatprep.mubr.bf16.mxu0 0
    %403 = vmatmul.mubr.bf16.gmra.mxu0 %v224
    %v404 = vpop.f32.mrf.mxu0
    %v405 = vadd.f32 %v140, %v404
    %v406 = vpop.f32.mrf.mxu0
    %v407 = vpop.f32.mrf.mxu0
    %v408 = vadd.f32 %v140, %v407
    %v409 = vpop.f32.mrf.mxu0
    %410 = vmatprep.mubr.bf16.mxu0 0
    %411 = vmatmul.mubr.bf16.gmra.mxu0 %v227
    %v412 = vpop.f32.mrf.mxu0
    %v413 = vadd.f32 %v140, %v412
    %v414 = vpop.f32.mrf.mxu0
    %v415 = vpop.f32.mrf.mxu0
    %v416 = vadd.f32 %v140, %v415
    %v417 = vpop.f32.mrf.mxu0
    %418 = vmatprep.mubr.bf16.mxu0 0
    %419 = vmatmul.mubr.bf16.gmra.mxu0 %v230
    %v420 = vpop.f32.mrf.mxu0
    %v421 = vadd.f32 %v140, %v420
    %v422 = vpop.f32.mrf.mxu0
    %v423 = vpop.f32.mrf.mxu0
    %v424 = vadd.f32 %v140, %v423
    %v425 = vpop.f32.mrf.mxu0
    %426 = vmatprep.mubr.bf16.mxu0 0
    %427 = vmatmul.mubr.bf16.gmra.mxu0 %v233
    %v428 = vpop.f32.mrf.mxu0
    %v429 = vadd.f32 %v140, %v428
    %v430 = vpop.f32.mrf.mxu0
    %v431 = vpop.f32.mrf.mxu0
    %v432 = vadd.f32 %v140, %v431
    %v433 = vpop.f32.mrf.mxu0
    %434 = vmatprep.mubr.bf16.mxu0 0
    %435 = vmatmul.mubr.bf16.gmra.mxu0 %v236
    %v436 = vpop.f32.mrf.mxu0
    %v437 = vadd.f32 %v140, %v436
    %v438 = vpop.f32.mrf.mxu0
    %v439 = vpop.f32.mrf.mxu0
    %v440 = vadd.f32 %v140, %v439
    %v441 = vpop.f32.mrf.mxu0
    %442 = vmatprep.mubr.bf16.mxu0 0
    %443 = vmatmul.mubr.bf16.gmra.mxu0 %v239
    %v444 = vpop.f32.mrf.mxu0
    %v445 = vadd.f32 %v140, %v444
    %v446 = vpop.f32.mrf.mxu0
    %v447 = vpop.f32.mrf.mxu0
    %v448 = vadd.f32 %v140, %v447
    %v449 = vpop.f32.mrf.mxu0
    %450 = vdwg.mxu0
    %v451 = vld [vmem:[%s2] sm:$0xff]
    %v452 = vld [vmem:[%s2 + $0x8] sm:$0xf]
    %v453 = vld [vmem:[%s2 + $0xc] sm:$0xff]
    %v454 = vld [vmem:[%s2 + $0x14] sm:$0xf]
    %v455 = vld [vmem:[%s2 + $0x18] sm:$0xff]
    %v456 = vld [vmem:[%s2 + $0x20] sm:$0xf]
    %v457 = vld [vmem:[%s2 + $0x24] sm:$0xff]
    %v458 = vld [vmem:[%s2 + $0x2c] sm:$0xf]
    %v459 = vld [vmem:[%s2 + $0x30] sm:$0xff]
    %v460 = vld [vmem:[%s2 + $0x38] sm:$0xf]
    %v461 = vld [vmem:[%s2 + $0x3c] sm:$0xff]
    %v462 = vld [vmem:[%s2 + $0x44] sm:$0xf]
    %v463 = vld [vmem:[%s2 + $0x48] sm:$0xff]
    %v464 = vld [vmem:[%s2 + $0x50] sm:$0xf]
    %v465 = vld [vmem:[%s2 + $0x54] sm:$0xff]
    %v466 = vld [vmem:[%s2 + $0x5c] sm:$0xf]
    %v467 = vld [vmem:[%s2 + $0x60] sm:$0xff]
    %v468 = vld [vmem:[%s2 + $0x68] sm:$0xf]
    %v469 = vld [vmem:[%s2 + $0x6c] sm:$0xff]
    %v470 = vld [vmem:[%s2 + $0x74] sm:$0xf]
    %v471 = vld [vmem:[%s2 + $0x78] sm:$0xff]
    %v472 = vld [vmem:[%s2 + $0x80] sm:$0xf]
    %v473 = vld [vmem:[%s2 + $0x84] sm:$0xff]
    %v474 = vld [vmem:[%s2 + $0x8c] sm:$0xf]
    %v475 = vld [vmem:[%s2 + $0x90] sm:$0xff]
    %v476 = vld [vmem:[%s2 + $0x98] sm:$0xf]
    %v477 = vld [vmem:[%s2 + $0x9c] sm:$0xff]
    %v478 = vld [vmem:[%s2 + $0xa4] sm:$0xf]
    %v479 = vld [vmem:[%s2 + $0xa8] sm:$0xff]
    %v480 = vld [vmem:[%s2 + $0xb0] sm:$0xf]
    %v481 = vld [vmem:[%s2 + $0xb4] sm:$0xff]
    %v482 = vld [vmem:[%s2 + $0xbc] sm:$0xf]
    %v483 = vld [vmem:[%s4] sm:$0x7]
    %v485 = vlaneseq
    %v486 = vshrl.u32 %v485, 7
    %v487 = vsub.s32 0, %v486
    %v488 = vrot.slane %v483, %v487
    %v489 = vlaneseq
    %v490 = vshrl.u32 %v489, 7
    %v491 = vsub.s32 1, %v490
    %v492 = vrot.slane %v483, %v491
    %v493 = vlaneseq
    %v494 = vshrl.u32 %v493, 7
    %v495 = vsub.s32 2, %v494
    %v496 = vrot.slane %v483, %v495
    %v532 = vunpack.c.l.b16 %v451
    %v533 = vunpack.c.h.b16 %v451
    %v534 = vunpack.c.l.b16 %v452
    %v535 = vunpack.c.l.b16 %v453
    %v536 = vunpack.c.h.b16 %v453
    %v537 = vunpack.c.l.b16 %v454
    %v538 = vunpack.c.l.b16 %v455
    %v539 = vunpack.c.h.b16 %v455
    %v540 = vunpack.c.l.b16 %v456
    %v541 = vunpack.c.l.b16 %v457
    %v542 = vunpack.c.h.b16 %v457
    %v543 = vunpack.c.l.b16 %v458
    %v544 = vunpack.c.l.b16 %v459
    %v545 = vunpack.c.h.b16 %v459
    %v546 = vunpack.c.l.b16 %v460
    %v547 = vunpack.c.l.b16 %v461
    %v548 = vunpack.c.h.b16 %v461
    %v549 = vunpack.c.l.b16 %v462
    %v550 = vunpack.c.l.b16 %v463
    %v551 = vunpack.c.h.b16 %v463
    %v552 = vunpack.c.l.b16 %v464
    %v553 = vunpack.c.l.b16 %v465
    %v554 = vunpack.c.h.b16 %v465
    %v555 = vunpack.c.l.b16 %v466
    %v556 = vunpack.c.l.b16 %v467
    %v557 = vunpack.c.h.b16 %v467
    %v558 = vunpack.c.l.b16 %v468
    %v559 = vunpack.c.l.b16 %v469
    %v560 = vunpack.c.h.b16 %v469
    %v561 = vunpack.c.l.b16 %v470
    %v562 = vunpack.c.l.b16 %v471
    %v563 = vunpack.c.h.b16 %v471
    %v564 = vunpack.c.l.b16 %v472
    %v565 = vunpack.c.l.b16 %v473
    %v566 = vunpack.c.h.b16 %v473
    %v567 = vunpack.c.l.b16 %v474
    %v568 = vunpack.c.l.b16 %v475
    %v569 = vunpack.c.h.b16 %v475
    %v570 = vunpack.c.l.b16 %v476
    %v571 = vunpack.c.l.b16 %v477
    %v572 = vunpack.c.h.b16 %v477
    %v573 = vunpack.c.l.b16 %v478
    %v574 = vunpack.c.l.b16 %v479
    %v575 = vunpack.c.h.b16 %v479
    %v576 = vunpack.c.l.b16 %v480
    %v577 = vunpack.c.l.b16 %v481
    %v578 = vunpack.c.h.b16 %v481
    %v579 = vunpack.c.l.b16 %v482
    %v580 = vpack.c.b16 %v535, %v532
    %v581 = vpack.c.b16 %v536, %v533
    %v582 = vpack.c.b16 %v537, %v534
    %v583 = vpack.c.b16 %v541, %v538
    %v584 = vpack.c.b16 %v542, %v539
    %v585 = vpack.c.b16 %v543, %v540
    %v586 = vpack.c.b16 %v547, %v544
    %v587 = vpack.c.b16 %v548, %v545
    %v588 = vpack.c.b16 %v549, %v546
    %v589 = vpack.c.b16 %v553, %v550
    %v590 = vpack.c.b16 %v554, %v551
    %v591 = vpack.c.b16 %v555, %v552
    %v592 = vpack.c.b16 %v559, %v556
    %v593 = vpack.c.b16 %v560, %v557
    %v594 = vpack.c.b16 %v561, %v558
    %v595 = vpack.c.b16 %v565, %v562
    %v596 = vpack.c.b16 %v566, %v563
    %v597 = vpack.c.b16 %v567, %v564
    %v598 = vpack.c.b16 %v571, %v568
    %v599 = vpack.c.b16 %v572, %v569
    %v600 = vpack.c.b16 %v573, %v570
    %v601 = vpack.c.b16 %v577, %v574
    %v602 = vpack.c.b16 %v578, %v575
    %v603 = vpack.c.b16 %v579, %v576
    %628 = vmatprep.subr.bf16.mxu0 %v602
    %629 = vmatpush1.bf16.msra.mxu0 %v601
    %630 = vmatprep.subr.bf16.mxu0 %v599
    %631 = vmatpush1.bf16.msra.mxu0 %v598
    %632 = vmatprep.subr.bf16.mxu0 %v596
    %633 = vmatpush1.bf16.msra.mxu0 %v595
    %634 = vmatprep.subr.bf16.mxu0 %v593
    %635 = vmatpush1.bf16.msra.mxu0 %v592
    %636 = vmatprep.subr.bf16.mxu0 %v590
    %637 = vmatpush1.bf16.msra.mxu0 %v589
    %638 = vmatprep.subr.bf16.mxu0 %v587
    %639 = vmatpush1.bf16.msra.mxu0 %v586
    %640 = vmatprep.subr.bf16.mxu0 %v584
    %641 = vmatpush1.bf16.msra.mxu0 %v583
    %642 = vmatprep.subr.bf16.mxu0 %v581
    %643 = vmatpush1.bf16.msra.mxu0 %v580
    %644 = vmatprep.subr.bf16.mxu0 0
    %645 = vmatpush2.bf16.msra.mxu0 0
    %646 = vmatprep.subr.bf16.mxu0 0
    %647 = vmatpush2.bf16.msra.mxu0 0
    %648 = vmatprep.subr.bf16.mxu0 0
    %649 = vmatpush2.bf16.msra.mxu0 0
    %650 = vmatprep.subr.bf16.mxu0 0
    %651 = vmatpush2.bf16.msra.mxu0 0
    %652 = vmatprep.subr.bf16.mxu0 0
    %653 = vmatpush2.bf16.msra.mxu0 0
    %654 = vmatprep.subr.bf16.mxu0 0
    %655 = vmatpush2.bf16.msra.mxu0 0
    %656 = vmatprep.subr.bf16.mxu0 0
    %657 = vmatpush2.bf16.msra.mxu0 0
    %658 = vmatprep.subr.bf16.mxu0 0
    %659 = vmatpush2.bf16.msra.mxu0 0
    %660 = vmatprep.mubr.bf16.mxu0 0
    %661 = vmatmul.mubr.bf16.gmra.mxu0 0
    %v662 = vpop.f32.mrf.mxu0
    %v663 = vadd.f32 %v488, %v662
    %v664 = vpop.f32.mrf.mxu0
    %v665 = vadd.f32 %v492, %v664
    %v666 = vpop.f32.mrf.mxu0
    %v667 = vadd.f32 %v488, %v666
    %v668 = vpop.f32.mrf.mxu0
    %v669 = vadd.f32 %v492, %v668
    %670 = vdwg.mxu0
    %671 = vmatprep.subr.bf16.mxu0 0
    %672 = vmatpush1.bf16.msra.mxu0 %v603
    %673 = vmatprep.subr.bf16.mxu0 0
    %674 = vmatpush1.bf16.msra.mxu0 %v600
    %675 = vmatprep.subr.bf16.mxu0 0
    %676 = vmatpush1.bf16.msra.mxu0 %v597
    %677 = vmatprep.subr.bf16.mxu0 0
    %678 = vmatpush1.bf16.msra.mxu0 %v594
    %679 = vmatprep.subr.bf16.mxu0 0
    %680 = vmatpush1.bf16.msra.mxu0 %v591
    %681 = vmatprep.subr.bf16.mxu0 0
    %682 = vmatpush1.bf16.msra.mxu0 %v588
    %683 = vmatprep.subr.bf16.mxu0 0
    %684 = vmatpush1.bf16.msra.mxu0 %v585
    %685 = vmatprep.subr.bf16.mxu0 0
    %686 = vmatpush1.bf16.msra.mxu0 %v582
    %687 = vmatprep.subr.bf16.mxu0 0
    %688 = vmatpush2.bf16.msra.mxu0 0
    %689 = vmatprep.subr.bf16.mxu0 0
    %690 = vmatpush2.bf16.msra.mxu0 0
    %691 = vmatprep.subr.bf16.mxu0 0
    %692 = vmatpush2.bf16.msra.mxu0 0
    %693 = vmatprep.subr.bf16.mxu0 0
    %694 = vmatpush2.bf16.msra.mxu0 0
    %695 = vmatprep.subr.bf16.mxu0 0
    %696 = vmatpush2.bf16.msra.mxu0 0
    %697 = vmatprep.subr.bf16.mxu0 0
    %698 = vmatpush2.bf16.msra.mxu0 0
    %699 = vmatprep.subr.bf16.mxu0 0
    %700 = vmatpush2.bf16.msra.mxu0 0
    %701 = vmatprep.subr.bf16.mxu0 0
    %702 = vmatpush2.bf16.msra.mxu0 0
    %703 = vmatprep.mubr.bf16.mxu0 0
    %704 = vmatmul.mubr.bf16.gmra.mxu0 0
    %v705 = vpop.f32.mrf.mxu0
    %v706 = vadd.f32 %v496, %v705
    %v707 = vpop.f32.mrf.mxu0
    %v708 = vpop.f32.mrf.mxu0
    %v709 = vadd.f32 %v496, %v708
    %v710 = vpop.f32.mrf.mxu0
    %711 = vdwg.mxu0
    %v712 = vadd.f32 %v276, %v663
    %v713 = vadd.f32 %v280, %v667
    %v714 = vxor.u32 %v712, 2147483648
    %v715 = vxor.u32 %v713, 2147483648
    %v716 = vmul.f32 %v714, 1.442695
    %v717 = vpow.pop %v716
    %v718 = vmul.f32 %v715, 1.442695
    %v719 = vpow.pop %v718
    %v720 = vadd.f32 %v717, 1.0
    %v721 = vadd.f32 %v719, 1.0
    %v722 = vrcp.pop %v720
    %v723 = vmul.f32 1.0, %v722
    %v724 = vrcp.pop %v721
    %v725 = vmul.f32 1.0, %v724
    %v726 = vadd.f32 %v278, %v665
    %v727 = vadd.f32 %v282, %v669
    %v728 = vxor.u32 %v726, 2147483648
    %v729 = vxor.u32 %v727, 2147483648
    %v730 = vmul.f32 %v728, 1.442695
    %v731 = vpow.pop %v730
    %v732 = vmul.f32 %v729, 1.442695
    %v733 = vpow.pop %v732
    %v734 = vadd.f32 %v731, 1.0
    %v735 = vadd.f32 %v733, 1.0
    %v736 = vrcp.pop %v734
    %v737 = vmul.f32 1.0, %v736
    %v738 = vrcp.pop %v735
    %v739 = vmul.f32 1.0, %v738
    %v740 = vmul.f32 %v723, %v706
    %v741 = vmul.f32 %v725, %v709
    %v742 = vadd.f32 %v389, %v740
    %v743 = vadd.f32 %v392, %v741
    %v744 = vtanh.pop %v742
    %v745 = vtanh.pop %v743
    %v746 = vsub.f32 1.0, %v737
    %v747 = vsub.f32 1.0, %v739
    %v748 = vmul.f32 %v746, %v744
    %v749 = vmul.f32 %v747, %v745
    %v750 = vmul.f32 %v737, 0.0
    %v751 = vmul.f32 %v739, 0.0
    %v752 = vadd.f32 %v748, %v750
    %v753 = vadd.f32 %v749, %v751
    %754 = vst [vmem:[#allocation2] sm:$0xff] %v752
    %755 = vst [vmem:[#allocation2 + $0x8] sm:$0xff] %v753
    %v756 = vpack.c.bf16 %v753, %v752
    %757 = vmatprep.subr.bf16.mxu0 %v602
    %758 = vmatpush1.bf16.msra.mxu0 %v601
    %759 = vmatprep.subr.bf16.mxu0 %v599
    %760 = vmatpush1.bf16.msra.mxu0 %v598
    %761 = vmatprep.subr.bf16.mxu0 %v596
    %762 = vmatpush1.bf16.msra.mxu0 %v595
    %763 = vmatprep.subr.bf16.mxu0 %v593
    %764 = vmatpush1.bf16.msra.mxu0 %v592
    %765 = vmatprep.subr.bf16.mxu0 %v590
    %766 = vmatpush1.bf16.msra.mxu0 %v589
    %767 = vmatprep.subr.bf16.mxu0 %v587
    %768 = vmatpush1.bf16.msra.mxu0 %v586
    %769 = vmatprep.subr.bf16.mxu0 %v584
    %770 = vmatpush1.bf16.msra.mxu0 %v583
    %771 = vmatprep.subr.bf16.mxu0 %v581
    %772 = vmatpush1.bf16.msra.mxu0 %v580
    %773 = vmatprep.subr.bf16.mxu0 0
    %774 = vmatpush2.bf16.msra.mxu0 0
    %775 = vmatprep.subr.bf16.mxu0 0
    %776 = vmatpush2.bf16.msra.mxu0 0
    %777 = vmatprep.subr.bf16.mxu0 0
    %778 = vmatpush2.bf16.msra.mxu0 0
    %779 = vmatprep.subr.bf16.mxu0 0
    %780 = vmatpush2.bf16.msra.mxu0 0
    %781 = vmatprep.subr.bf16.mxu0 0
    %782 = vmatpush2.bf16.msra.mxu0 0
    %783 = vmatprep.subr.bf16.mxu0 0
    %784 = vmatpush2.bf16.msra.mxu0 0
    %785 = vmatprep.subr.bf16.mxu0 0
    %786 = vmatpush2.bf16.msra.mxu0 0
    %787 = vmatprep.subr.bf16.mxu0 0
    %788 = vmatpush2.bf16.msra.mxu0 0
    %789 = vmatprep.mubr.bf16.mxu0 0
    %790 = vmatmul.mubr.bf16.gmra.mxu0 %v756
    %v791 = vpop.f32.mrf.mxu0
    %v792 = vadd.f32 %v488, %v791
    %v793 = vpop.f32.mrf.mxu0
    %v794 = vadd.f32 %v492, %v793
    %v795 = vpop.f32.mrf.mxu0
    %v796 = vadd.f32 %v488, %v795
    %v797 = vpop.f32.mrf.mxu0
    %v798 = vadd.f32 %v492, %v797
    %799 = vdwg.mxu0
    %800 = vmatprep.subr.bf16.mxu0 0
    %801 = vmatpush1.bf16.msra.mxu0 %v603
    %802 = vmatprep.subr.bf16.mxu0 0
    %803 = vmatpush1.bf16.msra.mxu0 %v600
    %804 = vmatprep.subr.bf16.mxu0 0
    %805 = vmatpush1.bf16.msra.mxu0 %v597
    %806 = vmatprep.subr.bf16.mxu0 0
    %807 = vmatpush1.bf16.msra.mxu0 %v594
    %808 = vmatprep.subr.bf16.mxu0 0
    %809 = vmatpush1.bf16.msra.mxu0 %v591
    %810 = vmatprep.subr.bf16.mxu0 0
    %811 = vmatpush1.bf16.msra.mxu0 %v588
    %812 = vmatprep.subr.bf16.mxu0 0
    %813 = vmatpush1.bf16.msra.mxu0 %v585
    %814 = vmatprep.subr.bf16.mxu0 0
    %815 = vmatpush1.bf16.msra.mxu0 %v582
    %816 = vmatprep.subr.bf16.mxu0 0
    %817 = vmatpush2.bf16.msra.mxu0 0
    %818 = vmatprep.subr.bf16.mxu0 0
    %819 = vmatpush2.bf16.msra.mxu0 0
    %820 = vmatprep.subr.bf16.mxu0 0
    %821 = vmatpush2.bf16.msra.mxu0 0
    %822 = vmatprep.subr.bf16.mxu0 0
    %823 = vmatpush2.bf16.msra.mxu0 0
    %824 = vmatprep.subr.bf16.mxu0 0
    %825 = vmatpush2.bf16.msra.mxu0 0
    %826 = vmatprep.subr.bf16.mxu0 0
    %827 = vmatpush2.bf16.msra.mxu0 0
    %828 = vmatprep.subr.bf16.mxu0 0
    %829 = vmatpush2.bf16.msra.mxu0 0
    %830 = vmatprep.subr.bf16.mxu0 0
    %831 = vmatpush2.bf16.msra.mxu0 0
    %832 = vmatprep.mubr.bf16.mxu0 0
    %833 = vmatmul.mubr.bf16.gmra.mxu0 %v756
    %v834 = vpop.f32.mrf.mxu0
    %v835 = vadd.f32 %v496, %v834
    %v836 = vpop.f32.mrf.mxu0
    %v837 = vpop.f32.mrf.mxu0
    %v838 = vadd.f32 %v496, %v837
    %v839 = vpop.f32.mrf.mxu0
    %840 = vdwg.mxu0
    %v841 = vadd.f32 %v286, %v792
    %v842 = vadd.f32 %v290, %v796
    %v843 = vxor.u32 %v841, 2147483648
    %v844 = vxor.u32 %v842, 2147483648
    %v845 = vmul.f32 %v843, 1.442695
    %v846 = vpow.pop %v845
    %v847 = vmul.f32 %v844, 1.442695
    %v848 = vpow.pop %v847
    %v849 = vadd.f32 %v846, 1.0
    %v850 = vadd.f32 %v848, 1.0
    %v851 = vrcp.pop %v849
    %v852 = vmul.f32 1.0, %v851
    %v853 = vrcp.pop %v850
    %v854 = vmul.f32 1.0, %v853
    %v855 = vadd.f32 %v288, %v794
    %v856 = vadd.f32 %v292, %v798
    %v857 = vxor.u32 %v855, 2147483648
    %v858 = vxor.u32 %v856, 2147483648
    %v859 = vmul.f32 %v857, 1.442695
    %v860 = vpow.pop %v859
    %v861 = vmul.f32 %v858, 1.442695
    %v862 = vpow.pop %v861
    %v863 = vadd.f32 %v860, 1.0
    %v864 = vadd.f32 %v862, 1.0
    %v865 = vrcp.pop %v863
    %v866 = vmul.f32 1.0, %v865
    %v867 = vrcp.pop %v864
    %v868 = vmul.f32 1.0, %v867
    %v869 = vmul.f32 %v852, %v835
    %v870 = vmul.f32 %v854, %v838
    %v871 = vadd.f32 %v397, %v869
    %v872 = vadd.f32 %v400, %v870
    %v873 = vtanh.pop %v871
    %v874 = vtanh.pop %v872
    %v875 = vsub.f32 1.0, %v866
    %v876 = vsub.f32 1.0, %v868
    %v877 = vmul.f32 %v875, %v873
    %v878 = vmul.f32 %v876, %v874
    %v879 = vmul.f32 %v866, %v752
    %v880 = vmul.f32 %v868, %v753
    %v881 = vadd.f32 %v877, %v879
    %v882 = vadd.f32 %v878, %v880
    %883 = vst [vmem:[#allocation2 + $0x10] sm:$0xff] %v881
    %884 = vst [vmem:[#allocation2 + $0x18] sm:$0xff] %v882
    %v885 = vpack.c.bf16 %v882, %v881
    %886 = vmatprep.subr.bf16.mxu0 %v602
    %887 = vmatpush1.bf16.msra.mxu0 %v601
    %888 = vmatprep.subr.bf16.mxu0 %v599
    %889 = vmatpush1.bf16.msra.mxu0 %v598
    %890 = vmatprep.subr.bf16.mxu0 %v596
    %891 = vmatpush1.bf16.msra.mxu0 %v595
    %892 = vmatprep.subr.bf16.mxu0 %v593
    %893 = vmatpush1.bf16.msra.mxu0 %v592
    %894 = vmatprep.subr.bf16.mxu0 %v590
    %895 = vmatpush1.bf16.msra.mxu0 %v589
    %896 = vmatprep.subr.bf16.mxu0 %v587
    %897 = vmatpush1.bf16.msra.mxu0 %v586
    %898 = vmatprep.subr.bf16.mxu0 %v584
    %899 = vmatpush1.bf16.msra.mxu0 %v583
    %900 = vmatprep.subr.bf16.mxu0 %v581
    %901 = vmatpush1.bf16.msra.mxu0 %v580
    %902 = vmatprep.subr.bf16.mxu0 0
    %903 = vmatpush2.bf16.msra.mxu0 0
    %904 = vmatprep.subr.bf16.mxu0 0
    %905 = vmatpush2.bf16.msra.mxu0 0
    %906 = vmatprep.subr.bf16.mxu0 0
    %907 = vmatpush2.bf16.msra.mxu0 0
    %908 = vmatprep.subr.bf16.mxu0 0
    %909 = vmatpush2.bf16.msra.mxu0 0
    %910 = vmatprep.subr.bf16.mxu0 0
    %911 = vmatpush2.bf16.msra.mxu0 0
    %912 = vmatprep.subr.bf16.mxu0 0
    %913 = vmatpush2.bf16.msra.mxu0 0
    %914 = vmatprep.subr.bf16.mxu0 0
    %915 = vmatpush2.bf16.msra.mxu0 0
    %916 = vmatprep.subr.bf16.mxu0 0
    %917 = vmatpush2.bf16.msra.mxu0 0
    %918 = vmatprep.mubr.bf16.mxu0 0
    %919 = vmatmul.mubr.bf16.gmra.mxu0 %v885
    %v920 = vpop.f32.mrf.mxu0
    %v921 = vadd.f32 %v488, %v920
    %v922 = vpop.f32.mrf.mxu0
    %v923 = vadd.f32 %v492, %v922
    %v924 = vpop.f32.mrf.mxu0
    %v925 = vadd.f32 %v488, %v924
    %v926 = vpop.f32.mrf.mxu0
    %v927 = vadd.f32 %v492, %v926
    %928 = vdwg.mxu0
    %929 = vmatprep.subr.bf16.mxu0 0
    %930 = vmatpush1.bf16.msra.mxu0 %v603
    %931 = vmatprep.subr.bf16.mxu0 0
    %932 = vmatpush1.bf16.msra.mxu0 %v600
    %933 = vmatprep.subr.bf16.mxu0 0
    %934 = vmatpush1.bf16.msra.mxu0 %v597
    %935 = vmatprep.subr.bf16.mxu0 0
    %936 = vmatpush1.bf16.msra.mxu0 %v594
    %937 = vmatprep.subr.bf16.mxu0 0
    %938 = vmatpush1.bf16.msra.mxu0 %v591
    %939 = vmatprep.subr.bf16.mxu0 0
    %940 = vmatpush1.bf16.msra.mxu0 %v588
    %941 = vmatprep.subr.bf16.mxu0 0
    %942 = vmatpush1.bf16.msra.mxu0 %v585
    %943 = vmatprep.subr.bf16.mxu0 0
    %944 = vmatpush1.bf16.msra.mxu0 %v582
    %945 = vmatprep.subr.bf16.mxu0 0
    %946 = vmatpush2.bf16.msra.mxu0 0
    %947 = vmatprep.subr.bf16.mxu0 0
    %948 = vmatpush2.bf16.msra.mxu0 0
    %949 = vmatprep.subr.bf16.mxu0 0
    %950 = vmatpush2.bf16.msra.mxu0 0
    %951 = vmatprep.subr.bf16.mxu0 0
    %952 = vmatpush2.bf16.msra.mxu0 0
    %953 = vmatprep.subr.bf16.mxu0 0
    %954 = vmatpush2.bf16.msra.mxu0 0
    %955 = vmatprep.subr.bf16.mxu0 0
    %956 = vmatpush2.bf16.msra.mxu0 0
    %957 = vmatprep.subr.bf16.mxu0 0
    %958 = vmatpush2.bf16.msra.mxu0 0
    %959 = vmatprep.subr.bf16.mxu0 0
    %960 = vmatpush2.bf16.msra.mxu0 0
    %961 = vmatprep.mubr.bf16.mxu0 0
    %962 = vmatmul.mubr.bf16.gmra.mxu0 %v885
    %v963 = vpop.f32.mrf.mxu0
    %v964 = vadd.f32 %v496, %v963
    %v965 = vpop.f32.mrf.mxu0
    %v966 = vpop.f32.mrf.mxu0
    %v967 = vadd.f32 %v496, %v966
    %v968 = vpop.f32.mrf.mxu0
    %969 = vdwg.mxu0
    %v970 = vadd.f32 %v296, %v921
    %v971 = vadd.f32 %v300, %v925
    %v972 = vxor.u32 %v970, 2147483648
    %v973 = vxor.u32 %v971, 2147483648
    %v974 = vmul.f32 %v972, 1.442695
    %v975 = vpow.pop %v974
    %v976 = vmul.f32 %v973, 1.442695
    %v977 = vpow.pop %v976
    %v978 = vadd.f32 %v975, 1.0
    %v979 = vadd.f32 %v977, 1.0
    %v980 = vrcp.pop %v978
    %v981 = vmul.f32 1.0, %v980
    %v982 = vrcp.pop %v979
    %v983 = vmul.f32 1.0, %v982
    %v984 = vadd.f32 %v298, %v923
    %v985 = vadd.f32 %v302, %v927
    %v986 = vxor.u32 %v984, 2147483648
    %v987 = vxor.u32 %v985, 2147483648
    %v988 = vmul.f32 %v986, 1.442695
    %v989 = vpow.pop %v988
    %v990 = vmul.f32 %v987, 1.442695
    %v991 = vpow.pop %v990
    %v992 = vadd.f32 %v989, 1.0
    %v993 = vadd.f32 %v991, 1.0
    %v994 = vrcp.pop %v992
    %v995 = vmul.f32 1.0, %v994
    %v996 = vrcp.pop %v993
    %v997 = vmul.f32 1.0, %v996
    %v998 = vmul.f32 %v981, %v964
    %v999 = vmul.f32 %v983, %v967
    %v1000 = vadd.f32 %v405, %v998
    %v1001 = vadd.f32 %v408, %v999
    %v1002 = vtanh.pop %v1000
    %v1003 = vtanh.pop %v1001
    %v1004 = vsub.f32 1.0, %v995
    %v1005 = vsub.f32 1.0, %v997
    %v1006 = vmul.f32 %v1004, %v1002
    %v1007 = vmul.f32 %v1005, %v1003
    %v1008 = vmul.f32 %v995, %v881
    %v1009 = vmul.f32 %v997, %v882
    %v1010 = vadd.f32 %v1006, %v1008
    %v1011 = vadd.f32 %v1007, %v1009
    %1012 = vst [vmem:[#allocation2 + $0x20] sm:$0xff] %v1010
    %1013 = vst [vmem:[#allocation2 + $0x28] sm:$0xff] %v1011
    %v1014 = vpack.c.bf16 %v1011, %v1010
    %1015 = vmatprep.subr.bf16.mxu0 %v602
    %1016 = vmatpush1.bf16.msra.mxu0 %v601
    %1017 = vmatprep.subr.bf16.mxu0 %v599
    %1018 = vmatpush1.bf16.msra.mxu0 %v598
    %1019 = vmatprep.subr.bf16.mxu0 %v596
    %1020 = vmatpush1.bf16.msra.mxu0 %v595
    %1021 = vmatprep.subr.bf16.mxu0 %v593
    %1022 = vmatpush1.bf16.msra.mxu0 %v592
    %1023 = vmatprep.subr.bf16.mxu0 %v590
    %1024 = vmatpush1.bf16.msra.mxu0 %v589
    %1025 = vmatprep.subr.bf16.mxu0 %v587
    %1026 = vmatpush1.bf16.msra.mxu0 %v586
    %1027 = vmatprep.subr.bf16.mxu0 %v584
    %1028 = vmatpush1.bf16.msra.mxu0 %v583
    %1029 = vmatprep.subr.bf16.mxu0 %v581
    %1030 = vmatpush1.bf16.msra.mxu0 %v580
    %1031 = vmatprep.subr.bf16.mxu0 0
    %1032 = vmatpush2.bf16.msra.mxu0 0
    %1033 = vmatprep.subr.bf16.mxu0 0
    %1034 = vmatpush2.bf16.msra.mxu0 0
    %1035 = vmatprep.subr.bf16.mxu0 0
    %1036 = vmatpush2.bf16.msra.mxu0 0
    %1037 = vmatprep.subr.bf16.mxu0 0
    %1038 = vmatpush2.bf16.msra.mxu0 0
    %1039 = vmatprep.subr.bf16.mxu0 0
    %1040 = vmatpush2.bf16.msra.mxu0 0
    %1041 = vmatprep.subr.bf16.mxu0 0
    %1042 = vmatpush2.bf16.msra.mxu0 0
    %1043 = vmatprep.subr.bf16.mxu0 0
    %1044 = vmatpush2.bf16.msra.mxu0 0
    %1045 = vmatprep.subr.bf16.mxu0 0
    %1046 = vmatpush2.bf16.msra.mxu0 0
    %1047 = vmatprep.mubr.bf16.mxu0 0
    %1048 = vmatmul.mubr.bf16.gmra.mxu0 %v1014
    %v1049 = vpop.f32.mrf.mxu0
    %v1050 = vadd.f32 %v488, %v1049
    %v1051 = vpop.f32.mrf.mxu0
    %v1052 = vadd.f32 %v492, %v1051
    %v1053 = vpop.f32.mrf.mxu0
    %v1054 = vadd.f32 %v488, %v1053
    %v1055 = vpop.f32.mrf.mxu0
    %v1056 = vadd.f32 %v492, %v1055
    %1057 = vdwg.mxu0
    %1058 = vmatprep.subr.bf16.mxu0 0
    %1059 = vmatpush1.bf16.msra.mxu0 %v603
    %1060 = vmatprep.subr.bf16.mxu0 0
    %1061 = vmatpush1.bf16.msra.mxu0 %v600
    %1062 = vmatprep.subr.bf16.mxu0 0
    %1063 = vmatpush1.bf16.msra.mxu0 %v597
    %1064 = vmatprep.subr.bf16.mxu0 0
    %1065 = vmatpush1.bf16.msra.mxu0 %v594
    %1066 = vmatprep.subr.bf16.mxu0 0
    %1067 = vmatpush1.bf16.msra.mxu0 %v591
    %1068 = vmatprep.subr.bf16.mxu0 0
    %1069 = vmatpush1.bf16.msra.mxu0 %v588
    %1070 = vmatprep.subr.bf16.mxu0 0
    %1071 = vmatpush1.bf16.msra.mxu0 %v585
    %1072 = vmatprep.subr.bf16.mxu0 0
    %1073 = vmatpush1.bf16.msra.mxu0 %v582
    %1074 = vmatprep.subr.bf16.mxu0 0
    %1075 = vmatpush2.bf16.msra.mxu0 0
    %1076 = vmatprep.subr.bf16.mxu0 0
    %1077 = vmatpush2.bf16.msra.mxu0 0
    %1078 = vmatprep.subr.bf16.mxu0 0
    %1079 = vmatpush2.bf16.msra.mxu0 0
    %1080 = vmatprep.subr.bf16.mxu0 0
    %1081 = vmatpush2.bf16.msra.mxu0 0
    %1082 = vmatprep.subr.bf16.mxu0 0
    %1083 = vmatpush2.bf16.msra.mxu0 0
    %1084 = vmatprep.subr.bf16.mxu0 0
    %1085 = vmatpush2.bf16.msra.mxu0 0
    %1086 = vmatprep.subr.bf16.mxu0 0
    %1087 = vmatpush2.bf16.msra.mxu0 0
    %1088 = vmatprep.subr.bf16.mxu0 0
    %1089 = vmatpush2.bf16.msra.mxu0 0
    %1090 = vmatprep.mubr.bf16.mxu0 0
    %1091 = vmatmul.mubr.bf16.gmra.mxu0 %v1014
    %v1092 = vpop.f32.mrf.mxu0
    %v1093 = vadd.f32 %v496, %v1092
    %v1094 = vpop.f32.mrf.mxu0
    %v1095 = vpop.f32.mrf.mxu0
    %v1096 = vadd.f32 %v496, %v1095
    %v1097 = vpop.f32.mrf.mxu0
    %1098 = vdwg.mxu0
    %v1099 = vadd.f32 %v306, %v1050
    %v1100 = vadd.f32 %v310, %v1054
    %v1101 = vxor.u32 %v1099, 2147483648
    %v1102 = vxor.u32 %v1100, 2147483648
    %v1103 = vmul.f32 %v1101, 1.442695
    %v1104 = vpow.pop %v1103
    %v1105 = vmul.f32 %v1102, 1.442695
    %v1106 = vpow.pop %v1105
    %v1107 = vadd.f32 %v1104, 1.0
    %v1108 = vadd.f32 %v1106, 1.0
    %v1109 = vrcp.pop %v1107
    %v1110 = vmul.f32 1.0, %v1109
    %v1111 = vrcp.pop %v1108
    %v1112 = vmul.f32 1.0, %v1111
    %v1113 = vadd.f32 %v308, %v1052
    %v1114 = vadd.f32 %v312, %v1056
    %v1115 = vxor.u32 %v1113, 2147483648
    %v1116 = vxor.u32 %v1114, 2147483648
    %v1117 = vmul.f32 %v1115, 1.442695
    %v1118 = vpow.pop %v1117
    %v1119 = vmul.f32 %v1116, 1.442695
    %v1120 = vpow.pop %v1119
    %v1121 = vadd.f32 %v1118, 1.0
    %v1122 = vadd.f32 %v1120, 1.0
    %v1123 = vrcp.pop %v1121
    %v1124 = vmul.f32 1.0, %v1123
    %v1125 = vrcp.pop %v1122
    %v1126 = vmul.f32 1.0, %v1125
    %v1127 = vmul.f32 %v1110, %v1093
    %v1128 = vmul.f32 %v1112, %v1096
    %v1129 = vadd.f32 %v413, %v1127
    %v1130 = vadd.f32 %v416, %v1128
    %v1131 = vtanh.pop %v1129
    %v1132 = vtanh.pop %v1130
    %v1133 = vsub.f32 1.0, %v1124
    %v1134 = vsub.f32 1.0, %v1126
    %v1135 = vmul.f32 %v1133, %v1131
    %v1136 = vmul.f32 %v1134, %v1132
    %v1137 = vmul.f32 %v1124, %v1010
    %v1138 = vmul.f32 %v1126, %v1011
    %v1139 = vadd.f32 %v1135, %v1137
    %v1140 = vadd.f32 %v1136, %v1138
    %1141 = vst [vmem:[#allocation2 + $0x30] sm:$0xff] %v1139
    %1142 = vst [vmem:[#allocation2 + $0x38] sm:$0xff] %v1140
    %v1143 = vpack.c.bf16 %v1140, %v1139
    %1144 = vmatprep.subr.bf16.mxu0 %v602
    %1145 = vmatpush1.bf16.msra.mxu0 %v601
    %1146 = vmatprep.subr.bf16.mxu0 %v599
    %1147 = vmatpush1.bf16.msra.mxu0 %v598
    %1148 = vmatprep.subr.bf16.mxu0 %v596
    %1149 = vmatpush1.bf16.msra.mxu0 %v595
    %1150 = vmatprep.subr.bf16.mxu0 %v593
    %1151 = vmatpush1.bf16.msra.mxu0 %v592
    %1152 = vmatprep.subr.bf16.mxu0 %v590
    %1153 = vmatpush1.bf16.msra.mxu0 %v589
    %1154 = vmatprep.subr.bf16.mxu0 %v587
    %1155 = vmatpush1.bf16.msra.mxu0 %v586
    %1156 = vmatprep.subr.bf16.mxu0 %v584
    %1157 = vmatpush1.bf16.msra.mxu0 %v583
    %1158 = vmatprep.subr.bf16.mxu0 %v581
    %1159 = vmatpush1.bf16.msra.mxu0 %v580
    %1160 = vmatprep.subr.bf16.mxu0 0
    %1161 = vmatpush2.bf16.msra.mxu0 0
    %1162 = vmatprep.subr.bf16.mxu0 0
    %1163 = vmatpush2.bf16.msra.mxu0 0
    %1164 = vmatprep.subr.bf16.mxu0 0
    %1165 = vmatpush2.bf16.msra.mxu0 0
    %1166 = vmatprep.subr.bf16.mxu0 0
    %1167 = vmatpush2.bf16.msra.mxu0 0
    %1168 = vmatprep.subr.bf16.mxu0 0
    %1169 = vmatpush2.bf16.msra.mxu0 0
    %1170 = vmatprep.subr.bf16.mxu0 0
    %1171 = vmatpush2.bf16.msra.mxu0 0
    %1172 = vmatprep.subr.bf16.mxu0 0
    %1173 = vmatpush2.bf16.msra.mxu0 0
    %1174 = vmatprep.subr.bf16.mxu0 0
    %1175 = vmatpush2.bf16.msra.mxu0 0
    %1176 = vmatprep.mubr.bf16.mxu0 0
    %1177 = vmatmul.mubr.bf16.gmra.mxu0 %v1143
    %v1178 = vpop.f32.mrf.mxu0
    %v1179 = vadd.f32 %v488, %v1178
    %v1180 = vpop.f32.mrf.mxu0
    %v1181 = vadd.f32 %v492, %v1180
    %v1182 = vpop.f32.mrf.mxu0
    %v1183 = vadd.f32 %v488, %v1182
    %v1184 = vpop.f32.mrf.mxu0
    %v1185 = vadd.f32 %v492, %v1184
    %1186 = vdwg.mxu0
    %1187 = vmatprep.subr.bf16.mxu0 0
    %1188 = vmatpush1.bf16.msra.mxu0 %v603
    %1189 = vmatprep.subr.bf16.mxu0 0
    %1190 = vmatpush1.bf16.msra.mxu0 %v600
    %1191 = vmatprep.subr.bf16.mxu0 0
    %1192 = vmatpush1.bf16.msra.mxu0 %v597
    %1193 = vmatprep.subr.bf16.mxu0 0
    %1194 = vmatpush1.bf16.msra.mxu0 %v594
    %1195 = vmatprep.subr.bf16.mxu0 0
    %1196 = vmatpush1.bf16.msra.mxu0 %v591
    %1197 = vmatprep.subr.bf16.mxu0 0
    %1198 = vmatpush1.bf16.msra.mxu0 %v588
    %1199 = vmatprep.subr.bf16.mxu0 0
    %1200 = vmatpush1.bf16.msra.mxu0 %v585
    %1201 = vmatprep.subr.bf16.mxu0 0
    %1202 = vmatpush1.bf16.msra.mxu0 %v582
    %1203 = vmatprep.subr.bf16.mxu0 0
    %1204 = vmatpush2.bf16.msra.mxu0 0
    %1205 = vmatprep.subr.bf16.mxu0 0
    %1206 = vmatpush2.bf16.msra.mxu0 0
    %1207 = vmatprep.subr.bf16.mxu0 0
    %1208 = vmatpush2.bf16.msra.mxu0 0
    %1209 = vmatprep.subr.bf16.mxu0 0
    %1210 = vmatpush2.bf16.msra.mxu0 0
    %1211 = vmatprep.subr.bf16.mxu0 0
    %1212 = vmatpush2.bf16.msra.mxu0 0
    %1213 = vmatprep.subr.bf16.mxu0 0
    %1214 = vmatpush2.bf16.msra.mxu0 0
    %1215 = vmatprep.subr.bf16.mxu0 0
    %1216 = vmatpush2.bf16.msra.mxu0 0
    %1217 = vmatprep.subr.bf16.mxu0 0
    %1218 = vmatpush2.bf16.msra.mxu0 0
    %1219 = vmatprep.mubr.bf16.mxu0 0
    %1220 = vmatmul.mubr.bf16.gmra.mxu0 %v1143
    %v1221 = vpop.f32.mrf.mxu0
    %v1222 = vadd.f32 %v496, %v1221
    %v1223 = vpop.f32.mrf.mxu0
    %v1224 = vpop.f32.mrf.mxu0
    %v1225 = vadd.f32 %v496, %v1224
    %v1226 = vpop.f32.mrf.mxu0
    %1227 = vdwg.mxu0
    %v1228 = vadd.f32 %v316, %v1179
    %v1229 = vadd.f32 %v320, %v1183
    %v1230 = vxor.u32 %v1228, 2147483648
    %v1231 = vxor.u32 %v1229, 2147483648
    %v1232 = vmul.f32 %v1230, 1.442695
    %v1233 = vpow.pop %v1232
    %v1234 = vmul.f32 %v1231, 1.442695
    %v1235 = vpow.pop %v1234
    %v1236 = vadd.f32 %v1233, 1.0
    %v1237 = vadd.f32 %v1235, 1.0
    %v1238 = vrcp.pop %v1236
    %v1239 = vmul.f32 1.0, %v1238
    %v1240 = vrcp.pop %v1237
    %v1241 = vmul.f32 1.0, %v1240
    %v1242 = vadd.f32 %v318, %v1181
    %v1243 = vadd.f32 %v322, %v1185
    %v1244 = vxor.u32 %v1242, 2147483648
    %v1245 = vxor.u32 %v1243, 2147483648
    %v1246 = vmul.f32 %v1244, 1.442695
    %v1247 = vpow.pop %v1246
    %v1248 = vmul.f32 %v1245, 1.442695
    %v1249 = vpow.pop %v1248
    %v1250 = vadd.f32 %v1247, 1.0
    %v1251 = vadd.f32 %v1249, 1.0
    %v1252 = vrcp.pop %v1250
    %v1253 = vmul.f32 1.0, %v1252
    %v1254 = vrcp.pop %v1251
    %v1255 = vmul.f32 1.0, %v1254
    %v1256 = vmul.f32 %v1239, %v1222
    %v1257 = vmul.f32 %v1241, %v1225
    %v1258 = vadd.f32 %v421, %v1256
    %v1259 = vadd.f32 %v424, %v1257
    %v1260 = vtanh.pop %v1258
    %v1261 = vtanh.pop %v1259
    %v1262 = vsub.f32 1.0, %v1253
    %v1263 = vsub.f32 1.0, %v1255
    %v1264 = vmul.f32 %v1262, %v1260
    %v1265 = vmul.f32 %v1263, %v1261
    %v1266 = vmul.f32 %v1253, %v1139
    %v1267 = vmul.f32 %v1255, %v1140
    %v1268 = vadd.f32 %v1264, %v1266
    %v1269 = vadd.f32 %v1265, %v1267
    %1270 = vst [vmem:[#allocation2 + $0x40] sm:$0xff] %v1268
    %1271 = vst [vmem:[#allocation2 + $0x48] sm:$0xff] %v1269
    %v1272 = vpack.c.bf16 %v1269, %v1268
    %1273 = vmatprep.subr.bf16.mxu0 %v602
    %1274 = vmatpush1.bf16.msra.mxu0 %v601
    %1275 = vmatprep.subr.bf16.mxu0 %v599
    %1276 = vmatpush1.bf16.msra.mxu0 %v598
    %1277 = vmatprep.subr.bf16.mxu0 %v596
    %1278 = vmatpush1.bf16.msra.mxu0 %v595
    %1279 = vmatprep.subr.bf16.mxu0 %v593
    %1280 = vmatpush1.bf16.msra.mxu0 %v592
    %1281 = vmatprep.subr.bf16.mxu0 %v590
    %1282 = vmatpush1.bf16.msra.mxu0 %v589
    %1283 = vmatprep.subr.bf16.mxu0 %v587
    %1284 = vmatpush1.bf16.msra.mxu0 %v586
    %1285 = vmatprep.subr.bf16.mxu0 %v584
    %1286 = vmatpush1.bf16.msra.mxu0 %v583
    %1287 = vmatprep.subr.bf16.mxu0 %v581
    %1288 = vmatpush1.bf16.msra.mxu0 %v580
    %1289 = vmatprep.subr.bf16.mxu0 0
    %1290 = vmatpush2.bf16.msra.mxu0 0
    %1291 = vmatprep.subr.bf16.mxu0 0
    %1292 = vmatpush2.bf16.msra.mxu0 0
    %1293 = vmatprep.subr.bf16.mxu0 0
    %1294 = vmatpush2.bf16.msra.mxu0 0
    %1295 = vmatprep.subr.bf16.mxu0 0
    %1296 = vmatpush2.bf16.msra.mxu0 0
    %1297 = vmatprep.subr.bf16.mxu0 0
    %1298 = vmatpush2.bf16.msra.mxu0 0
    %1299 = vmatprep.subr.bf16.mxu0 0
    %1300 = vmatpush2.bf16.msra.mxu0 0
    %1301 = vmatprep.subr.bf16.mxu0 0
    %1302 = vmatpush2.bf16.msra.mxu0 0
    %1303 = vmatprep.subr.bf16.mxu0 0
    %1304 = vmatpush2.bf16.msra.mxu0 0
    %1305 = vmatprep.mubr.bf16.mxu0 0
    %1306 = vmatmul.mubr.bf16.gmra.mxu0 %v1272
    %v1307 = vpop.f32.mrf.mxu0
    %v1308 = vadd.f32 %v488, %v1307
    %v1309 = vpop.f32.mrf.mxu0
    %v1310 = vadd.f32 %v492, %v1309
    %v1311 = vpop.f32.mrf.mxu0
    %v1312 = vadd.f32 %v488, %v1311
    %v1313 = vpop.f32.mrf.mxu0
    %v1314 = vadd.f32 %v492, %v1313
    %1315 = vdwg.mxu0
    %1316 = vmatprep.subr.bf16.mxu0 0
    %1317 = vmatpush1.bf16.msra.mxu0 %v603
    %1318 = vmatprep.subr.bf16.mxu0 0
    %1319 = vmatpush1.bf16.msra.mxu0 %v600
    %1320 = vmatprep.subr.bf16.mxu0 0
    %1321 = vmatpush1.bf16.msra.mxu0 %v597
    %1322 = vmatprep.subr.bf16.mxu0 0
    %1323 = vmatpush1.bf16.msra.mxu0 %v594
    %1324 = vmatprep.subr.bf16.mxu0 0
    %1325 = vmatpush1.bf16.msra.mxu0 %v591
    %1326 = vmatprep.subr.bf16.mxu0 0
    %1327 = vmatpush1.bf16.msra.mxu0 %v588
    %1328 = vmatprep.subr.bf16.mxu0 0
    %1329 = vmatpush1.bf16.msra.mxu0 %v585
    %1330 = vmatprep.subr.bf16.mxu0 0
    %1331 = vmatpush1.bf16.msra.mxu0 %v582
    %1332 = vmatprep.subr.bf16.mxu0 0
    %1333 = vmatpush2.bf16.msra.mxu0 0
    %1334 = vmatprep.subr.bf16.mxu0 0
    %1335 = vmatpush2.bf16.msra.mxu0 0
    %1336 = vmatprep.subr.bf16.mxu0 0
    %1337 = vmatpush2.bf16.msra.mxu0 0
    %1338 = vmatprep.subr.bf16.mxu0 0
    %1339 = vmatpush2.bf16.msra.mxu0 0
    %1340 = vmatprep.subr.bf16.mxu0 0
    %1341 = vmatpush2.bf16.msra.mxu0 0
    %1342 = vmatprep.subr.bf16.mxu0 0
    %1343 = vmatpush2.bf16.msra.mxu0 0
    %1344 = vmatprep.subr.bf16.mxu0 0
    %1345 = vmatpush2.bf16.msra.mxu0 0
    %1346 = vmatprep.subr.bf16.mxu0 0
    %1347 = vmatpush2.bf16.msra.mxu0 0
    %1348 = vmatprep.mubr.bf16.mxu0 0
    %1349 = vmatmul.mubr.bf16.gmra.mxu0 %v1272
    %v1350 = vpop.f32.mrf.mxu0
    %v1351 = vadd.f32 %v496, %v1350
    %v1352 = vpop.f32.mrf.mxu0
    %v1353 = vpop.f32.mrf.mxu0
    %v1354 = vadd.f32 %v496, %v1353
    %v1355 = vpop.f32.mrf.mxu0
    %1356 = vdwg.mxu0
    %v1357 = vadd.f32 %v326, %v1308
    %v1358 = vadd.f32 %v330, %v1312
    %v1359 = vxor.u32 %v1357, 2147483648
    %v1360 = vxor.u32 %v1358, 2147483648
    %v1361 = vmul.f32 %v1359, 1.442695
    %v1362 = vpow.pop %v1361
    %v1363 = vmul.f32 %v1360, 1.442695
    %v1364 = vpow.pop %v1363
    %v1365 = vadd.f32 %v1362, 1.0
    %v1366 = vadd.f32 %v1364, 1.0
    %v1367 = vrcp.pop %v1365
    %v1368 = vmul.f32 1.0, %v1367
    %v1369 = vrcp.pop %v1366
    %v1370 = vmul.f32 1.0, %v1369
    %v1371 = vadd.f32 %v328, %v1310
    %v1372 = vadd.f32 %v332, %v1314
    %v1373 = vxor.u32 %v1371, 2147483648
    %v1374 = vxor.u32 %v1372, 2147483648
    %v1375 = vmul.f32 %v1373, 1.442695
    %v1376 = vpow.pop %v1375
    %v1377 = vmul.f32 %v1374, 1.442695
    %v1378 = vpow.pop %v1377
    %v1379 = vadd.f32 %v1376, 1.0
    %v1380 = vadd.f32 %v1378, 1.0
    %v1381 = vrcp.pop %v1379
    %v1382 = vmul.f32 1.0, %v1381
    %v1383 = vrcp.pop %v1380
    %v1384 = vmul.f32 1.0, %v1383
    %v1385 = vmul.f32 %v1368, %v1351
    %v1386 = vmul.f32 %v1370, %v1354
    %v1387 = vadd.f32 %v429, %v1385
    %v1388 = vadd.f32 %v432, %v1386
    %v1389 = vtanh.pop %v1387
    %v1390 = vtanh.pop %v1388
    %v1391 = vsub.f32 1.0, %v1382
    %v1392 = vsub.f32 1.0, %v1384
    %v1393 = vmul.f32 %v1391, %v1389
    %v1394 = vmul.f32 %v1392, %v1390
    %v1395 = vmul.f32 %v1382, %v1268
    %v1396 = vmul.f32 %v1384, %v1269
    %v1397 = vadd.f32 %v1393, %v1395
    %v1398 = vadd.f32 %v1394, %v1396
    %1399 = vst [vmem:[#allocation2 + $0x50] sm:$0xff] %v1397
    %1400 = vst [vmem:[#allocation2 + $0x58] sm:$0xff] %v1398
    %v1401 = vpack.c.bf16 %v1398, %v1397
    %1402 = vmatprep.subr.bf16.mxu0 %v602
    %1403 = vmatpush1.bf16.msra.mxu0 %v601
    %1404 = vmatprep.subr.bf16.mxu0 %v599
    %1405 = vmatpush1.bf16.msra.mxu0 %v598
    %1406 = vmatprep.subr.bf16.mxu0 %v596
    %1407 = vmatpush1.bf16.msra.mxu0 %v595
    %1408 = vmatprep.subr.bf16.mxu0 %v593
    %1409 = vmatpush1.bf16.msra.mxu0 %v592
    %1410 = vmatprep.subr.bf16.mxu0 %v590
    %1411 = vmatpush1.bf16.msra.mxu0 %v589
    %1412 = vmatprep.subr.bf16.mxu0 %v587
    %1413 = vmatpush1.bf16.msra.mxu0 %v586
    %1414 = vmatprep.subr.bf16.mxu0 %v584
    %1415 = vmatpush1.bf16.msra.mxu0 %v583
    %1416 = vmatprep.subr.bf16.mxu0 %v581
    %1417 = vmatpush1.bf16.msra.mxu0 %v580
    %1418 = vmatprep.subr.bf16.mxu0 0
    %1419 = vmatpush2.bf16.msra.mxu0 0
    %1420 = vmatprep.subr.bf16.mxu0 0
    %1421 = vmatpush2.bf16.msra.mxu0 0
    %1422 = vmatprep.subr.bf16.mxu0 0
    %1423 = vmatpush2.bf16.msra.mxu0 0
    %1424 = vmatprep.subr.bf16.mxu0 0
    %1425 = vmatpush2.bf16.msra.mxu0 0
    %1426 = vmatprep.subr.bf16.mxu0 0
    %1427 = vmatpush2.bf16.msra.mxu0 0
    %1428 = vmatprep.subr.bf16.mxu0 0
    %1429 = vmatpush2.bf16.msra.mxu0 0
    %1430 = vmatprep.subr.bf16.mxu0 0
    %1431 = vmatpush2.bf16.msra.mxu0 0
    %1432 = vmatprep.subr.bf16.mxu0 0
    %1433 = vmatpush2.bf16.msra.mxu0 0
    %1434 = vmatprep.mubr.bf16.mxu0 0
    %1435 = vmatmul.mubr.bf16.gmra.mxu0 %v1401
    %v1436 = vpop.f32.mrf.mxu0
    %v1437 = vadd.f32 %v488, %v1436
    %v1438 = vpop.f32.mrf.mxu0
    %v1439 = vadd.f32 %v492, %v1438
    %v1440 = vpop.f32.mrf.mxu0
    %v1441 = vadd.f32 %v488, %v1440
    %v1442 = vpop.f32.mrf.mxu0
    %v1443 = vadd.f32 %v492, %v1442
    %1444 = vdwg.mxu0
    %1445 = vmatprep.subr.bf16.mxu0 0
    %1446 = vmatpush1.bf16.msra.mxu0 %v603
    %1447 = vmatprep.subr.bf16.mxu0 0
    %1448 = vmatpush1.bf16.msra.mxu0 %v600
    %1449 = vmatprep.subr.bf16.mxu0 0
    %1450 = vmatpush1.bf16.msra.mxu0 %v597
    %1451 = vmatprep.subr.bf16.mxu0 0
    %1452 = vmatpush1.bf16.msra.mxu0 %v594
    %1453 = vmatprep.subr.bf16.mxu0 0
    %1454 = vmatpush1.bf16.msra.mxu0 %v591
    %1455 = vmatprep.subr.bf16.mxu0 0
    %1456 = vmatpush1.bf16.msra.mxu0 %v588
    %1457 = vmatprep.subr.bf16.mxu0 0
    %1458 = vmatpush1.bf16.msra.mxu0 %v585
    %1459 = vmatprep.subr.bf16.mxu0 0
    %1460 = vmatpush1.bf16.msra.mxu0 %v582
    %1461 = vmatprep.subr.bf16.mxu0 0
    %1462 = vmatpush2.bf16.msra.mxu0 0
    %1463 = vmatprep.subr.bf16.mxu0 0
    %1464 = vmatpush2.bf16.msra.mxu0 0
    %1465 = vmatprep.subr.bf16.mxu0 0
    %1466 = vmatpush2.bf16.msra.mxu0 0
    %1467 = vmatprep.subr.bf16.mxu0 0
    %1468 = vmatpush2.bf16.msra.mxu0 0
    %1469 = vmatprep.subr.bf16.mxu0 0
    %1470 = vmatpush2.bf16.msra.mxu0 0
    %1471 = vmatprep.subr.bf16.mxu0 0
    %1472 = vmatpush2.bf16.msra.mxu0 0
    %1473 = vmatprep.subr.bf16.mxu0 0
    %1474 = vmatpush2.bf16.msra.mxu0 0
    %1475 = vmatprep.subr.bf16.mxu0 0
    %1476 = vmatpush2.bf16.msra.mxu0 0
    %1477 = vmatprep.mubr.bf16.mxu0 0
    %1478 = vmatmul.mubr.bf16.gmra.mxu0 %v1401
    %v1479 = vpop.f32.mrf.mxu0
    %v1480 = vadd.f32 %v496, %v1479
    %v1481 = vpop.f32.mrf.mxu0
    %v1482 = vpop.f32.mrf.mxu0
    %v1483 = vadd.f32 %v496, %v1482
    %v1484 = vpop.f32.mrf.mxu0
    %1485 = vdwg.mxu0
    %v1486 = vadd.f32 %v336, %v1437
    %v1487 = vadd.f32 %v340, %v1441
    %v1488 = vxor.u32 %v1486, 2147483648
    %v1489 = vxor.u32 %v1487, 2147483648
    %v1490 = vmul.f32 %v1488, 1.442695
    %v1491 = vpow.pop %v1490
    %v1492 = vmul.f32 %v1489, 1.442695
    %v1493 = vpow.pop %v1492
    %v1494 = vadd.f32 %v1491, 1.0
    %v1495 = vadd.f32 %v1493, 1.0
    %v1496 = vrcp.pop %v1494
    %v1497 = vmul.f32 1.0, %v1496
    %v1498 = vrcp.pop %v1495
    %v1499 = vmul.f32 1.0, %v1498
    %v1500 = vadd.f32 %v338, %v1439
    %v1501 = vadd.f32 %v342, %v1443
    %v1502 = vxor.u32 %v1500, 2147483648
    %v1503 = vxor.u32 %v1501, 2147483648
    %v1504 = vmul.f32 %v1502, 1.442695
    %v1505 = vpow.pop %v1504
    %v1506 = vmul.f32 %v1503, 1.442695
    %v1507 = vpow.pop %v1506
    %v1508 = vadd.f32 %v1505, 1.0
    %v1509 = vadd.f32 %v1507, 1.0
    %v1510 = vrcp.pop %v1508
    %v1511 = vmul.f32 1.0, %v1510
    %v1512 = vrcp.pop %v1509
    %v1513 = vmul.f32 1.0, %v1512
    %v1514 = vmul.f32 %v1497, %v1480
    %v1515 = vmul.f32 %v1499, %v1483
    %v1516 = vadd.f32 %v437, %v1514
    %v1517 = vadd.f32 %v440, %v1515
    %v1518 = vtanh.pop %v1516
    %v1519 = vtanh.pop %v1517
    %v1520 = vsub.f32 1.0, %v1511
    %v1521 = vsub.f32 1.0, %v1513
    %v1522 = vmul.f32 %v1520, %v1518
    %v1523 = vmul.f32 %v1521, %v1519
    %v1524 = vmul.f32 %v1511, %v1397
    %v1525 = vmul.f32 %v1513, %v1398
    %v1526 = vadd.f32 %v1522, %v1524
    %v1527 = vadd.f32 %v1523, %v1525
    %1528 = vst [vmem:[#allocation2 + $0x60] sm:$0xff] %v1526
    %1529 = vst [vmem:[#allocation2 + $0x68] sm:$0xff] %v1527
    %v1530 = vpack.c.bf16 %v1527, %v1526
    %1531 = vmatprep.subr.bf16.mxu0 %v602
    %1532 = vmatpush1.bf16.msra.mxu0 %v601
    %1533 = vmatprep.subr.bf16.mxu0 %v599
    %1534 = vmatpush1.bf16.msra.mxu0 %v598
    %1535 = vmatprep.subr.bf16.mxu0 %v596
    %1536 = vmatpush1.bf16.msra.mxu0 %v595
    %1537 = vmatprep.subr.bf16.mxu0 %v593
    %1538 = vmatpush1.bf16.msra.mxu0 %v592
    %1539 = vmatprep.subr.bf16.mxu0 %v590
    %1540 = vmatpush1.bf16.msra.mxu0 %v589
    %1541 = vmatprep.subr.bf16.mxu0 %v587
    %1542 = vmatpush1.bf16.msra.mxu0 %v586
    %1543 = vmatprep.subr.bf16.mxu0 %v584
    %1544 = vmatpush1.bf16.msra.mxu0 %v583
    %1545 = vmatprep.subr.bf16.mxu0 %v581
    %1546 = vmatpush1.bf16.msra.mxu0 %v580
    %1547 = vmatprep.subr.bf16.mxu0 0
    %1548 = vmatpush2.bf16.msra.mxu0 0
    %1549 = vmatprep.subr.bf16.mxu0 0
    %1550 = vmatpush2.bf16.msra.mxu0 0
    %1551 = vmatprep.subr.bf16.mxu0 0
    %1552 = vmatpush2.bf16.msra.mxu0 0
    %1553 = vmatprep.subr.bf16.mxu0 0
    %1554 = vmatpush2.bf16.msra.mxu0 0
    %1555 = vmatprep.subr.bf16.mxu0 0
    %1556 = vmatpush2.bf16.msra.mxu0 0
    %1557 = vmatprep.subr.bf16.mxu0 0
    %1558 = vmatpush2.bf16.msra.mxu0 0
    %1559 = vmatprep.subr.bf16.mxu0 0
    %1560 = vmatpush2.bf16.msra.mxu0 0
    %1561 = vmatprep.subr.bf16.mxu0 0
    %1562 = vmatpush2.bf16.msra.mxu0 0
    %1563 = vmatprep.mubr.bf16.mxu0 0
    %1564 = vmatmul.mubr.bf16.gmra.mxu0 %v1530
    %v1565 = vpop.f32.mrf.mxu0
    %v1566 = vadd.f32 %v488, %v1565
    %v1567 = vpop.f32.mrf.mxu0
    %v1568 = vadd.f32 %v492, %v1567
    %v1569 = vpop.f32.mrf.mxu0
    %v1570 = vadd.f32 %v488, %v1569
    %v1571 = vpop.f32.mrf.mxu0
    %v1572 = vadd.f32 %v492, %v1571
    %1573 = vdwg.mxu0
    %1574 = vmatprep.subr.bf16.mxu0 0
    %1575 = vmatpush1.bf16.msra.mxu0 %v603
    %1576 = vmatprep.subr.bf16.mxu0 0
    %1577 = vmatpush1.bf16.msra.mxu0 %v600
    %1578 = vmatprep.subr.bf16.mxu0 0
    %1579 = vmatpush1.bf16.msra.mxu0 %v597
    %1580 = vmatprep.subr.bf16.mxu0 0
    %1581 = vmatpush1.bf16.msra.mxu0 %v594
    %1582 = vmatprep.subr.bf16.mxu0 0
    %1583 = vmatpush1.bf16.msra.mxu0 %v591
    %1584 = vmatprep.subr.bf16.mxu0 0
    %1585 = vmatpush1.bf16.msra.mxu0 %v588
    %1586 = vmatprep.subr.bf16.mxu0 0
    %1587 = vmatpush1.bf16.msra.mxu0 %v585
    %1588 = vmatprep.subr.bf16.mxu0 0
    %1589 = vmatpush1.bf16.msra.mxu0 %v582
    %1590 = vmatprep.subr.bf16.mxu0 0
    %1591 = vmatpush2.bf16.msra.mxu0 0
    %1592 = vmatprep.subr.bf16.mxu0 0
    %1593 = vmatpush2.bf16.msra.mxu0 0
    %1594 = vmatprep.subr.bf16.mxu0 0
    %1595 = vmatpush2.bf16.msra.mxu0 0
    %1596 = vmatprep.subr.bf16.mxu0 0
    %1597 = vmatpush2.bf16.msra.mxu0 0
    %1598 = vmatprep.subr.bf16.mxu0 0
    %1599 = vmatpush2.bf16.msra.mxu0 0
    %1600 = vmatprep.subr.bf16.mxu0 0
    %1601 = vmatpush2.bf16.msra.mxu0 0
    %1602 = vmatprep.subr.bf16.mxu0 0
    %1603 = vmatpush2.bf16.msra.mxu0 0
    %1604 = vmatprep.subr.bf16.mxu0 0
    %1605 = vmatpush2.bf16.msra.mxu0 0
    %1606 = vmatprep.mubr.bf16.mxu0 0
    %1607 = vmatmul.mubr.bf16.gmra.mxu0 %v1530
    %v1608 = vpop.f32.mrf.mxu0
    %v1609 = vadd.f32 %v496, %v1608
    %v1610 = vpop.f32.mrf.mxu0
    %v1611 = vpop.f32.mrf.mxu0
    %v1612 = vadd.f32 %v496, %v1611
    %v1613 = vpop.f32.mrf.mxu0
    %1614 = vdwg.mxu0
    %v1615 = vadd.f32 %v346, %v1566
    %v1616 = vadd.f32 %v350, %v1570
    %v1617 = vxor.u32 %v1615, 2147483648
    %v1618 = vxor.u32 %v1616, 2147483648
    %v1619 = vmul.f32 %v1617, 1.442695
    %v1620 = vpow.pop %v1619
    %v1621 = vmul.f32 %v1618, 1.442695
    %v1622 = vpow.pop %v1621
    %v1623 = vadd.f32 %v1620, 1.0
    %v1624 = vadd.f32 %v1622, 1.0
    %v1625 = vrcp.pop %v1623
    %v1626 = vmul.f32 1.0, %v1625
    %v1627 = vrcp.pop %v1624
    %v1628 = vmul.f32 1.0, %v1627
    %v1629 = vadd.f32 %v348, %v1568
    %v1630 = vadd.f32 %v352, %v1572
    %v1631 = vxor.u32 %v1629, 2147483648
    %v1632 = vxor.u32 %v1630, 2147483648
    %v1633 = vmul.f32 %v1631, 1.442695
    %v1634 = vpow.pop %v1633
    %v1635 = vmul.f32 %v1632, 1.442695
    %v1636 = vpow.pop %v1635
    %v1637 = vadd.f32 %v1634, 1.0
    %v1638 = vadd.f32 %v1636, 1.0
    %v1639 = vrcp.pop %v1637
    %v1640 = vmul.f32 1.0, %v1639
    %v1641 = vrcp.pop %v1638
    %v1642 = vmul.f32 1.0, %v1641
    %v1643 = vmul.f32 %v1626, %v1609
    %v1644 = vmul.f32 %v1628, %v1612
    %v1645 = vadd.f32 %v445, %v1643
    %v1646 = vadd.f32 %v448, %v1644
    %v1647 = vtanh.pop %v1645
    %v1648 = vtanh.pop %v1646
    %v1649 = vsub.f32 1.0, %v1640
    %v1650 = vsub.f32 1.0, %v1642
    %v1651 = vmul.f32 %v1649, %v1647
    %v1652 = vmul.f32 %v1650, %v1648
    %v1653 = vmul.f32 %v1640, %v1526
    %v1654 = vmul.f32 %v1642, %v1527
    %v1655 = vadd.f32 %v1651, %v1653
    %v1656 = vadd.f32 %v1652, %v1654
    %1657 = vst [vmem:[#allocation2 + $0x70] sm:$0xff] %v1655
    %1658 = vst [vmem:[#allocation2 + $0x78] sm:$0xff] %v1656
    %v1659 = vld [vmem:[#allocation2] sm:$0xff]
    %v1660 = vld [vmem:[#allocation2 + $0x8] sm:$0xff]
    %v1661 = vld [vmem:[#allocation2 + $0x10] sm:$0xff]
    %v1662 = vld [vmem:[#allocation2 + $0x18] sm:$0xff]
    %v1663 = vld [vmem:[#allocation2 + $0x20] sm:$0xff]
    %v1664 = vld [vmem:[#allocation2 + $0x28] sm:$0xff]
    %v1665 = vld [vmem:[#allocation2 + $0x30] sm:$0xff]
    %v1666 = vld [vmem:[#allocation2 + $0x38] sm:$0xff]
    %v1667 = vld [vmem:[#allocation2 + $0x40] sm:$0xff]
    %v1668 = vld [vmem:[#allocation2 + $0x48] sm:$0xff]
    %v1669 = vld [vmem:[#allocation2 + $0x50] sm:$0xff]
    %v1670 = vld [vmem:[#allocation2 + $0x58] sm:$0xff]
    %v1671 = vld [vmem:[#allocation2 + $0x60] sm:$0xff]
    %v1672 = vld [vmem:[#allocation2 + $0x68] sm:$0xff]
    %v1673 = vld [vmem:[#allocation2 + $0x70] sm:$0xff]
    %v1674 = vld [vmem:[#allocation2 + $0x78] sm:$0xff]
    %v1675 = vpack.c.bf16 %v1660, %v1659
    %v1676 = vpack.c.bf16 %v1662, %v1661
    %v1677 = vpack.c.bf16 %v1664, %v1663
    %v1678 = vpack.c.bf16 %v1666, %v1665
    %v1679 = vpack.c.bf16 %v1668, %v1667
    %v1680 = vpack.c.bf16 %v1670, %v1669
    %v1681 = vpack.c.bf16 %v1672, %v1671
    %v1682 = vpack.c.bf16 %v1674, %v1673
    %v1683 = vld [vmem:[#allocation5] sm:$0xf]
    %v1684 = vld [vmem:[#allocation5 + $0x4] sm:$0xf]
    %v1685 = vld [vmem:[#allocation5 + $0x8] sm:$0xf]
    %v1686 = vld [vmem:[#allocation5 + $0xc] sm:$0xf]
    %v1687 = vld [vmem:[#allocation5 + $0x10] sm:$0xf]
    %v1688 = vld [vmem:[#allocation5 + $0x14] sm:$0xf]
    %v1689 = vld [vmem:[#allocation5 + $0x18] sm:$0xf]
    %v1690 = vld [vmem:[#allocation5 + $0x1c] sm:$0xf]
    %v1691 = vld [vmem:[#allocation5 + $0x20] sm:$0xf]
    %v1692 = vld [vmem:[#allocation5 + $0x24] sm:$0xf]
    %v1693 = vld [vmem:[#allocation5 + $0x28] sm:$0xf]
    %v1694 = vld [vmem:[#allocation5 + $0x2c] sm:$0xf]
    %v1695 = vld [vmem:[#allocation5 + $0x30] sm:$0xf]
    %v1696 = vld [vmem:[#allocation5 + $0x34] sm:$0xf]
    %v1697 = vld [vmem:[#allocation5 + $0x38] sm:$0xf]
    %v1698 = vld [vmem:[#allocation5 + $0x3c] sm:$0xf]
    %v1699 = vld [vmem:[%s6] sm:$0x1]
    %v1701 = vlaneseq
    %v1702 = vshrl.u32 %v1701, 7
    %v1703 = vsub.s32 0, %v1702
    %v1704 = vrot.slane %v1699, %v1703
    %v1722 = vunpack.c.l.b16 %v1683
    %v1723 = vunpack.c.l.b16 %v1684
    %v1724 = vunpack.c.l.b16 %v1685
    %v1725 = vunpack.c.l.b16 %v1686
    %v1726 = vunpack.c.l.b16 %v1687
    %v1727 = vunpack.c.l.b16 %v1688
    %v1728 = vunpack.c.l.b16 %v1689
    %v1729 = vunpack.c.l.b16 %v1690
    %v1730 = vunpack.c.l.b16 %v1691
    %v1731 = vunpack.c.l.b16 %v1692
    %v1732 = vunpack.c.l.b16 %v1693
    %v1733 = vunpack.c.l.b16 %v1694
    %v1734 = vunpack.c.l.b16 %v1695
    %v1735 = vunpack.c.l.b16 %v1696
    %v1736 = vunpack.c.l.b16 %v1697
    %v1737 = vunpack.c.l.b16 %v1698
    %v1738 = vpack.c.b16 %v1723, %v1722
    %v1739 = vpack.c.b16 %v1725, %v1724
    %v1740 = vpack.c.b16 %v1727, %v1726
    %v1741 = vpack.c.b16 %v1729, %v1728
    %v1742 = vpack.c.b16 %v1731, %v1730
    %v1743 = vpack.c.b16 %v1733, %v1732
    %v1744 = vpack.c.b16 %v1735, %v1734
    %v1745 = vpack.c.b16 %v1737, %v1736
    %1754 = vmatprep.subr.bf16.mxu0 0
    %1755 = vmatpush1.bf16.msra.mxu0 %v1745
    %1756 = vmatprep.subr.bf16.mxu0 0
    %1757 = vmatpush1.bf16.msra.mxu0 %v1744
    %1758 = vmatprep.subr.bf16.mxu0 0
    %1759 = vmatpush1.bf16.msra.mxu0 %v1743
    %1760 = vmatprep.subr.bf16.mxu0 0
    %1761 = vmatpush1.bf16.msra.mxu0 %v1742
    %1762 = vmatprep.subr.bf16.mxu0 0
    %1763 = vmatpush1.bf16.msra.mxu0 %v1741
    %1764 = vmatprep.subr.bf16.mxu0 0
    %1765 = vmatpush1.bf16.msra.mxu0 %v1740
    %1766 = vmatprep.subr.bf16.mxu0 0
    %1767 = vmatpush1.bf16.msra.mxu0 %v1739
    %1768 = vmatprep.subr.bf16.mxu0 0
    %1769 = vmatpush1.bf16.msra.mxu0 %v1738
    %1770 = vmatprep.subr.bf16.mxu0 0
    %1771 = vmatpush2.bf16.msra.mxu0 0
    %1772 = vmatprep.subr.bf16.mxu0 0
    %1773 = vmatpush2.bf16.msra.mxu0 0
    %1774 = vmatprep.subr.bf16.mxu0 0
    %1775 = vmatpush2.bf16.msra.mxu0 0
    %1776 = vmatprep.subr.bf16.mxu0 0
    %1777 = vmatpush2.bf16.msra.mxu0 0
    %1778 = vmatprep.subr.bf16.mxu0 0
    %1779 = vmatpush2.bf16.msra.mxu0 0
    %1780 = vmatprep.subr.bf16.mxu0 0
    %1781 = vmatpush2.bf16.msra.mxu0 0
    %1782 = vmatprep.subr.bf16.mxu0 0
    %1783 = vmatpush2.bf16.msra.mxu0 0
    %1784 = vmatprep.subr.bf16.mxu0 0
    %1785 = vmatpush2.bf16.msra.mxu0 0
    %1786 = vmatprep.mubr.bf16.mxu0 0
    %1787 = vmatmul.mubr.bf16.gmra.mxu0 %v1675
    %v1788 = vpop.f32.mrf.mxu0
    %v1789 = vadd.f32 %v1704, %v1788
    %v1790 = vpop.f32.mrf.mxu0
    %v1791 = vpop.f32.mrf.mxu0
    %v1792 = vadd.f32 %v1704, %v1791
    %v1793 = vpop.f32.mrf.mxu0
    %1794 = vmatprep.mubr.bf16.mxu0 0
    %1795 = vmatmul.mubr.bf16.gmra.mxu0 %v1676
    %v1796 = vpop.f32.mrf.mxu0
    %v1797 = vadd.f32 %v1704, %v1796
    %v1798 = vpop.f32.mrf.mxu0
    %v1799 = vpop.f32.mrf.mxu0
    %v1800 = vadd.f32 %v1704, %v1799
    %v1801 = vpop.f32.mrf.mxu0
    %1802 = vmatprep.mubr.bf16.mxu0 0
    %1803 = vmatmul.mubr.bf16.gmra.mxu0 %v1677
    %v1804 = vpop.f32.mrf.mxu0
    %v1805 = vadd.f32 %v1704, %v1804
    %v1806 = vpop.f32.mrf.mxu0
    %v1807 = vpop.f32.mrf.mxu0
    %v1808 = vadd.f32 %v1704, %v1807
    %v1809 = vpop.f32.mrf.mxu0
    %1810 = vmatprep.mubr.bf16.mxu0 0
    %1811 = vmatmul.mubr.bf16.gmra.mxu0 %v1678
    %v1812 = vpop.f32.mrf.mxu0
    %v1813 = vadd.f32 %v1704, %v1812
    %v1814 = vpop.f32.mrf.mxu0
    %v1815 = vpop.f32.mrf.mxu0
    %v1816 = vadd.f32 %v1704, %v1815
    %v1817 = vpop.f32.mrf.mxu0
    %1818 = vmatprep.mubr.bf16.mxu0 0
    %1819 = vmatmul.mubr.bf16.gmra.mxu0 %v1679
    %v1820 = vpop.f32.mrf.mxu0
    %v1821 = vadd.f32 %v1704, %v1820
    %v1822 = vpop.f32.mrf.mxu0
    %v1823 = vpop.f32.mrf.mxu0
    %v1824 = vadd.f32 %v1704, %v1823
    %v1825 = vpop.f32.mrf.mxu0
    %1826 = vmatprep.mubr.bf16.mxu0 0
    %1827 = vmatmul.mubr.bf16.gmra.mxu0 %v1680
    %v1828 = vpop.f32.mrf.mxu0
    %v1829 = vadd.f32 %v1704, %v1828
    %v1830 = vpop.f32.mrf.mxu0
    %v1831 = vpop.f32.mrf.mxu0
    %v1832 = vadd.f32 %v1704, %v1831
    %v1833 = vpop.f32.mrf.mxu0
    %1834 = vmatprep.mubr.bf16.mxu0 0
    %1835 = vmatmul.mubr.bf16.gmra.mxu0 %v1681
    %v1836 = vpop.f32.mrf.mxu0
    %v1837 = vadd.f32 %v1704, %v1836
    %v1838 = vpop.f32.mrf.mxu0
    %v1839 = vpop.f32.mrf.mxu0
    %v1840 = vadd.f32 %v1704, %v1839
    %v1841 = vpop.f32.mrf.mxu0
    %1842 = vmatprep.mubr.bf16.mxu0 0
    %1843 = vmatmul.mubr.bf16.gmra.mxu0 %v1682
    %v1844 = vpop.f32.mrf.mxu0
    %v1845 = vadd.f32 %v1704, %v1844
    %v1846 = vpop.f32.mrf.mxu0
    %v1847 = vpop.f32.mrf.mxu0
    %v1848 = vadd.f32 %v1704, %v1847
    %v1849 = vpop.f32.mrf.mxu0
    %1850 = vdwg.mxu0
    %v1851 = vmax.f32 %v1789, 0.0
    %v1852 = vmax.f32 %v1792, 0.0
    %v1853 = vmax.f32 %v1797, 0.0
    %v1854 = vmax.f32 %v1800, 0.0
    %v1855 = vmax.f32 %v1805, 0.0
    %v1856 = vmax.f32 %v1808, 0.0
    %v1857 = vmax.f32 %v1813, 0.0
    %v1858 = vmax.f32 %v1816, 0.0
    %v1859 = vmax.f32 %v1821, 0.0
    %v1860 = vmax.f32 %v1824, 0.0
    %v1861 = vmax.f32 %v1829, 0.0
    %v1862 = vmax.f32 %v1832, 0.0
    %v1863 = vmax.f32 %v1837, 0.0
    %v1864 = vmax.f32 %v1840, 0.0
    %v1865 = vmax.f32 %v1845, 0.0
    %v1866 = vmax.f32 %v1848, 0.0
    %v1867 = vpack.c.bf16 %v1852, %v1851
    %v1868 = vpack.c.bf16 %v1854, %v1853
    %v1869 = vpack.c.bf16 %v1856, %v1855
    %v1870 = vpack.c.bf16 %v1858, %v1857
    %v1871 = vpack.c.bf16 %v1860, %v1859
    %v1872 = vpack.c.bf16 %v1862, %v1861
    %v1873 = vpack.c.bf16 %v1864, %v1863
    %v1874 = vpack.c.bf16 %v1866, %v1865
    %v1875 = vld [vmem:[#allocation7] sm:$0xf]
    %v1876 = vld [vmem:[#allocation7 + $0x4] sm:$0xf]
    %v1877 = vld [vmem:[#allocation7 + $0x8] sm:$0xf]
    %v1878 = vld [vmem:[#allocation7 + $0xc] sm:$0xf]
    %v1879 = vld [vmem:[#allocation7 + $0x10] sm:$0xf]
    %v1880 = vld [vmem:[#allocation7 + $0x14] sm:$0xf]
    %v1881 = vld [vmem:[#allocation7 + $0x18] sm:$0xf]
    %v1882 = vld [vmem:[#allocation7 + $0x1c] sm:$0xf]
    %v1883 = vld [vmem:[#allocation7 + $0x20] sm:$0xf]
    %v1884 = vld [vmem:[#allocation7 + $0x24] sm:$0xf]
    %v1885 = vld [vmem:[#allocation7 + $0x28] sm:$0xf]
    %v1886 = vld [vmem:[#allocation7 + $0x2c] sm:$0xf]
    %v1887 = vld [vmem:[#allocation7 + $0x30] sm:$0xf]
    %v1888 = vld [vmem:[#allocation7 + $0x34] sm:$0xf]
    %v1889 = vld [vmem:[#allocation7 + $0x38] sm:$0xf]
    %v1890 = vld [vmem:[#allocation7 + $0x3c] sm:$0xf]
    %v1891 = vld [vmem:[%s8] sm:$0x1]
    %v1893 = vlaneseq
    %v1894 = vshrl.u32 %v1893, 7
    %v1895 = vsub.s32 0, %v1894
    %v1896 = vrot.slane %v1891, %v1895
    %v1914 = vunpack.c.l.b16 %v1875
    %v1915 = vunpack.c.l.b16 %v1876
    %v1916 = vunpack.c.l.b16 %v1877
    %v1917 = vunpack.c.l.b16 %v1878
    %v1918 = vunpack.c.l.b16 %v1879
    %v1919 = vunpack.c.l.b16 %v1880
    %v1920 = vunpack.c.l.b16 %v1881
    %v1921 = vunpack.c.l.b16 %v1882
    %v1922 = vunpack.c.l.b16 %v1883
    %v1923 = vunpack.c.l.b16 %v1884
    %v1924 = vunpack.c.l.b16 %v1885
    %v1925 = vunpack.c.l.b16 %v1886
    %v1926 = vunpack.c.l.b16 %v1887
    %v1927 = vunpack.c.l.b16 %v1888
    %v1928 = vunpack.c.l.b16 %v1889
    %v1929 = vunpack.c.l.b16 %v1890
    %v1930 = vpack.c.b16 %v1915, %v1914
    %v1931 = vpack.c.b16 %v1917, %v1916
    %v1932 = vpack.c.b16 %v1919, %v1918
    %v1933 = vpack.c.b16 %v1921, %v1920
    %v1934 = vpack.c.b16 %v1923, %v1922
    %v1935 = vpack.c.b16 %v1925, %v1924
    %v1936 = vpack.c.b16 %v1927, %v1926
    %v1937 = vpack.c.b16 %v1929, %v1928
    %1946 = vmatprep.subr.bf16.mxu0 0
    %1947 = vmatpush1.bf16.msra.mxu0 %v1937
    %1948 = vmatprep.subr.bf16.mxu0 0
    %1949 = vmatpush1.bf16.msra.mxu0 %v1936
    %1950 = vmatprep.subr.bf16.mxu0 0
    %1951 = vmatpush1.bf16.msra.mxu0 %v1935
    %1952 = vmatprep.subr.bf16.mxu0 0
    %1953 = vmatpush1.bf16.msra.mxu0 %v1934
    %1954 = vmatprep.subr.bf16.mxu0 0
    %1955 = vmatpush1.bf16.msra.mxu0 %v1933
    %1956 = vmatprep.subr.bf16.mxu0 0
    %1957 = vmatpush1.bf16.msra.mxu0 %v1932
    %1958 = vmatprep.subr.bf16.mxu0 0
    %1959 = vmatpush1.bf16.msra.mxu0 %v1931
    %1960 = vmatprep.subr.bf16.mxu0 0
    %1961 = vmatpush1.bf16.msra.mxu0 %v1930
    %1962 = vmatprep.subr.bf16.mxu0 0
    %1963 = vmatpush2.bf16.msra.mxu0 0
    %1964 = vmatprep.subr.bf16.mxu0 0
    %1965 = vmatpush2.bf16.msra.mxu0 0
    %1966 = vmatprep.subr.bf16.mxu0 0
    %1967 = vmatpush2.bf16.msra.mxu0 0
    %1968 = vmatprep.subr.bf16.mxu0 0
    %1969 = vmatpush2.bf16.msra.mxu0 0
    %1970 = vmatprep.subr.bf16.mxu0 0
    %1971 = vmatpush2.bf16.msra.mxu0 0
    %1972 = vmatprep.subr.bf16.mxu0 0
    %1973 = vmatpush2.bf16.msra.mxu0 0
    %1974 = vmatprep.subr.bf16.mxu0 0
    %1975 = vmatpush2.bf16.msra.mxu0 0
    %1976 = vmatprep.subr.bf16.mxu0 0
    %1977 = vmatpush2.bf16.msra.mxu0 0
    %1978 = vmatprep.mubr.bf16.mxu0 0
    %1979 = vmatmul.mubr.bf16.gmra.mxu0 %v1867
    %v1980 = vpop.f32.mrf.mxu0
    %v1981 = vadd.f32 %v1896, %v1980
    %v1982 = vpop.f32.mrf.mxu0
    %v1983 = vpop.f32.mrf.mxu0
    %v1984 = vadd.f32 %v1896, %v1983
    %v1985 = vpop.f32.mrf.mxu0
    %1986 = vmatprep.mubr.bf16.mxu0 0
    %1987 = vmatmul.mubr.bf16.gmra.mxu0 %v1868
    %v1988 = vpop.f32.mrf.mxu0
    %v1989 = vadd.f32 %v1896, %v1988
    %v1990 = vpop.f32.mrf.mxu0
    %v1991 = vpop.f32.mrf.mxu0
    %v1992 = vadd.f32 %v1896, %v1991
    %v1993 = vpop.f32.mrf.mxu0
    %1994 = vmatprep.mubr.bf16.mxu0 0
    %1995 = vmatmul.mubr.bf16.gmra.mxu0 %v1869
    %v1996 = vpop.f32.mrf.mxu0
    %v1997 = vadd.f32 %v1896, %v1996
    %v1998 = vpop.f32.mrf.mxu0
    %v1999 = vpop.f32.mrf.mxu0
    %v2000 = vadd.f32 %v1896, %v1999
    %v2001 = vpop.f32.mrf.mxu0
    %2002 = vmatprep.mubr.bf16.mxu0 0
    %2003 = vmatmul.mubr.bf16.gmra.mxu0 %v1870
    %v2004 = vpop.f32.mrf.mxu0
    %v2005 = vadd.f32 %v1896, %v2004
    %v2006 = vpop.f32.mrf.mxu0
    %v2007 = vpop.f32.mrf.mxu0
    %v2008 = vadd.f32 %v1896, %v2007
    %v2009 = vpop.f32.mrf.mxu0
    %2010 = vmatprep.mubr.bf16.mxu0 0
    %2011 = vmatmul.mubr.bf16.gmra.mxu0 %v1871
    %v2012 = vpop.f32.mrf.mxu0
    %v2013 = vadd.f32 %v1896, %v2012
    %v2014 = vpop.f32.mrf.mxu0
    %v2015 = vpop.f32.mrf.mxu0
    %v2016 = vadd.f32 %v1896, %v2015
    %v2017 = vpop.f32.mrf.mxu0
    %2018 = vmatprep.mubr.bf16.mxu0 0
    %2019 = vmatmul.mubr.bf16.gmra.mxu0 %v1872
    %v2020 = vpop.f32.mrf.mxu0
    %v2021 = vadd.f32 %v1896, %v2020
    %v2022 = vpop.f32.mrf.mxu0
    %v2023 = vpop.f32.mrf.mxu0
    %v2024 = vadd.f32 %v1896, %v2023
    %v2025 = vpop.f32.mrf.mxu0
    %2026 = vmatprep.mubr.bf16.mxu0 0
    %2027 = vmatmul.mubr.bf16.gmra.mxu0 %v1873
    %v2028 = vpop.f32.mrf.mxu0
    %v2029 = vadd.f32 %v1896, %v2028
    %v2030 = vpop.f32.mrf.mxu0
    %v2031 = vpop.f32.mrf.mxu0
    %v2032 = vadd.f32 %v1896, %v2031
    %v2033 = vpop.f32.mrf.mxu0
    %2034 = vmatprep.mubr.bf16.mxu0 0
    %2035 = vmatmul.mubr.bf16.gmra.mxu0 %v1874
    %v2036 = vpop.f32.mrf.mxu0
    %v2037 = vadd.f32 %v1896, %v2036
    %v2038 = vpop.f32.mrf.mxu0
    %v2039 = vpop.f32.mrf.mxu0
    %v2040 = vadd.f32 %v1896, %v2039
    %v2041 = vpop.f32.mrf.mxu0
    %2042 = vdwg.mxu0
    %v2043 = vmax.f32 %v1981, %v1997
    %v2044 = vmax.f32 %v1989, %v2005
    %v2045 = vmax.f32 %v2043, %v2013
    %v2046 = vmax.f32 %v2044, %v2021
    %v2047 = vmax.f32 %v2045, %v2029
    %v2048 = vmax.f32 %v2046, %v2037
    %v2049 = vmax.f32 %v2047, %v2048
    %v2050 = vmax.f32 %v1984, %v2000
    %v2051 = vmax.f32 %v1992, %v2008
    %v2052 = vmax.f32 %v2050, %v2016
    %v2053 = vmax.f32 %v2051, %v2024
    %v2054 = vmax.f32 %v2052, %v2032
    %v2055 = vmax.f32 %v2053, %v2040
    %v2056 = vmax.f32 %v2054, %v2055
    %v2057 = vsub.f32 %v1981, %v2049
    %v2058 = vsub.f32 %v1984, %v2056
    %v2059 = vsub.f32 %v1989, %v2049
    %v2060 = vsub.f32 %v1992, %v2056
    %v2061 = vsub.f32 %v1997, %v2049
    %v2062 = vsub.f32 %v2000, %v2056
    %v2063 = vsub.f32 %v2005, %v2049
    %v2064 = vsub.f32 %v2008, %v2056
    %v2065 = vsub.f32 %v2013, %v2049
    %v2066 = vsub.f32 %v2016, %v2056
    %v2067 = vsub.f32 %v2021, %v2049
    %v2068 = vsub.f32 %v2024, %v2056
    %v2069 = vsub.f32 %v2029, %v2049
    %v2070 = vsub.f32 %v2032, %v2056
    %v2071 = vsub.f32 %v2037, %v2049
    %v2072 = vsub.f32 %v2040, %v2056
    %v2073 = vmul.f32 %v2057, 1.442695
    %v2074 = vpow.pop %v2073
    %v2075 = vmul.f32 %v2058, 1.442695
    %v2076 = vpow.pop %v2075
    %v2077 = vmul.f32 %v2059, 1.442695
    %v2078 = vpow.pop %v2077
    %v2079 = vmul.f32 %v2060, 1.442695
    %v2080 = vpow.pop %v2079
    %v2081 = vmul.f32 %v2061, 1.442695
    %v2082 = vpow.pop %v2081
    %v2083 = vmul.f32 %v2062, 1.442695
    %v2084 = vpow.pop %v2083
    %v2085 = vmul.f32 %v2063, 1.442695
    %v2086 = vpow.pop %v2085
    %v2087 = vmul.f32 %v2064, 1.442695
    %v2088 = vpow.pop %v2087
    %v2089 = vmul.f32 %v2065, 1.442695
    %v2090 = vpow.pop %v2089
    %v2091 = vmul.f32 %v2066, 1.442695
    %v2092 = vpow.pop %v2091
    %v2093 = vmul.f32 %v2067, 1.442695
    %v2094 = vpow.pop %v2093
    %v2095 = vmul.f32 %v2068, 1.442695
    %v2096 = vpow.pop %v2095
    %v2097 = vmul.f32 %v2069, 1.442695
    %v2098 = vpow.pop %v2097
    %v2099 = vmul.f32 %v2070, 1.442695
    %v2100 = vpow.pop %v2099
    %v2101 = vmul.f32 %v2071, 1.442695
    %v2102 = vpow.pop %v2101
    %v2103 = vmul.f32 %v2072, 1.442695
    %v2104 = vpow.pop %v2103
    %v2105 = vadd.f32 %v2074, %v2078
    %v2106 = vadd.f32 %v2105, %v2082
    %v2107 = vadd.f32 %v2106, %v2086
    %v2108 = vadd.f32 %v2107, %v2090
    %v2109 = vadd.f32 %v2108, %v2094
    %v2110 = vadd.f32 %v2109, %v2098
    %v2111 = vadd.f32 %v2110, %v2102
    %v2112 = vadd.f32 %v2076, %v2080
    %v2113 = vadd.f32 %v2112, %v2084
    %v2114 = vadd.f32 %v2113, %v2088
    %v2115 = vadd.f32 %v2114, %v2092
    %v2116 = vadd.f32 %v2115, %v2096
    %v2117 = vadd.f32 %v2116, %v2100
    %v2118 = vadd.f32 %v2117, %v2104
    %v2119 = vrcp.pop %v2111
    %v2120 = vrcp.pop %v2118
    %v2121 = vmul.f32 %v2074, %v2119
    %v2122 = vmul.f32 %v2076, %v2120
    %v2123 = vmul.f32 %v2078, %v2119
    %v2124 = vmul.f32 %v2080, %v2120
    %v2125 = vmul.f32 %v2082, %v2119
    %v2126 = vmul.f32 %v2084, %v2120
    %v2127 = vmul.f32 %v2086, %v2119
    %v2128 = vmul.f32 %v2088, %v2120
    %v2129 = vmul.f32 %v2090, %v2119
    %v2130 = vmul.f32 %v2092, %v2120
    %v2131 = vmul.f32 %v2094, %v2119
    %v2132 = vmul.f32 %v2096, %v2120
    %v2133 = vmul.f32 %v2098, %v2119
    %v2134 = vmul.f32 %v2100, %v2120
    %v2135 = vmul.f32 %v2102, %v2119
    %v2136 = vmul.f32 %v2104, %v2120
    %v2137 = vmul.f32 %v1851, %v2121
    %v2138 = vmul.f32 %v1852, %v2122
    %v2139 = vmul.f32 %v1853, %v2123
    %v2140 = vmul.f32 %v1854, %v2124
    %v2141 = vmul.f32 %v1855, %v2125
    %v2142 = vmul.f32 %v1856, %v2126
    %v2143 = vmul.f32 %v1857, %v2127
    %v2144 = vmul.f32 %v1858, %v2128
    %v2145 = vmul.f32 %v1859, %v2129
    %v2146 = vmul.f32 %v1860, %v2130
    %v2147 = vmul.f32 %v1861, %v2131
    %v2148 = vmul.f32 %v1862, %v2132
    %v2149 = vmul.f32 %v1863, %v2133
    %v2150 = vmul.f32 %v1864, %v2134
    %v2151 = vmul.f32 %v1865, %v2135
    %v2152 = vmul.f32 %v1866, %v2136
    %v2153 = vadd.f32 %v2137, %v2139
    %v2154 = vadd.f32 %v2153, %v2141
    %v2155 = vadd.f32 %v2154, %v2143
    %v2156 = vadd.f32 %v2155, %v2145
    %v2157 = vadd.f32 %v2156, %v2147
    %v2158 = vadd.f32 %v2157, %v2149
    %v2159 = vadd.f32 %v2158, %v2151
    %v2160 = vadd.f32 %v2138, %v2140
    %v2161 = vadd.f32 %v2160, %v2142
    %v2162 = vadd.f32 %v2161, %v2144
    %v2163 = vadd.f32 %v2162, %v2146
    %v2164 = vadd.f32 %v2163, %v2148
    %v2165 = vadd.f32 %v2164, %v2150
    %v2166 = vadd.f32 %v2165, %v2152
    %v2167 = vpack.c.bf16 %v2166, %v2159
    %v2168 = vld [vmem:[#allocation8] sm:$0xff]
    %v2169 = vld [vmem:[#allocation8 + $0x8] sm:$0xff]
    %v2170 = vld [vmem:[#allocation8 + $0x10] sm:$0xff]
    %v2171 = vld [vmem:[#allocation8 + $0x18] sm:$0xff]
    %v2172 = vld [vmem:[#allocation8 + $0x20] sm:$0xff]
    %v2173 = vld [vmem:[#allocation8 + $0x28] sm:$0xff]
    %v2174 = vld [vmem:[#allocation8 + $0x30] sm:$0xff]
    %v2175 = vld [vmem:[#allocation8 + $0x38] sm:$0xff]
    %v2176 = vld [vmem:[#allocation8 + $0x40] sm:$0xff]
    %v2177 = vld [vmem:[#allocation8 + $0x48] sm:$0xff]
    %v2178 = vld [vmem:[#allocation8 + $0x50] sm:$0xff]
    %v2179 = vld [vmem:[#allocation8 + $0x58] sm:$0xff]
    %v2180 = vld [vmem:[#allocation8 + $0x60] sm:$0xff]
    %v2181 = vld [vmem:[#allocation8 + $0x68] sm:$0xff]
    %v2182 = vld [vmem:[#allocation8 + $0x70] sm:$0xff]
    %v2183 = vld [vmem:[#allocation8 + $0x78] sm:$0xff]
    %v2200 = vunpack.c.l.b16 %v2168
    %v2201 = vunpack.c.h.b16 %v2168
    %v2202 = vunpack.c.l.b16 %v2169
    %v2203 = vunpack.c.h.b16 %v2169
    %v2204 = vunpack.c.l.b16 %v2170
    %v2205 = vunpack.c.h.b16 %v2170
    %v2206 = vunpack.c.l.b16 %v2171
    %v2207 = vunpack.c.h.b16 %v2171
    %v2208 = vunpack.c.l.b16 %v2172
    %v2209 = vunpack.c.h.b16 %v2172
    %v2210 = vunpack.c.l.b16 %v2173
    %v2211 = vunpack.c.h.b16 %v2173
    %v2212 = vunpack.c.l.b16 %v2174
    %v2213 = vunpack.c.h.b16 %v2174
    %v2214 = vunpack.c.l.b16 %v2175
    %v2215 = vunpack.c.h.b16 %v2175
    %v2216 = vunpack.c.l.b16 %v2176
    %v2217 = vunpack.c.h.b16 %v2176
    %v2218 = vunpack.c.l.b16 %v2177
    %v2219 = vunpack.c.h.b16 %v2177
    %v2220 = vunpack.c.l.b16 %v2178
    %v2221 = vunpack.c.h.b16 %v2178
    %v2222 = vunpack.c.l.b16 %v2179
    %v2223 = vunpack.c.h.b16 %v2179
    %v2224 = vunpack.c.l.b16 %v2180
    %v2225 = vunpack.c.h.b16 %v2180
    %v2226 = vunpack.c.l.b16 %v2181
    %v2227 = vunpack.c.h.b16 %v2181
    %v2228 = vunpack.c.l.b16 %v2182
    %v2229 = vunpack.c.h.b16 %v2182
    %v2230 = vunpack.c.l.b16 %v2183
    %v2231 = vunpack.c.h.b16 %v2183
    %v2232 = vpack.c.b16 %v2202, %v2200
    %v2233 = vpack.c.b16 %v2203, %v2201
    %v2234 = vpack.c.b16 %v2206, %v2204
    %v2235 = vpack.c.b16 %v2207, %v2205
    %v2236 = vpack.c.b16 %v2210, %v2208
    %v2237 = vpack.c.b16 %v2211, %v2209
    %v2238 = vpack.c.b16 %v2214, %v2212
    %v2239 = vpack.c.b16 %v2215, %v2213
    %v2240 = vpack.c.b16 %v2218, %v2216
    %v2241 = vpack.c.b16 %v2219, %v2217
    %v2242 = vpack.c.b16 %v2222, %v2220
    %v2243 = vpack.c.b16 %v2223, %v2221
    %v2244 = vpack.c.b16 %v2226, %v2224
    %v2245 = vpack.c.b16 %v2227, %v2225
    %v2246 = vpack.c.b16 %v2230, %v2228
    %v2247 = vpack.c.b16 %v2231, %v2229
    %2264 = vmatprep.subr.bf16.mxu0 %v2247
    %2265 = vmatpush1.bf16.msra.mxu0 %v2246
    %2266 = vmatprep.subr.bf16.mxu0 %v2245
    %2267 = vmatpush1.bf16.msra.mxu0 %v2244
    %2268 = vmatprep.subr.bf16.mxu0 %v2243
    %2269 = vmatpush1.bf16.msra.mxu0 %v2242
    %2270 = vmatprep.subr.bf16.mxu0 %v2241
    %2271 = vmatpush1.bf16.msra.mxu0 %v2240
    %2272 = vmatprep.subr.bf16.mxu0 %v2239
    %2273 = vmatpush1.bf16.msra.mxu0 %v2238
    %2274 = vmatprep.subr.bf16.mxu0 %v2237
    %2275 = vmatpush1.bf16.msra.mxu0 %v2236
    %2276 = vmatprep.subr.bf16.mxu0 %v2235
    %2277 = vmatpush1.bf16.msra.mxu0 %v2234
    %2278 = vmatprep.subr.bf16.mxu0 %v2233
    %2279 = vmatpush1.bf16.msra.mxu0 %v2232
    %2280 = vmatprep.subr.bf16.mxu0 0
    %2281 = vmatpush2.bf16.msra.mxu0 0
    %2282 = vmatprep.subr.bf16.mxu0 0
    %2283 = vmatpush2.bf16.msra.mxu0 0
    %2284 = vmatprep.subr.bf16.mxu0 0
    %2285 = vmatpush2.bf16.msra.mxu0 0
    %2286 = vmatprep.subr.bf16.mxu0 0
    %2287 = vmatpush2.bf16.msra.mxu0 0
    %2288 = vmatprep.subr.bf16.mxu0 0
    %2289 = vmatpush2.bf16.msra.mxu0 0
    %2290 = vmatprep.subr.bf16.mxu0 0
    %2291 = vmatpush2.bf16.msra.mxu0 0
    %2292 = vmatprep.subr.bf16.mxu0 0
    %2293 = vmatpush2.bf16.msra.mxu0 0
    %2294 = vmatprep.subr.bf16.mxu0 0
    %2295 = vmatpush2.bf16.msra.mxu0 0
    %2296 = vmatprep.mubr.bf16.mxu0 0
    %2297 = vmatmul.mubr.bf16.gmra.mxu0 %v2167
    %v2298 = vpop.f32.mrf.mxu0
    %v2299 = vadd.f32 0.0, %v2298
    %v2300 = vpop.f32.mrf.mxu0
    %v2301 = vadd.f32 0.0, %v2300
    %v2302 = vpop.f32.mrf.mxu0
    %v2303 = vadd.f32 0.0, %v2302
    %v2304 = vpop.f32.mrf.mxu0
    %v2305 = vadd.f32 0.0, %v2304
    %2306 = vdwg.mxu0
    %v2307 = vld [vmem:[%s10] sm:$0x1]
    %v2309 = vlaneseq
    %v2310 = vshrl.u32 %v2309, 7
    %v2311 = vsub.s32 0, %v2310
    %v2312 = vrot.slane %v2307, %v2311
    %v2314 = vadd.f32 %v2299, %v2312
    %v2315 = vadd.f32 %v2303, %v2312
    %v2316 = vld [vmem:[%s11] sm:$0x1]
    %v2318 = vlaneseq
    %v2319 = vshrl.u32 %v2318, 7
    %v2320 = vsub.s32 0, %v2319
    %v2321 = vrot.slane %v2316, %v2320
    %v2323 = vadd.f32 %v2301, %v2321
    %v2324 = vadd.f32 %v2305, %v2321
    %v2325 = vpack.c.bf16 %v2315, %v2314
    %v2326 = vld [vmem:[%s12] sm:$0xf]
    %v2327 = vld [vmem:[%s12 + $0x4] sm:$0xf]
    %v2328 = vld [vmem:[%s12 + $0x8] sm:$0xf]
    %v2329 = vld [vmem:[%s12 + $0xc] sm:$0xf]
    %v2330 = vld [vmem:[%s12 + $0x10] sm:$0xf]
    %v2331 = vld [vmem:[%s12 + $0x14] sm:$0xf]
    %v2332 = vld [vmem:[%s12 + $0x18] sm:$0xf]
    %v2333 = vld [vmem:[%s12 + $0x1c] sm:$0xf]
    %v2334 = vld [vmem:[%s12 + $0x20] sm:$0xf]
    %v2335 = vld [vmem:[%s12 + $0x24] sm:$0xf]
    %v2336 = vld [vmem:[%s12 + $0x28] sm:$0xf]
    %v2337 = vld [vmem:[%s12 + $0x2c] sm:$0xf]
    %v2338 = vld [vmem:[%s12 + $0x30] sm:$0xf]
    %v2339 = vld [vmem:[%s12 + $0x34] sm:$0xf]
    %v2340 = vld [vmem:[%s12 + $0x38] sm:$0xf]
    %v2341 = vld [vmem:[%s12 + $0x3c] sm:$0xf]
    %v2342 = vld [vmem:[%s13] sm:$0x1]
    %v2344 = vlaneseq
    %v2345 = vshrl.u32 %v2344, 7
    %v2346 = vsub.s32 0, %v2345
    %v2347 = vrot.slane %v2342, %v2346
    %v2365 = vunpack.c.l.b16 %v2326
    %v2366 = vunpack.c.l.b16 %v2327
    %v2367 = vunpack.c.l.b16 %v2328
    %v2368 = vunpack.c.l.b16 %v2329
    %v2369 = vunpack.c.l.b16 %v2330
    %v2370 = vunpack.c.l.b16 %v2331
    %v2371 = vunpack.c.l.b16 %v2332
    %v2372 = vunpack.c.l.b16 %v2333
    %v2373 = vunpack.c.l.b16 %v2334
    %v2374 = vunpack.c.l.b16 %v2335
    %v2375 = vunpack.c.l.b16 %v2336
    %v2376 = vunpack.c.l.b16 %v2337
    %v2377 = vunpack.c.l.b16 %v2338
    %v2378 = vunpack.c.l.b16 %v2339
    %v2379 = vunpack.c.l.b16 %v2340
    %v2380 = vunpack.c.l.b16 %v2341
    %v2381 = vpack.c.b16 %v2366, %v2365
    %v2382 = vpack.c.b16 %v2368, %v2367
    %v2383 = vpack.c.b16 %v2370, %v2369
    %v2384 = vpack.c.b16 %v2372, %v2371
    %v2385 = vpack.c.b16 %v2374, %v2373
    %v2386 = vpack.c.b16 %v2376, %v2375
    %v2387 = vpack.c.b16 %v2378, %v2377
    %v2388 = vpack.c.b16 %v2380, %v2379
    %2397 = vmatprep.subr.bf16.mxu0 0
    %2398 = vmatpush1.bf16.msra.mxu0 %v2388
    %2399 = vmatprep.subr.bf16.mxu0 0
    %2400 = vmatpush1.bf16.msra.mxu0 %v2387
    %2401 = vmatprep.subr.bf16.mxu0 0
    %2402 = vmatpush1.bf16.msra.mxu0 %v2386
    %2403 = vmatprep.subr.bf16.mxu0 0
    %2404 = vmatpush1.bf16.msra.mxu0 %v2385
    %2405 = vmatprep.subr.bf16.mxu0 0
    %2406 = vmatpush1.bf16.msra.mxu0 %v2384
    %2407 = vmatprep.subr.bf16.mxu0 0
    %2408 = vmatpush1.bf16.msra.mxu0 %v2383
    %2409 = vmatprep.subr.bf16.mxu0 0
    %2410 = vmatpush1.bf16.msra.mxu0 %v2382
    %2411 = vmatprep.subr.bf16.mxu0 0
    %2412 = vmatpush1.bf16.msra.mxu0 %v2381
    %2413 = vmatprep.subr.bf16.mxu0 0
    %2414 = vmatpush2.bf16.msra.mxu0 0
    %2415 = vmatprep.subr.bf16.mxu0 0
    %2416 = vmatpush2.bf16.msra.mxu0 0
    %2417 = vmatprep.subr.bf16.mxu0 0
    %2418 = vmatpush2.bf16.msra.mxu0 0
    %2419 = vmatprep.subr.bf16.mxu0 0
    %2420 = vmatpush2.bf16.msra.mxu0 0
    %2421 = vmatprep.subr.bf16.mxu0 0
    %2422 = vmatpush2.bf16.msra.mxu0 0
    %2423 = vmatprep.subr.bf16.mxu0 0
    %2424 = vmatpush2.bf16.msra.mxu0 0
    %2425 = vmatprep.subr.bf16.mxu0 0
    %2426 = vmatpush2.bf16.msra.mxu0 0
    %2427 = vmatprep.subr.bf16.mxu0 0
    %2428 = vmatpush2.bf16.msra.mxu0 0
    %2429 = vmatprep.mubr.bf16.mxu0 0
    %2430 = vmatmul.mubr.bf16.gmra.mxu0 %v2325
    %v2431 = vpop.f32.mrf.mxu0
    %v2432 = vadd.f32 %v2347, %v2431
    %v2433 = vpop.f32.mrf.mxu0
    %v2434 = vpop.f32.mrf.mxu0
    %v2435 = vadd.f32 %v2347, %v2434
    %v2436 = vpop.f32.mrf.mxu0
    %2437 = vdwg.mxu0
    %2438 = vst [vmem:[%s14] sm:$0xff] %v2432
    %2439 = vst [vmem:[%s14 + $0x8] sm:$0xff] %v2323
    %2440 = vst [vmem:[%s14 + $0x10] sm:$0xff] %v2159
    %2441 = vst [vmem:[%s14 + $0x18] sm:$0xff] %v2435
    %2442 = vst [vmem:[%s14 + $0x20] sm:$0xff] %v2324
    %2443 = vst [vmem:[%s14 + $0x28] sm:$0xff] %v2166
    // Predicated region
    $region74: #{smorl_forward.1} parent=1 // pred_check
      _
    $region75: #{smorl_forward.1} parent=1 // pred_check_branch
      %2445 = sbr.rel (0) target = $region77
    $region76: #{smorl_forward.1} parent=1 // pred_region
      _
    $region77: #{smorl_forward.1} parent=1 // pred_fallthru
      _
    // Predicated region
    $region78: #{smorl_forward.1} parent=1 // pred_check
      _
    $region79: #{smorl_forward.1} parent=1 // pred_check_branch
      %2447 = sbr.rel (0) target = $region81
    $region80: #{smorl_forward.1} parent=1 // pred_region
      _
    $region81: #{smorl_forward.1} parent=1 // pred_fallthru
      _
    %2448 = vsyncpa [#allocation4], 1
    %2449 = vsyncpa [#allocation6], 1
    %2450 = vsyncpa [#allocation9], 1

</llo_original>
